<compile_context>
chip_gen: v6e
topology: v6e:2x2x1
jax: 0.10.0
libtpu: 0.0.40
codegen_flags: <defaults>
</compile_context>

<pallas_src>
import functools
import math

import jax
import jax.numpy as jnp
from jax.experimental import pallas as pl
from jax.experimental.pallas import tpu as pltpu


def _round_up(n, m):
    return ((n + m - 1) // m) * m


# ----------------------------------------------------------------------------
# Fused Pallas kernel: entire ActorPerturbation forward (incl. VAE decoder)
# ----------------------------------------------------------------------------
def _actor_perturbation_kernel(
    state_ref,
    w1, w2, w3, wd1s, wd1z, wd3, w4s, w4m, w6, bias,
    wd2_hbm, w5_hbm,
    out_ref,
    wd2_v, w5_v, sem,
    *, max_action, max_latent_action, phi, off, lp, ap,
):
    f32 = jnp.float32
    bf16 = jnp.bfloat16

    # Start streaming the two big late-layer weights (wd2, w5) into single-buffered
    # VMEM scratch while the encoder computes.  Guarded so they are fetched exactly
    # once across all (sequential, "arbitrary") batch tiles.
    @pl.when(pl.program_id(0) == 0)
    def _start_prefetch():
        pltpu.make_async_copy(wd2_hbm, wd2_v, sem.at[0]).start()
        pltpu.make_async_copy(w5_hbm, w5_v, sem.at[1]).start()

    def mm(x_bf, w_ref):
        # bf16 MXU inputs, f32 accumulation.
        return jnp.dot(x_bf, w_ref[...], preferred_element_type=f32)

    def b(name):
        o, w = off[name]
        return bias[:, o:o + w]          # static slice of the coalesced bias slab

    s_bf = state_ref[...].astype(bf16)   # cast once, reused by w1 / wd1s / w4s dots

    # a = relu(l1(s)); a = relu(l2(a)); latent = max_latent * tanh(l3(a))
    a = jnp.maximum(mm(s_bf, w1) + b("b1"), 0.0)
    a = jnp.maximum(mm(a.astype(bf16), w2) + b("b2"), 0.0)
    latent = max_latent_action * jnp.tanh(mm(a.astype(bf16), w3) + b("b3"))

    # mid = decoder(state, z=latent): d1 acts on cat([state, latent]) -> split dots.
    lat_bf = latent.astype(bf16)
    d = jnp.maximum(mm(s_bf, wd1s) + mm(lat_bf, wd1z) + b("bd1"), 0.0)

    @pl.when(pl.program_id(0) == 0)
    def _wait_wd2():
        pltpu.make_async_copy(wd2_hbm, wd2_v, sem.at[0]).wait()

    d = jnp.maximum(mm(d.astype(bf16), wd2_v) + b("bd2"), 0.0)
    mid = max_action * jnp.tanh(mm(d.astype(bf16), wd3) + b("bd3"))

    # a = relu(l4(cat[state, mid])); a = relu(l5(a))
    mid_bf = mid.astype(bf16)
    a = jnp.maximum(mm(s_bf, w4s) + mm(mid_bf, w4m) + b("b4"), 0.0)

    @pl.when(pl.program_id(0) == 0)
    def _wait_w5():
        pltpu.make_async_copy(w5_hbm, w5_v, sem.at[1]).wait()

    a = jnp.maximum(mm(a.astype(bf16), w5_v) + b("b5"), 0.0)

    # final = clamp(phi * tanh(l6(a)) + mid, -max_action, max_action)
    pert = phi * jnp.tanh(mm(a.astype(bf16), w6) + b("b6"))
    final = jnp.clip(pert + mid, -max_action, max_action)

    # Single coalesced output slab: [latent | mid | final]
    out_ref[:, 0:lp] = latent
    out_ref[:, lp:lp + ap] = mid
    out_ref[:, lp + ap:lp + 2 * ap] = final


# ----------------------------------------------------------------------------
# Parameter construction (PyTorch-Linear-style init, zero-padded + bf16)
# ----------------------------------------------------------------------------
def make_params(key, state_dim, action_dim, latent_action_dim):
    hidden = (400, 300, 400, 300)
    dec_hidden = 750  # BCQ VAE decoder hidden size

    # Small (contraction) dims: pad only to the bf16 sublane multiple (16).
    sp = _round_up(state_dim, 16)
    ap = _round_up(action_dim, 16)
    lp = _round_up(latent_action_dim, 16)
    # Hidden (lane/output) dims: keep at multiples of 128.
    h0, h1, h2, h3 = (_round_up(h, 128) for h in hidden)
    dh = _round_up(dec_hidden, 128)

    def uniform(k, shape, bound):
        return jax.random.uniform(k, shape, jnp.float32, -bound, bound)

    def linear(k, in_dim, out_dim, in_pad, out_pad):
        kw, kb = jax.random.split(k)
        bound = 1.0 / math.sqrt(in_dim)
        w = uniform(kw, (in_dim, out_dim), bound)
        bvec = uniform(kb, (out_dim,), bound)
        wp = jnp.zeros((in_pad, out_pad), jnp.float32).at[:in_dim, :out_dim].set(w)
        bp = jnp.zeros((out_pad,), jnp.float32).at[:out_dim].set(bvec)
        return wp.astype(jnp.bfloat16), bp

    def linear_split(k, in_a, in_b, out_dim, a_pad, b_pad, out_pad):
        # Linear over cat([xa, xb]) stored as two weight blocks sharing one bias.
        kw, kb = jax.random.split(k)
        bound = 1.0 / math.sqrt(in_a + in_b)
        w = uniform(kw, (in_a + in_b, out_dim), bound)
        bvec = uniform(kb, (out_dim,), bound)
        wa = jnp.zeros((a_pad, out_pad), jnp.float32).at[:in_a, :out_dim].set(w[:in_a])
        wb = jnp.zeros((b_pad, out_pad), jnp.float32).at[:in_b, :out_dim].set(w[in_a:])
        bp = jnp.zeros((out_pad,), jnp.float32).at[:out_dim].set(bvec)
        return wa.astype(jnp.bfloat16), wb.astype(jnp.bfloat16), bp

    keys = jax.random.split(key, 9)
    w1, b1 = linear(keys[0], state_dim, hidden[0], sp, h0)
    w2, b2 = linear(keys[1], hidden[0], hidden[1], h0, h1)
    w3, b3 = linear(keys[2], hidden[1], latent_action_dim, h1, lp)
    wd1s, wd1z, bd1 = linear_split(keys[3], state_dim, latent_action_dim, dec_hidden, sp, lp, dh)
    wd2, bd2 = linear(keys[4], dec_hidden, dec_hidden, dh, dh)
    wd3, bd3 = linear(keys[5], dec_hidden, action_dim, dh, ap)
    w4s, w4m, b4 = linear_split(keys[6], state_dim, action_dim, hidden[2], sp, ap, h2)
    w5, b5 = linear(keys[7], hidden[2], hidden[3], h2, h3)
    w6, b6 = linear(keys[8], hidden[3], action_dim, h3, ap)

    # Coalesce all biases into one (1, N) f32 slab with 128-aligned slots.
    bvecs = {"b1": b1, "b2": b2, "b3": b3, "bd1": bd1, "bd2": bd2, "bd3": bd3,
             "b4": b4, "b5": b5, "b6": b6}
    bias_layout = ["b1", "b2", "bd1", "bd2", "b4", "b5", "b3", "bd3", "b6"]
    off = {}
    cur = 0
    for name in bias_layout:
        w = int(bvecs[name].shape[0])
        off[name] = (cur, w)
        cur += _round_up(w, 128)
    bias = jnp.zeros((1, cur), jnp.float32)
    for name in bias_layout:
        o, w = off[name]
        bias = bias.at[0, o:o + w].set(bvecs[name])

    params = {
        "w1": w1, "w2": w2, "w3": w3,
        "wd1_s": wd1s, "wd1_z": wd1z, "wd2": wd2, "wd3": wd3,
        "w4_s": w4s, "w4_m": w4m, "w5": w5, "w6": w6,
        "bias": bias,
    }
    dims = {
        "state_dim": state_dim, "action_dim": action_dim,
        "latent_action_dim": latent_action_dim,
        "state_pad": sp, "action_pad": ap, "latent_pad": lp,
        "bias_off": off,
    }
    return params, dims


# ----------------------------------------------------------------------------
# Forward pass wrapper (single fused pallas_call, batch-tiled grid)
# ----------------------------------------------------------------------------
def actor_perturbation_forward(params, state, dims, *, max_action,
                               max_latent_action, phi):
    batch = state.shape[0]
    sp, ap, lp = dims["state_pad"], dims["action_pad"], dims["latent_pad"]
    out_w = lp + 2 * ap

    tile = min(128, _round_up(batch, 8))          # batch tile (sublane-aligned)
    batch_pad = _round_up(batch, tile)
    n_tiles = batch_pad // tile

    s = jnp.pad(state.astype(jnp.float32),
                ((0, batch_pad - batch), (0, sp - dims["state_dim"])))

    args = (
        s,
        params["w1"], params["w2"], params["w3"],
        params["wd1_s"], params["wd1_z"], params["wd3"],
        params["w4_s"], params["w4_m"], params["w6"],
        params["bias"],
        params["wd2"], params["w5"],              # manually prefetched (pl.ANY)
    )

    def const_spec(a):
        # Full-array block, constant index_map: fetched once, resident across tiles.
        return pl.BlockSpec(a.shape, lambda i: (0, 0))

    in_specs = ([pl.BlockSpec((tile, sp), lambda i: (i, 0))]
                + [const_spec(a) for a in args[1:11]]
                + [pl.BlockSpec(memory_space=pl.ANY),
                   pl.BlockSpec(memory_space=pl.ANY)])

    out_specs = pl.BlockSpec((tile, out_w), lambda i: (i, 0))
    out_shape = jax.ShapeDtypeStruct((batch_pad, out_w), jnp.float32)

    kernel = functools.partial(
        _actor_perturbation_kernel,
        max_action=max_action, max_latent_action=max_latent_action, phi=phi,
        off=dims["bias_off"], lp=lp, ap=ap)

    out = pl.pallas_call(
        kernel,
        grid=(n_tiles,),
        in_specs=in_specs,
        out_specs=out_specs,
        out_shape=out_shape,
        scratch_shapes=[
            pltpu.VMEM(params["wd2"].shape, jnp.bfloat16),   # prefetched wd2
            pltpu.VMEM(params["w5"].shape, jnp.bfloat16),    # prefetched w5
            pltpu.SemaphoreType.DMA((2,)),
        ],
        compiler_params=pltpu.CompilerParams(
            dimension_semantics=("arbitrary",)),
    )(*args)

    latent = out[:batch, :dims["latent_action_dim"]]
    mid = out[:batch, lp:lp + dims["action_dim"]]
    final = out[:batch, lp + ap:lp + ap + dims["action_dim"]]
    return latent, mid, final


# ----------------------------------------------------------------------------
# Pure-JAX reference (mirrors the kernel's bf16-weight / f32-accum precision)
# ----------------------------------------------------------------------------
def _ref_forward(params, state, dims, *, max_action, max_latent_action, phi):
    bf16 = jnp.bfloat16
    off = dims["bias_off"]

    def mm(x, w):
        return jnp.dot(x.astype(bf16), w, preferred_element_type=jnp.float32)

    def b(name):
        o, w = off[name]
        return params["bias"][:, o:o + w]

    s = jnp.pad(state.astype(jnp.float32),
                ((0, 0), (0, dims["state_pad"] - dims["state_dim"])))

    a = jax.nn.relu(mm(s, params["w1"]) + b("b1"))
    a = jax.nn.relu(mm(a, params["w2"]) + b("b2"))
    latent = max_latent_action * jnp.tanh(mm(a, params["w3"]) + b("b3"))

    d = jax.nn.relu(mm(s, params["wd1_s"]) + mm(latent, params["wd1_z"]) + b("bd1"))
    d = jax.nn.relu(mm(d, params["wd2"]) + b("bd2"))
    mid = max_action * jnp.tanh(mm(d, params["wd3"]) + b("bd3"))

    a = jax.nn.relu(mm(s, params["w4_s"]) + mm(mid, params["w4_m"]) + b("b4"))
    a = jax.nn.relu(mm(a, params["w5"]) + b("b5"))
    pert = phi * jnp.tanh(mm(a, params["w6"]) + b("b6"))
    final = jnp.clip(pert + mid, -max_action, max_action)

    return (latent[:, :dims["latent_action_dim"]],
            mid[:, :dims["action_dim"]],
            final[:, :dims["action_dim"]])


# ----------------------------------------------------------------------------
if __name__ == "__main__":
    state_dim = 16
    action_dim = 8
    latent_action_dim = 16
    max_action = 1.0
    max_latent_action = 2.0
    phi = 0.05
    batch = 4

    key = jax.random.PRNGKey(0)
    key_params, key_state = jax.random.split(key)
    params, dims = make_params(key_params, state_dim, action_dim, latent_action_dim)
    state = jax.random.normal(key_state, (batch, state_dim), jnp.float32)

    fwd = jax.jit(
        lambda p, s: actor_perturbation_forward(
            p, s, dims,
            max_action=max_action,
            max_latent_action=max_latent_action,
            phi=phi,
        )
    )
    latent_action, mid_action, final_action = fwd(params, state)
    jax.block_until_ready((latent_action, mid_action, final_action))

    # correctness vs. precision-matched pure-JAX reference
    ref_latent, ref_mid, ref_final = _ref_forward(
        params, state, dims,
        max_action=max_action,
        max_latent_action=max_latent_action,
        phi=phi,
    )
    assert latent_action.shape == (batch, latent_action_dim)
    assert mid_action.shape == (batch, action_dim)
    assert final_action.shape == (batch, action_dim)
    assert jnp.allclose(latent_action, ref_latent, atol=1e-2), \
        jnp.max(jnp.abs(latent_action - ref_latent))
    assert jnp.allclose(mid_action, ref_mid, atol=1e-2), \
        jnp.max(jnp.abs(mid_action - ref_mid))
    assert jnp.allclose(final_action, ref_final, atol=1e-2), \
        jnp.max(jnp.abs(final_action - ref_final))

    print("KERNEL_OK")
</pallas_src>

<mosaic_0001>
module attributes {stable_mosaic.version = 11 : i64} {
  func.func @_actor_perturbation_kernel(%arg0: i32, %arg1: memref<8x16xf32, #tpu.memory_space<vmem>>, %arg2: memref<16x512xbf16, #tpu.memory_space<vmem>>, %arg3: memref<512x384xbf16, #tpu.memory_space<vmem>>, %arg4: memref<384x16xbf16, #tpu.memory_space<vmem>>, %arg5: memref<16x768xbf16, #tpu.memory_space<vmem>>, %arg6: memref<16x768xbf16, #tpu.memory_space<vmem>>, %arg7: memref<768x16xbf16, #tpu.memory_space<vmem>>, %arg8: memref<16x512xbf16, #tpu.memory_space<vmem>>, %arg9: memref<16x512xbf16, #tpu.memory_space<vmem>>, %arg10: memref<384x16xbf16, #tpu.memory_space<vmem>>, %arg11: memref<1x3712xf32, #tpu.memory_space<vmem>>, %arg12: memref<768x768xbf16, #tpu.memory_space<any>>, %arg13: memref<512x384xbf16, #tpu.memory_space<any>>, %arg14: memref<8x48xf32, #tpu.memory_space<vmem>>, %arg15: memref<768x768xbf16, #tpu.memory_space<vmem>>, %arg16: memref<512x384xbf16, #tpu.memory_space<vmem>>, %arg17: memref<2x!tpu.dma_semaphore, #tpu.memory_space<semaphore_mem>>) attributes {dimension_semantics = [#tpu.dimension_semantics<arbitrary>], iteration_bounds = array<i64: 1>, scalar_prefetch = 0 : i64, scratch_operands = 3 : i64, tpu.core_type = #tpu.core_type<tc>, window_params = [{transform_indices = @transform_0, window_bounds = array<i64: 8, 16>}, {pipeline_mode = #tpu.pipeline_mode<synchronous>, transform_indices = @transform_1, window_bounds = array<i64: 16, 512>}, {pipeline_mode = #tpu.pipeline_mode<synchronous>, transform_indices = @transform_2, window_bounds = array<i64: 512, 384>}, {pipeline_mode = #tpu.pipeline_mode<synchronous>, transform_indices = @transform_3, window_bounds = array<i64: 384, 16>}, {pipeline_mode = #tpu.pipeline_mode<synchronous>, transform_indices = @transform_4, window_bounds = array<i64: 16, 768>}, {pipeline_mode = #tpu.pipeline_mode<synchronous>, transform_indices = @transform_5, window_bounds = array<i64: 16, 768>}, {pipeline_mode = #tpu.pipeline_mode<synchronous>, transform_indices = @transform_6, window_bounds = array<i64: 768, 16>}, {pipeline_mode = #tpu.pipeline_mode<synchronous>, transform_indices = @transform_7, window_bounds = array<i64: 16, 512>}, {pipeline_mode = #tpu.pipeline_mode<synchronous>, transform_indices = @transform_8, window_bounds = array<i64: 16, 512>}, {pipeline_mode = #tpu.pipeline_mode<synchronous>, transform_indices = @transform_9, window_bounds = array<i64: 384, 16>}, {pipeline_mode = #tpu.pipeline_mode<synchronous>, transform_indices = @transform_10, window_bounds = array<i64: 1, 3712>}, {}, {}, {transform_indices = @transform_13, window_bounds = array<i64: 8, 48>}]} {
    %c0_i32 = arith.constant 0 : i32
    %0 = arith.cmpi eq, %arg0, %c0_i32 : i32
    %1 = arith.extui %0 : i1 to i32
    %c0_i32_0 = arith.constant 0 : i32
    %2 = arith.cmpi ne, %1, %c0_i32_0 : i32
    scf.if %2 {
      %c0_i32_63 = arith.constant 0 : i32
      %99 = tpu.memref_slice %arg17[%c0_i32_63] : memref<2x!tpu.dma_semaphore, #tpu.memory_space<semaphore_mem>> -> memref<1x!tpu.dma_semaphore, #tpu.memory_space<semaphore_mem>>
      %100 = tpu.memref_squeeze %99 : memref<1x!tpu.dma_semaphore, #tpu.memory_space<semaphore_mem>> -> memref<!tpu.dma_semaphore, #tpu.memory_space<semaphore_mem>>
      tpu.enqueue_dma source(%arg12 : memref<768x768xbf16, #tpu.memory_space<any>>) target(%arg15 : memref<768x768xbf16, #tpu.memory_space<vmem>>) target_semaphore(%100 : memref<!tpu.dma_semaphore, #tpu.memory_space<semaphore_mem>>)
      %c1_i32 = arith.constant 1 : i32
      %101 = tpu.memref_slice %arg17[%c1_i32] : memref<2x!tpu.dma_semaphore, #tpu.memory_space<semaphore_mem>> -> memref<1x!tpu.dma_semaphore, #tpu.memory_space<semaphore_mem>>
      %102 = tpu.memref_squeeze %101 : memref<1x!tpu.dma_semaphore, #tpu.memory_space<semaphore_mem>> -> memref<!tpu.dma_semaphore, #tpu.memory_space<semaphore_mem>>
      tpu.enqueue_dma source(%arg13 : memref<512x384xbf16, #tpu.memory_space<any>>) target(%arg16 : memref<512x384xbf16, #tpu.memory_space<vmem>>) target_semaphore(%102 : memref<!tpu.dma_semaphore, #tpu.memory_space<semaphore_mem>>)
    } else {
    }
    %c0 = arith.constant 0 : index
    %c0_1 = arith.constant 0 : index
    %3 = vector.load %arg1[%c0, %c0_1] : memref<8x16xf32, #tpu.memory_space<vmem>>, vector<8x16xf32>
    %4 = arith.truncf %3 : vector<8x16xf32> to vector<8x16xbf16>
    %c0_2 = arith.constant 0 : index
    %c0_3 = arith.constant 0 : index
    %5 = vector.load %arg2[%c0_2, %c0_3] : memref<16x512xbf16, #tpu.memory_space<vmem>>, vector<16x512xbf16>
    %cst = arith.constant dense<0.000000e+00> : vector<8x512xf32>
    %6 = tpu.matmul %4, %5, %cst {dimension_numbers = #tpu.dot_dimension_numbers<[1], [0], [0], [1], [0, 0, 1, 1], [], []>} : vector<8x16xbf16>, vector<16x512xbf16>, vector<8x512xf32> -> vector<8x512xf32>
    %c0_4 = arith.constant 0 : index
    %c0_5 = arith.constant 0 : index
    %7 = vector.load %arg11[%c0_4, %c0_5] : memref<1x3712xf32, #tpu.memory_space<vmem>>, vector<1x512xf32>
    %8 = vector.broadcast %7 : vector<1x512xf32> to vector<8x512xf32>
    %9 = arith.addf %6, %8 : vector<8x512xf32>
    %cst_6 = arith.constant 0.000000e+00 : f32
    %10 = vector.broadcast %cst_6 : f32 to vector<8x512xf32>
    %11 = arith.maximumf %9, %10 : vector<8x512xf32>
    %12 = arith.truncf %11 : vector<8x512xf32> to vector<8x512xbf16>
    %c0_7 = arith.constant 0 : index
    %c0_8 = arith.constant 0 : index
    %13 = vector.load %arg3[%c0_7, %c0_8] : memref<512x384xbf16, #tpu.memory_space<vmem>>, vector<512x384xbf16>
    %cst_9 = arith.constant dense<0.000000e+00> : vector<8x384xf32>
    %14 = tpu.matmul %12, %13, %cst_9 {dimension_numbers = #tpu.dot_dimension_numbers<[1], [0], [0], [1], [0, 0, 1, 1], [], []>} : vector<8x512xbf16>, vector<512x384xbf16>, vector<8x384xf32> -> vector<8x384xf32>
    %c0_10 = arith.constant 0 : index
    %c512 = arith.constant 512 : index
    %15 = vector.load %arg11[%c0_10, %c512] : memref<1x3712xf32, #tpu.memory_space<vmem>>, vector<1x384xf32>
    %16 = vector.broadcast %15 : vector<1x384xf32> to vector<8x384xf32>
    %17 = arith.addf %14, %16 : vector<8x384xf32>
    %cst_11 = arith.constant 0.000000e+00 : f32
    %18 = vector.broadcast %cst_11 : f32 to vector<8x384xf32>
    %19 = arith.maximumf %17, %18 : vector<8x384xf32>
    %20 = arith.truncf %19 : vector<8x384xf32> to vector<8x384xbf16>
    %c0_12 = arith.constant 0 : index
    %c0_13 = arith.constant 0 : index
    %21 = vector.load %arg4[%c0_12, %c0_13] : memref<384x16xbf16, #tpu.memory_space<vmem>>, vector<384x16xbf16>
    %cst_14 = arith.constant dense<0.000000e+00> : vector<8x16xf32>
    %22 = tpu.matmul %20, %21, %cst_14 {dimension_numbers = #tpu.dot_dimension_numbers<[1], [0], [0], [1], [0, 0, 1, 1], [], []>} : vector<8x384xbf16>, vector<384x16xbf16>, vector<8x16xf32> -> vector<8x16xf32>
    %c0_15 = arith.constant 0 : index
    %c3328 = arith.constant 3328 : index
    %23 = vector.load %arg11[%c0_15, %c3328] : memref<1x3712xf32, #tpu.memory_space<vmem>>, vector<1x16xf32>
    %24 = vector.broadcast %23 : vector<1x16xf32> to vector<8x16xf32>
    %25 = arith.addf %22, %24 : vector<8x16xf32>
    %26 = math.tanh %25 : vector<8x16xf32>
    %cst_16 = arith.constant 2.000000e+00 : f32
    %27 = vector.broadcast %cst_16 : f32 to vector<8x16xf32>
    %28 = arith.mulf %27, %26 : vector<8x16xf32>
    %29 = arith.truncf %28 : vector<8x16xf32> to vector<8x16xbf16>
    %c0_17 = arith.constant 0 : index
    %c0_18 = arith.constant 0 : index
    %30 = vector.load %arg5[%c0_17, %c0_18] : memref<16x768xbf16, #tpu.memory_space<vmem>>, vector<16x768xbf16>
    %cst_19 = arith.constant dense<0.000000e+00> : vector<8x768xf32>
    %31 = tpu.matmul %4, %30, %cst_19 {dimension_numbers = #tpu.dot_dimension_numbers<[1], [0], [0], [1], [0, 0, 1, 1], [], []>} : vector<8x16xbf16>, vector<16x768xbf16>, vector<8x768xf32> -> vector<8x768xf32>
    %c0_20 = arith.constant 0 : index
    %c0_21 = arith.constant 0 : index
    %32 = vector.load %arg6[%c0_20, %c0_21] : memref<16x768xbf16, #tpu.memory_space<vmem>>, vector<16x768xbf16>
    %cst_22 = arith.constant dense<0.000000e+00> : vector<8x768xf32>
    %33 = tpu.matmul %29, %32, %cst_22 {dimension_numbers = #tpu.dot_dimension_numbers<[1], [0], [0], [1], [0, 0, 1, 1], [], []>} : vector<8x16xbf16>, vector<16x768xbf16>, vector<8x768xf32> -> vector<8x768xf32>
    %34 = arith.addf %31, %33 : vector<8x768xf32>
    %c0_23 = arith.constant 0 : index
    %c896 = arith.constant 896 : index
    %35 = vector.load %arg11[%c0_23, %c896] : memref<1x3712xf32, #tpu.memory_space<vmem>>, vector<1x768xf32>
    %36 = vector.broadcast %35 : vector<1x768xf32> to vector<8x768xf32>
    %37 = arith.addf %34, %36 : vector<8x768xf32>
    %cst_24 = arith.constant 0.000000e+00 : f32
    %38 = vector.broadcast %cst_24 : f32 to vector<8x768xf32>
    %39 = arith.maximumf %37, %38 : vector<8x768xf32>
    %c0_i32_25 = arith.constant 0 : i32
    %40 = arith.cmpi eq, %arg0, %c0_i32_25 : i32
    %41 = arith.extui %40 : i1 to i32
    %c0_i32_26 = arith.constant 0 : i32
    %42 = arith.cmpi ne, %41, %c0_i32_26 : i32
    scf.if %42 {
      %c0_i32_63 = arith.constant 0 : i32
      %99 = tpu.memref_slice %arg17[%c0_i32_63] : memref<2x!tpu.dma_semaphore, #tpu.memory_space<semaphore_mem>> -> memref<1x!tpu.dma_semaphore, #tpu.memory_space<semaphore_mem>>
      %100 = tpu.memref_squeeze %99 : memref<1x!tpu.dma_semaphore, #tpu.memory_space<semaphore_mem>> -> memref<!tpu.dma_semaphore, #tpu.memory_space<semaphore_mem>>
      tpu.wait_dma2 semaphore(%100 : memref<!tpu.dma_semaphore, #tpu.memory_space<semaphore_mem>>) src(%arg12 : memref<768x768xbf16, #tpu.memory_space<any>>) dst(%arg15 : memref<768x768xbf16, #tpu.memory_space<vmem>>)
    } else {
    }
    %43 = arith.truncf %39 : vector<8x768xf32> to vector<8x768xbf16>
    %c0_27 = arith.constant 0 : index
    %c0_28 = arith.constant 0 : index
    %44 = vector.load %arg15[%c0_27, %c0_28] : memref<768x768xbf16, #tpu.memory_space<vmem>>, vector<768x768xbf16>
    %cst_29 = arith.constant dense<0.000000e+00> : vector<8x768xf32>
    %45 = tpu.matmul %43, %44, %cst_29 {dimension_numbers = #tpu.dot_dimension_numbers<[1], [0], [0], [1], [0, 0, 1, 1], [], []>} : vector<8x768xbf16>, vector<768x768xbf16>, vector<8x768xf32> -> vector<8x768xf32>
    %c0_30 = arith.constant 0 : index
    %c1664 = arith.constant 1664 : index
    %46 = vector.load %arg11[%c0_30, %c1664] : memref<1x3712xf32, #tpu.memory_space<vmem>>, vector<1x768xf32>
    %47 = vector.broadcast %46 : vector<1x768xf32> to vector<8x768xf32>
    %48 = arith.addf %45, %47 : vector<8x768xf32>
    %cst_31 = arith.constant 0.000000e+00 : f32
    %49 = vector.broadcast %cst_31 : f32 to vector<8x768xf32>
    %50 = arith.maximumf %48, %49 : vector<8x768xf32>
    %51 = arith.truncf %50 : vector<8x768xf32> to vector<8x768xbf16>
    %c0_32 = arith.constant 0 : index
    %c0_33 = arith.constant 0 : index
    %52 = vector.load %arg7[%c0_32, %c0_33] : memref<768x16xbf16, #tpu.memory_space<vmem>>, vector<768x16xbf16>
    %cst_34 = arith.constant dense<0.000000e+00> : vector<8x16xf32>
    %53 = tpu.matmul %51, %52, %cst_34 {dimension_numbers = #tpu.dot_dimension_numbers<[1], [0], [0], [1], [0, 0, 1, 1], [], []>} : vector<8x768xbf16>, vector<768x16xbf16>, vector<8x16xf32> -> vector<8x16xf32>
    %c0_35 = arith.constant 0 : index
    %c3456 = arith.constant 3456 : index
    %54 = vector.load %arg11[%c0_35, %c3456] : memref<1x3712xf32, #tpu.memory_space<vmem>>, vector<1x16xf32>
    %55 = vector.broadcast %54 : vector<1x16xf32> to vector<8x16xf32>
    %56 = arith.addf %53, %55 : vector<8x16xf32>
    %57 = math.tanh %56 : vector<8x16xf32>
    %cst_36 = arith.constant 1.000000e+00 : f32
    %58 = vector.broadcast %cst_36 : f32 to vector<8x16xf32>
    %59 = arith.mulf %58, %57 : vector<8x16xf32>
    %60 = arith.truncf %59 : vector<8x16xf32> to vector<8x16xbf16>
    %c0_37 = arith.constant 0 : index
    %c0_38 = arith.constant 0 : index
    %61 = vector.load %arg8[%c0_37, %c0_38] : memref<16x512xbf16, #tpu.memory_space<vmem>>, vector<16x512xbf16>
    %cst_39 = arith.constant dense<0.000000e+00> : vector<8x512xf32>
    %62 = tpu.matmul %4, %61, %cst_39 {dimension_numbers = #tpu.dot_dimension_numbers<[1], [0], [0], [1], [0, 0, 1, 1], [], []>} : vector<8x16xbf16>, vector<16x512xbf16>, vector<8x512xf32> -> vector<8x512xf32>
    %c0_40 = arith.constant 0 : index
    %c0_41 = arith.constant 0 : index
    %63 = vector.load %arg9[%c0_40, %c0_41] : memref<16x512xbf16, #tpu.memory_space<vmem>>, vector<16x512xbf16>
    %cst_42 = arith.constant dense<0.000000e+00> : vector<8x512xf32>
    %64 = tpu.matmul %60, %63, %cst_42 {dimension_numbers = #tpu.dot_dimension_numbers<[1], [0], [0], [1], [0, 0, 1, 1], [], []>} : vector<8x16xbf16>, vector<16x512xbf16>, vector<8x512xf32> -> vector<8x512xf32>
    %65 = arith.addf %62, %64 : vector<8x512xf32>
    %c0_43 = arith.constant 0 : index
    %c2432 = arith.constant 2432 : index
    %66 = vector.load %arg11[%c0_43, %c2432] : memref<1x3712xf32, #tpu.memory_space<vmem>>, vector<1x512xf32>
    %67 = vector.broadcast %66 : vector<1x512xf32> to vector<8x512xf32>
    %68 = arith.addf %65, %67 : vector<8x512xf32>
    %cst_44 = arith.constant 0.000000e+00 : f32
    %69 = vector.broadcast %cst_44 : f32 to vector<8x512xf32>
    %70 = arith.maximumf %68, %69 : vector<8x512xf32>
    %c0_i32_45 = arith.constant 0 : i32
    %71 = arith.cmpi eq, %arg0, %c0_i32_45 : i32
    %72 = arith.extui %71 : i1 to i32
    %c0_i32_46 = arith.constant 0 : i32
    %73 = arith.cmpi ne, %72, %c0_i32_46 : i32
    scf.if %73 {
      %c1_i32 = arith.constant 1 : i32
      %99 = tpu.memref_slice %arg17[%c1_i32] : memref<2x!tpu.dma_semaphore, #tpu.memory_space<semaphore_mem>> -> memref<1x!tpu.dma_semaphore, #tpu.memory_space<semaphore_mem>>
      %100 = tpu.memref_squeeze %99 : memref<1x!tpu.dma_semaphore, #tpu.memory_space<semaphore_mem>> -> memref<!tpu.dma_semaphore, #tpu.memory_space<semaphore_mem>>
      tpu.wait_dma2 semaphore(%100 : memref<!tpu.dma_semaphore, #tpu.memory_space<semaphore_mem>>) src(%arg13 : memref<512x384xbf16, #tpu.memory_space<any>>) dst(%arg16 : memref<512x384xbf16, #tpu.memory_space<vmem>>)
    } else {
    }
    %74 = arith.truncf %70 : vector<8x512xf32> to vector<8x512xbf16>
    %c0_47 = arith.constant 0 : index
    %c0_48 = arith.constant 0 : index
    %75 = vector.load %arg16[%c0_47, %c0_48] : memref<512x384xbf16, #tpu.memory_space<vmem>>, vector<512x384xbf16>
    %cst_49 = arith.constant dense<0.000000e+00> : vector<8x384xf32>
    %76 = tpu.matmul %74, %75, %cst_49 {dimension_numbers = #tpu.dot_dimension_numbers<[1], [0], [0], [1], [0, 0, 1, 1], [], []>} : vector<8x512xbf16>, vector<512x384xbf16>, vector<8x384xf32> -> vector<8x384xf32>
    %c0_50 = arith.constant 0 : index
    %c2944 = arith.constant 2944 : index
    %77 = vector.load %arg11[%c0_50, %c2944] : memref<1x3712xf32, #tpu.memory_space<vmem>>, vector<1x384xf32>
    %78 = vector.broadcast %77 : vector<1x384xf32> to vector<8x384xf32>
    %79 = arith.addf %76, %78 : vector<8x384xf32>
    %cst_51 = arith.constant 0.000000e+00 : f32
    %80 = vector.broadcast %cst_51 : f32 to vector<8x384xf32>
    %81 = arith.maximumf %79, %80 : vector<8x384xf32>
    %82 = arith.truncf %81 : vector<8x384xf32> to vector<8x384xbf16>
    %c0_52 = arith.constant 0 : index
    %c0_53 = arith.constant 0 : index
    %83 = vector.load %arg10[%c0_52, %c0_53] : memref<384x16xbf16, #tpu.memory_space<vmem>>, vector<384x16xbf16>
    %cst_54 = arith.constant dense<0.000000e+00> : vector<8x16xf32>
    %84 = tpu.matmul %82, %83, %cst_54 {dimension_numbers = #tpu.dot_dimension_numbers<[1], [0], [0], [1], [0, 0, 1, 1], [], []>} : vector<8x384xbf16>, vector<384x16xbf16>, vector<8x16xf32> -> vector<8x16xf32>
    %c0_55 = arith.constant 0 : index
    %c3584 = arith.constant 3584 : index
    %85 = vector.load %arg11[%c0_55, %c3584] : memref<1x3712xf32, #tpu.memory_space<vmem>>, vector<1x16xf32>
    %86 = vector.broadcast %85 : vector<1x16xf32> to vector<8x16xf32>
    %87 = arith.addf %84, %86 : vector<8x16xf32>
    %88 = math.tanh %87 : vector<8x16xf32>
    %cst_56 = arith.constant 5.000000e-02 : f32
    %89 = vector.broadcast %cst_56 : f32 to vector<8x16xf32>
    %90 = arith.mulf %89, %88 : vector<8x16xf32>
    %91 = arith.addf %90, %59 : vector<8x16xf32>
    %cst_57 = arith.constant -1.000000e+00 : f32
    %cst_58 = arith.constant 1.000000e+00 : f32
    %92 = vector.broadcast %cst_57 : f32 to vector<8x16xf32>
    %93 = arith.maximumf %92, %91 : vector<8x16xf32>
    %94 = vector.broadcast %cst_58 : f32 to vector<8x16xf32>
    %95 = arith.minimumf %94, %93 : vector<8x16xf32>
    %c0_59 = arith.constant 0 : index
    %c0_60 = arith.constant 0 : index
    %96 = vector.load %arg14[%c0_59, %c0_60] : memref<8x48xf32, #tpu.memory_space<vmem>>, vector<8x16xf32>
    tpu.vector_store %arg14[%c0_59, %c0_60], %28 {strides = array<i32>} : memref<8x48xf32, #tpu.memory_space<vmem>>, vector<8x16xf32>,
    %c0_61 = arith.constant 0 : index
    %c16 = arith.constant 16 : index
    %97 = vector.load %arg14[%c0_61, %c16] : memref<8x48xf32, #tpu.memory_space<vmem>>, vector<8x16xf32>
    tpu.vector_store %arg14[%c0_61, %c16], %59 {strides = array<i32>} : memref<8x48xf32, #tpu.memory_space<vmem>>, vector<8x16xf32>,
    %c0_62 = arith.constant 0 : index
    %c32 = arith.constant 32 : index
    %98 = vector.load %arg14[%c0_62, %c32] : memref<8x48xf32, #tpu.memory_space<vmem>>, vector<8x16xf32>
    tpu.vector_store %arg14[%c0_62, %c32], %95 {strides = array<i32>} : memref<8x48xf32, #tpu.memory_space<vmem>>, vector<8x16xf32>,
    return
  }
  func.func @transform_0(%arg0: i32) -> (i32, i32) {
    %c0_i32 = arith.constant 0 : i32
    %c0_i32_0 = arith.constant 0 : i32
    return %arg0, %c0_i32 : i32, i32
  }
  func.func @transform_1(%arg0: i32) -> (i32, i32) {
    %c0_i32 = arith.constant 0 : i32
    %c0_i32_0 = arith.constant 0 : i32
    %c0_i32_1 = arith.constant 0 : i32
    return %c0_i32, %c0_i32_0 : i32, i32
  }
  func.func @transform_2(%arg0: i32) -> (i32, i32) {
    %c0_i32 = arith.constant 0 : i32
    %c0_i32_0 = arith.constant 0 : i32
    %c0_i32_1 = arith.constant 0 : i32
    return %c0_i32, %c0_i32_0 : i32, i32
  }
  func.func @transform_3(%arg0: i32) -> (i32, i32) {
    %c0_i32 = arith.constant 0 : i32
    %c0_i32_0 = arith.constant 0 : i32
    %c0_i32_1 = arith.constant 0 : i32
    return %c0_i32, %c0_i32_0 : i32, i32
  }
  func.func @transform_4(%arg0: i32) -> (i32, i32) {
    %c0_i32 = arith.constant 0 : i32
    %c0_i32_0 = arith.constant 0 : i32
    %c0_i32_1 = arith.constant 0 : i32
    return %c0_i32, %c0_i32_0 : i32, i32
  }
  func.func @transform_5(%arg0: i32) -> (i32, i32) {
    %c0_i32 = arith.constant 0 : i32
    %c0_i32_0 = arith.constant 0 : i32
    %c0_i32_1 = arith.constant 0 : i32
    return %c0_i32, %c0_i32_0 : i32, i32
  }
  func.func @transform_6(%arg0: i32) -> (i32, i32) {
    %c0_i32 = arith.constant 0 : i32
    %c0_i32_0 = arith.constant 0 : i32
    %c0_i32_1 = arith.constant 0 : i32
    return %c0_i32, %c0_i32_0 : i32, i32
  }
  func.func @transform_7(%arg0: i32) -> (i32, i32) {
    %c0_i32 = arith.constant 0 : i32
    %c0_i32_0 = arith.constant 0 : i32
    %c0_i32_1 = arith.constant 0 : i32
    return %c0_i32, %c0_i32_0 : i32, i32
  }
  func.func @transform_8(%arg0: i32) -> (i32, i32) {
    %c0_i32 = arith.constant 0 : i32
    %c0_i32_0 = arith.constant 0 : i32
    %c0_i32_1 = arith.constant 0 : i32
    return %c0_i32, %c0_i32_0 : i32, i32
  }
  func.func @transform_9(%arg0: i32) -> (i32, i32) {
    %c0_i32 = arith.constant 0 : i32
    %c0_i32_0 = arith.constant 0 : i32
    %c0_i32_1 = arith.constant 0 : i32
    return %c0_i32, %c0_i32_0 : i32, i32
  }
  func.func @transform_10(%arg0: i32) -> (i32, i32) {
    %c0_i32 = arith.constant 0 : i32
    %c0_i32_0 = arith.constant 0 : i32
    %c0_i32_1 = arith.constant 0 : i32
    return %c0_i32, %c0_i32_0 : i32, i32
  }
  func.func @transform_13(%arg0: i32) -> (i32, i32) {
    %c0_i32 = arith.constant 0 : i32
    %c0_i32_0 = arith.constant 0 : i32
    return %arg0, %c0_i32 : i32, i32
  }
}

</mosaic_0001>

<llo_original>
// kernel: _lambda_.1
$region0: #{_lambda_.1}
  #allocation0 [shape = 'u32[]', space=smem, size = 0x4, offset = 0x4, fixed_abs, tag = 'smem constant byte address 0x4 - core index']
  #allocation1 [shape = 'u32[144,128]{1,0:T(1,128)}', space=vmem, size = 0x12000, scoped, tag = 'internal scratch']
  #allocation2 [shape = 'bf16[768,768]{1,0:T(8,128)(2,1)}', space=vmem, size = 0x120000, scoped, tag = 'scratch operand']
  #allocation3 [shape = 'bf16[512,384]{1,0:T(8,128)(2,1)}', space=vmem, size = 0x60000, scoped, tag = 'scratch operand']
  #allocation4 [shape = 's32[2]{0}', space=sflag, size = 0x8, scoped, tag = 'scratch operand']
  #allocation16 [shape = 's32[]', space=sflag, size = 0x4, offset = 0, fixed_abs, tag = 'sflag constant byte address 0x0 - dummy sync flag']
  #allocation17 [shape = 's32[]', space=sflag, size = 0x4, offset = 0, fixed_abs, tag = 'sflag constant byte address 0x0 - dummy sync flag']
  #allocation18 [shape = 'u32[]', space=smem, size = 0x4, offset = 0x44, fixed_abs, tag = 'smem constant byte address 0x44 - assertion arg 0']
  #allocation19 [shape = 'u32[]', space=smem, size = 0x4, offset = 0x48, fixed_abs, tag = 'smem constant byte address 0x48 - assertion arg 1']
  #allocation20 [shape = 's32[]', space=sflag, size = 0x4, offset = 0, fixed_abs, tag = 'sflag constant byte address 0x0 - dummy sync flag']
  #allocation21 [shape = 's32[]', space=sflag, size = 0x4, offset = 0, fixed_abs, tag = 'sflag constant byte address 0x0 - dummy sync flag']
  %s0 = inlined_call_operand.vmem [shape: f32[8,16], index: 0, kind: input, shape index: {}]
  %s1 = inlined_call_operand.hbm [shape: bf16[16,512], index: 1, kind: input, shape index: {}]
  %s2 = inlined_call_operand.hbm [shape: bf16[512,384], index: 2, kind: input, shape index: {}]
  %s3 = inlined_call_operand.vmem [shape: bf16[384,16], index: 3, kind: input, shape index: {}]
  %s4 = inlined_call_operand.hbm [shape: bf16[16,768], index: 4, kind: input, shape index: {}]
  %s5 = inlined_call_operand.hbm [shape: bf16[16,768], index: 5, kind: input, shape index: {}]
  %s6 = inlined_call_operand.vmem [shape: bf16[768,16], index: 6, kind: input, shape index: {}]
  %s7 = inlined_call_operand.hbm [shape: bf16[16,512], index: 7, kind: input, shape index: {}]
  %s8 = inlined_call_operand.hbm [shape: bf16[16,512], index: 8, kind: input, shape index: {}]
  %s9 = inlined_call_operand.vmem [shape: bf16[384,16], index: 9, kind: input, shape index: {}]
  %s10 = inlined_call_operand.hbm [shape: f32[1,3712], index: 10, kind: input, shape index: {}]
  %s11 = inlined_call_operand.hbm [shape: bf16[768,768], index: 11, kind: input, shape index: {}]
  %s12 = inlined_call_operand.hbm [shape: bf16[512,384], index: 12, kind: input, shape index: {}]
  %s13 = inlined_call_operand.vmem [shape: f32[8,48], index: 13, kind: output, shape index: {}]
  %s14 = sld [smem:[#allocation0]]
  $region102: #{_lambda_.1} parent=0
    _
  %s16 = ssub.s32 1, %s14
  %s17 = scalar_select 0, %s16, %s14
  $region1: #{_lambda_.1} parent=0
    #allocation5 [shape = 'u8[16384]{0}', space=vmem, size = 0x4000, scoped, tag = 'input window, operand 1, single buffered']
    #allocation6 [shape = 's32[1]{0}', space=sflag, size = 0x4, scoped, tag = 'scoped memory for _lambda_.1']
    #allocation7 [shape = 'u8[393216]{0}', space=vmem, size = 0x60000, scoped, tag = 'input window, operand 2, single buffered']
    #allocation8 [shape = 's32[1]{0}', space=sflag, size = 0x4, scoped, tag = 'scoped memory for _lambda_.1']
    #allocation9 [shape = 'u8[24576]{0}', space=vmem, size = 0x6000, scoped, tag = 'input window, operand 4, single buffered']
    #allocation10 [shape = 'u8[24576]{0}', space=vmem, size = 0x6000, scoped, tag = 'input window, operand 5, single buffered']
    #allocation11 [shape = 's32[1]{0}', space=sflag, size = 0x4, scoped, tag = 'scoped memory for _lambda_.1']
    #allocation12 [shape = 'u8[16384]{0}', space=vmem, size = 0x4000, scoped, tag = 'input window, operand 7, single buffered']
    #allocation13 [shape = 'u8[16384]{0}', space=vmem, size = 0x4000, scoped, tag = 'input window, operand 8, single buffered']
    #allocation14 [shape = 's32[1]{0}', space=sflag, size = 0x4, scoped, tag = 'scoped memory for _lambda_.1']
    #allocation15 [shape = 'u8[14848]{0}', space=vmem, size = 0x3c00, scoped, tag = 'input window, operand 10, single buffered']
    %18 = vsyncpa [#allocation6], 0
    %19 = vsyncpa [#allocation8], 0
    %20 = vsyncpa [#allocation11], 0
    %21 = vsyncpa [#allocation14], 0
    // Predicated region
    $region2: #{_lambda_.1} parent=1 // pred_check
      _
    $region3: #{_lambda_.1} parent=1 // pred_check_branch
      %23 = sbr.rel (0) target = $region5
    $region4: #{_lambda_.1} parent=1 // pred_region
      _
    $region5: #{_lambda_.1} parent=1 // pred_fallthru
      _
    // Predicated region
    $region6: #{_lambda_.1} parent=1 // pred_check
      _
    $region7: #{_lambda_.1} parent=1 // pred_check_branch
      %25 = sbr.rel (0) target = $region9
    $region8: #{_lambda_.1} parent=1 // pred_region
      %s27 = ssub.s32 512, 512
      %28 = vsyncadd [#allocation6], %s27
      %s29 = sshll.u32 [#allocation5], 4
      %s30 = int_to_ptr.vmem [resolvable:$true] %s29
      %35 = dma.hbm_to_vmem [thread:$0]  %s1, 512, %s30, [#allocation6], 256, 256, 16
    $region9: #{_lambda_.1} parent=1 // pred_fallthru
      _
    // Predicated region
    $region10: #{_lambda_.1} parent=1 // pred_check
      _
    $region11: #{_lambda_.1} parent=1 // pred_check_branch
      %37 = sbr.rel (0) target = $region13
    $region12: #{_lambda_.1} parent=1 // pred_region
      %s39 = ssub.s32 12288, 12288
      %40 = vsyncadd [#allocation8], %s39
      %s41 = sshll.u32 [#allocation7], 4
      %s42 = int_to_ptr.vmem [resolvable:$true] %s41
      %47 = dma.hbm_to_vmem [thread:$0]  %s2, 12288, %s42, [#allocation8], 192, 192, 12
    $region13: #{_lambda_.1} parent=1 // pred_fallthru
      _
    // Predicated region
    $region14: #{_lambda_.1} parent=1 // pred_check
      _
    $region15: #{_lambda_.1} parent=1 // pred_check_branch
      %49 = sbr.rel (0) target = $region17
    $region16: #{_lambda_.1} parent=1 // pred_region
      _
    $region17: #{_lambda_.1} parent=1 // pred_fallthru
      _
    // Predicated region
    $region18: #{_lambda_.1} parent=1 // pred_check
      _
    $region19: #{_lambda_.1} parent=1 // pred_check_branch
      %51 = sbr.rel (0) target = $region21
    $region20: #{_lambda_.1} parent=1 // pred_region
      %s53 = ssub.s32 768, 768
      %54 = vsyncadd [#allocation8], %s53
      %s55 = sshll.u32 [#allocation9], 4
      %s56 = int_to_ptr.vmem [resolvable:$true] %s55
      %61 = dma.hbm_to_vmem [thread:$0]  %s4, 768, %s56, [#allocation8], 384, 384, 24
    $region21: #{_lambda_.1} parent=1 // pred_fallthru
      _
    // Predicated region
    $region22: #{_lambda_.1} parent=1 // pred_check
      _
    $region23: #{_lambda_.1} parent=1 // pred_check_branch
      %63 = sbr.rel (0) target = $region25
    $region24: #{_lambda_.1} parent=1 // pred_region
      %s65 = ssub.s32 768, 768
      %66 = vsyncadd [#allocation11], %s65
      %s67 = sshll.u32 [#allocation10], 4
      %s68 = int_to_ptr.vmem [resolvable:$true] %s67
      %73 = dma.hbm_to_vmem [thread:$0]  %s5, 768, %s68, [#allocation11], 384, 384, 24
    $region25: #{_lambda_.1} parent=1 // pred_fallthru
      _
    // Predicated region
    $region26: #{_lambda_.1} parent=1 // pred_check
      _
    $region27: #{_lambda_.1} parent=1 // pred_check_branch
      %75 = sbr.rel (0) target = $region29
    $region28: #{_lambda_.1} parent=1 // pred_region
      _
    $region29: #{_lambda_.1} parent=1 // pred_fallthru
      _
    // Predicated region
    $region30: #{_lambda_.1} parent=1 // pred_check
      _
    $region31: #{_lambda_.1} parent=1 // pred_check_branch
      %77 = sbr.rel (0) target = $region33
    $region32: #{_lambda_.1} parent=1 // pred_region
      %s79 = ssub.s32 512, 512
      %80 = vsyncadd [#allocation11], %s79
      %s81 = sshll.u32 [#allocation12], 4
      %s82 = int_to_ptr.vmem [resolvable:$true] %s81
      %87 = dma.hbm_to_vmem [thread:$0]  %s7, 512, %s82, [#allocation11], 256, 256, 16
    $region33: #{_lambda_.1} parent=1 // pred_fallthru
      _
    // Predicated region
    $region34: #{_lambda_.1} parent=1 // pred_check
      _
    $region35: #{_lambda_.1} parent=1 // pred_check_branch
      %89 = sbr.rel (0) target = $region37
    $region36: #{_lambda_.1} parent=1 // pred_region
      %s91 = ssub.s32 512, 512
      %92 = vsyncadd [#allocation14], %s91
      %s93 = sshll.u32 [#allocation13], 4
      %s94 = int_to_ptr.vmem [resolvable:$true] %s93
      %99 = dma.hbm_to_vmem [thread:$0]  %s8, 512, %s94, [#allocation14], 256, 256, 16
    $region37: #{_lambda_.1} parent=1 // pred_fallthru
      _
    // Predicated region
    $region38: #{_lambda_.1} parent=1 // pred_check
      _
    $region39: #{_lambda_.1} parent=1 // pred_check_branch
      %101 = sbr.rel (0) target = $region41
    $region40: #{_lambda_.1} parent=1 // pred_region
      _
    $region41: #{_lambda_.1} parent=1 // pred_fallthru
      _
    // Predicated region
    $region42: #{_lambda_.1} parent=1 // pred_check
      _
    $region43: #{_lambda_.1} parent=1 // pred_check_branch
      %103 = sbr.rel (0) target = $region45
    $region44: #{_lambda_.1} parent=1 // pred_region
      %s105 = ssub.s32 464, 464
      %106 = vsyncadd [#allocation14], %s105
      %s108 = sshll.u32 [#allocation15], 4
      %s109 = int_to_ptr.vmem [resolvable:$true] %s108
      %111 = dma.hbm_to_vmem [thread:$0]  %s10, 464, %s109, [#allocation14]
    $region45: #{_lambda_.1} parent=1 // pred_fallthru
      _
    // Predicated region
    $region46: #{_lambda_.1} parent=1 // pred_check
      _
    $region47: #{_lambda_.1} parent=1 // pred_check_branch
      %113 = sbr.rel (0) target = $region49
    $region48: #{_lambda_.1} parent=1 // pred_region
      %114 = dma.done [#allocation6], 512
    $region49: #{_lambda_.1} parent=1 // pred_fallthru
      _
    // Predicated region
    $region50: #{_lambda_.1} parent=1 // pred_check
      _
    $region51: #{_lambda_.1} parent=1 // pred_check_branch
      %116 = sbr.rel (0) target = $region53
    $region52: #{_lambda_.1} parent=1 // pred_region
      %117 = dma.done [#allocation8], 12288
    $region53: #{_lambda_.1} parent=1 // pred_fallthru
      _
    // Predicated region
    $region54: #{_lambda_.1} parent=1 // pred_check
      _
    $region55: #{_lambda_.1} parent=1 // pred_check_branch
      %119 = sbr.rel (0) target = $region57
    $region56: #{_lambda_.1} parent=1 // pred_region
      %120 = dma.done [#allocation8], 768
    $region57: #{_lambda_.1} parent=1 // pred_fallthru
      _
    // Predicated region
    $region58: #{_lambda_.1} parent=1 // pred_check
      _
    $region59: #{_lambda_.1} parent=1 // pred_check_branch
      %122 = sbr.rel (0) target = $region61
    $region60: #{_lambda_.1} parent=1 // pred_region
      %123 = dma.done [#allocation11], 768
    $region61: #{_lambda_.1} parent=1 // pred_fallthru
      _
    // Predicated region
    $region62: #{_lambda_.1} parent=1 // pred_check
      _
    $region63: #{_lambda_.1} parent=1 // pred_check_branch
      %125 = sbr.rel (0) target = $region65
    $region64: #{_lambda_.1} parent=1 // pred_region
      %126 = dma.done [#allocation11], 512
    $region65: #{_lambda_.1} parent=1 // pred_fallthru
      _
    // Predicated region
    $region66: #{_lambda_.1} parent=1 // pred_check
      _
    $region67: #{_lambda_.1} parent=1 // pred_check_branch
      %128 = sbr.rel (0) target = $region69
    $region68: #{_lambda_.1} parent=1 // pred_region
      %129 = dma.done [#allocation14], 512
    $region69: #{_lambda_.1} parent=1 // pred_fallthru
      _
    // Predicated region
    $region70: #{_lambda_.1} parent=1 // pred_check
      _
    $region71: #{_lambda_.1} parent=1 // pred_check_branch
      %131 = sbr.rel (0) target = $region73
    $region72: #{_lambda_.1} parent=1 // pred_region
      %132 = dma.done [#allocation14], 464
    $region73: #{_lambda_.1} parent=1 // pred_fallthru
      _
    %p134 = scmp.eq.s32.totalorder 0, 0
    // Predicated region
    $region74: #{_lambda_.1} parent=1 // pred_check
      %p135 = pneg %p134
    $region75: #{_lambda_.1} parent=1 // pred_check_branch
      %137 = sbr.rel (%p135) target = $region77
    $region76: #{_lambda_.1} parent=1 // pred_region
      // Predicated region
      $region78: #{_lambda_.1} parent=76 // pred_check
        _
      $region79: #{_lambda_.1} parent=76 // pred_check_branch
        %139 = sbr.rel target = $region81
      $region80: #{_lambda_.1} parent=76 // pred_region
        %140 = sst [smem:[#allocation18]] [#allocation17]
        %141 = sst [smem:[#allocation19]] [#allocation16]
      $region81: #{_lambda_.1} parent=76 // pred_fallthru
        _
      %143 = shalt.err (0)
      %s145 = sshll.u32 [#allocation2], 4
      %s146 = int_to_ptr.vmem [resolvable:$true] %s145
      %148 = dma.hbm_to_vmem [thread:$0]  %s11, 36864, %s146, [#allocation4]
      %s149 = scalar_lea.sflag [#allocation4], 1
      // Predicated region
      $region82: #{_lambda_.1} parent=76 // pred_check
        _
      $region83: #{_lambda_.1} parent=76 // pred_check_branch
        %151 = sbr.rel target = $region85
      $region84: #{_lambda_.1} parent=76 // pred_region
        %152 = sst [smem:[#allocation18]] [#allocation21]
        %153 = sst [smem:[#allocation19]] [#allocation20]
      $region85: #{_lambda_.1} parent=76 // pred_fallthru
        _
      %155 = shalt.err (0)
      %s157 = sshll.u32 [#allocation3], 4
      %s158 = int_to_ptr.vmem [resolvable:$true] %s157
      %160 = dma.hbm_to_vmem [thread:$0]  %s12, 12288, %s158, %s149
    $region77: #{_lambda_.1} parent=1 // pred_fallthru
      _
    %v161 = vld [vmem:[%s0] sm:$0xff]
    %v162 = vpack.c.bf16 %v161, %v161
    %v163 = vld [vmem:[#allocation5] sm:$0xff]
    %v164 = vld [vmem:[#allocation5 + $0x8] sm:$0xff]
    %v165 = vld [vmem:[#allocation5 + $0x10] sm:$0xff]
    %v166 = vld [vmem:[#allocation5 + $0x18] sm:$0xff]
    %v167 = vld [vmem:[#allocation15] sm:$0xf]
    %v169 = vlaneseq
    %v170 = vshrl.u32 %v169, 7
    %v171 = vsub.s32 0, %v170
    %v172 = vrot.slane %v167, %v171
    %v173 = vlaneseq
    %v174 = vshrl.u32 %v173, 7
    %v175 = vsub.s32 1, %v174
    %v176 = vrot.slane %v167, %v175
    %v177 = vlaneseq
    %v178 = vshrl.u32 %v177, 7
    %v179 = vsub.s32 2, %v178
    %v180 = vrot.slane %v167, %v179
    %v181 = vlaneseq
    %v182 = vshrl.u32 %v181, 7
    %v183 = vsub.s32 3, %v182
    %v184 = vrot.slane %v167, %v183
    %v193 = vunpack.c.l.b16 %v163
    %v194 = vunpack.c.h.b16 %v163
    %v195 = vunpack.c.l.b16 %v164
    %v196 = vunpack.c.h.b16 %v164
    %v197 = vunpack.c.l.b16 %v165
    %v198 = vunpack.c.h.b16 %v165
    %v199 = vunpack.c.l.b16 %v166
    %v200 = vunpack.c.h.b16 %v166
    %v201 = vpack.c.b16 %v197, %v193
    %v202 = vpack.c.b16 %v198, %v194
    %v203 = vpack.c.b16 %v199, %v195
    %v204 = vpack.c.b16 %v200, %v196
    %vm209 = vcmask 130048
    %v211 = vsel %vm209, %v162, 0
    %213 = vmatprep.subr.bf16.mxu0 0
    %214 = vmatpush1.bf16.msra.mxu0 0
    %215 = vmatprep.subr.bf16.mxu0 0
    %216 = vmatpush1.bf16.msra.mxu0 0
    %217 = vmatprep.subr.bf16.mxu0 0
    %218 = vmatpush1.bf16.msra.mxu0 0
    %219 = vmatprep.subr.bf16.mxu0 0
    %220 = vmatpush1.bf16.msra.mxu0 0
    %221 = vmatprep.subr.bf16.mxu0 0
    %222 = vmatpush1.bf16.msra.mxu0 0
    %223 = vmatprep.subr.bf16.mxu0 0
    %224 = vmatpush1.bf16.msra.mxu0 0
    %225 = vmatprep.subr.bf16.mxu0 0
    %226 = vmatpush1.bf16.msra.mxu0 0
    %227 = vmatprep.subr.bf16.mxu0 %v202
    %228 = vmatpush1.bf16.msra.mxu0 %v201
    %229 = vmatprep.subr.bf16.mxu0 0
    %230 = vmatpush2.bf16.msra.mxu0 0
    %231 = vmatprep.subr.bf16.mxu0 0
    %232 = vmatpush2.bf16.msra.mxu0 0
    %233 = vmatprep.subr.bf16.mxu0 0
    %234 = vmatpush2.bf16.msra.mxu0 0
    %235 = vmatprep.subr.bf16.mxu0 0
    %236 = vmatpush2.bf16.msra.mxu0 0
    %237 = vmatprep.subr.bf16.mxu0 0
    %238 = vmatpush2.bf16.msra.mxu0 0
    %239 = vmatprep.subr.bf16.mxu0 0
    %240 = vmatpush2.bf16.msra.mxu0 0
    %241 = vmatprep.subr.bf16.mxu0 0
    %242 = vmatpush2.bf16.msra.mxu0 0
    %243 = vmatprep.subr.bf16.mxu0 0
    %244 = vmatpush2.bf16.msra.mxu0 0
    %245 = vmatprep.mubr.bf16.mxu0 0
    %246 = vmatmul.mubr.bf16.gmra.mxu0 %v211
    %v247 = vpop.f32.mrf.mxu0
    %v248 = vadd.f32 %v172, %v247
    %v249 = vpop.f32.mrf.mxu0
    %v250 = vadd.f32 %v176, %v249
    %v251 = vpop.f32.mrf.mxu0
    %v252 = vpop.f32.mrf.mxu0
    %253 = vdwg.mxu0
    %254 = vmatprep.subr.bf16.mxu0 0
    %255 = vmatpush1.bf16.msra.mxu0 0
    %256 = vmatprep.subr.bf16.mxu0 0
    %257 = vmatpush1.bf16.msra.mxu0 0
    %258 = vmatprep.subr.bf16.mxu0 0
    %259 = vmatpush1.bf16.msra.mxu0 0
    %260 = vmatprep.subr.bf16.mxu0 0
    %261 = vmatpush1.bf16.msra.mxu0 0
    %262 = vmatprep.subr.bf16.mxu0 0
    %263 = vmatpush1.bf16.msra.mxu0 0
    %264 = vmatprep.subr.bf16.mxu0 0
    %265 = vmatpush1.bf16.msra.mxu0 0
    %266 = vmatprep.subr.bf16.mxu0 0
    %267 = vmatpush1.bf16.msra.mxu0 0
    %268 = vmatprep.subr.bf16.mxu0 %v204
    %269 = vmatpush1.bf16.msra.mxu0 %v203
    %270 = vmatprep.subr.bf16.mxu0 0
    %271 = vmatpush2.bf16.msra.mxu0 0
    %272 = vmatprep.subr.bf16.mxu0 0
    %273 = vmatpush2.bf16.msra.mxu0 0
    %274 = vmatprep.subr.bf16.mxu0 0
    %275 = vmatpush2.bf16.msra.mxu0 0
    %276 = vmatprep.subr.bf16.mxu0 0
    %277 = vmatpush2.bf16.msra.mxu0 0
    %278 = vmatprep.subr.bf16.mxu0 0
    %279 = vmatpush2.bf16.msra.mxu0 0
    %280 = vmatprep.subr.bf16.mxu0 0
    %281 = vmatpush2.bf16.msra.mxu0 0
    %282 = vmatprep.subr.bf16.mxu0 0
    %283 = vmatpush2.bf16.msra.mxu0 0
    %284 = vmatprep.subr.bf16.mxu0 0
    %285 = vmatpush2.bf16.msra.mxu0 0
    %286 = vmatprep.mubr.bf16.mxu0 0
    %287 = vmatmul.mubr.bf16.gmra.mxu0 %v211
    %v288 = vpop.f32.mrf.mxu0
    %v289 = vadd.f32 %v180, %v288
    %v290 = vpop.f32.mrf.mxu0
    %v291 = vadd.f32 %v184, %v290
    %v292 = vpop.f32.mrf.mxu0
    %v293 = vpop.f32.mrf.mxu0
    %294 = vdwg.mxu0
    %v295 = vmax.f32 %v248, 0.0
    %v296 = vmax.f32 %v250, 0.0
    %v297 = vmax.f32 %v289, 0.0
    %v298 = vmax.f32 %v291, 0.0
    %v299 = vpack.c.bf16 %v295, %v295
    %v300 = vpack.c.bf16 %v296, %v296
    %v301 = vpack.c.bf16 %v297, %v297
    %v302 = vpack.c.bf16 %v298, %v298
    %v303 = vld [vmem:[#allocation7] sm:$0xff]
    %v304 = vld [vmem:[#allocation7 + $0x8] sm:$0xf]
    %v305 = vld [vmem:[#allocation7 + $0xc] sm:$0xff]
    %v306 = vld [vmem:[#allocation7 + $0x14] sm:$0xf]
    %v307 = vld [vmem:[#allocation7 + $0x18] sm:$0xff]
    %v308 = vld [vmem:[#allocation7 + $0x20] sm:$0xf]
    %v309 = vld [vmem:[#allocation7 + $0x24] sm:$0xff]
    %v310 = vld [vmem:[#allocation7 + $0x2c] sm:$0xf]
    %v311 = vld [vmem:[#allocation7 + $0x30] sm:$0xff]
    %v312 = vld [vmem:[#allocation7 + $0x38] sm:$0xf]
    %v313 = vld [vmem:[#allocation7 + $0x3c] sm:$0xff]
    %v314 = vld [vmem:[#allocation7 + $0x44] sm:$0xf]
    %v315 = vld [vmem:[#allocation7 + $0x48] sm:$0xff]
    %v316 = vld [vmem:[#allocation7 + $0x50] sm:$0xf]
    %v317 = vld [vmem:[#allocation7 + $0x54] sm:$0xff]
    %v318 = vld [vmem:[#allocation7 + $0x5c] sm:$0xf]
    %v319 = vld [vmem:[#allocation7 + $0x60] sm:$0xff]
    %v320 = vld [vmem:[#allocation7 + $0x68] sm:$0xf]
    %v321 = vld [vmem:[#allocation7 + $0x6c] sm:$0xff]
    %v322 = vld [vmem:[#allocation7 + $0x74] sm:$0xf]
    %v323 = vld [vmem:[#allocation7 + $0x78] sm:$0xff]
    %v324 = vld [vmem:[#allocation7 + $0x80] sm:$0xf]
    %v325 = vld [vmem:[#allocation7 + $0x84] sm:$0xff]
    %v326 = vld [vmem:[#allocation7 + $0x8c] sm:$0xf]
    %v327 = vld [vmem:[#allocation7 + $0x90] sm:$0xff]
    %v328 = vld [vmem:[#allocation7 + $0x98] sm:$0xf]
    %v329 = vld [vmem:[#allocation7 + $0x9c] sm:$0xff]
    %v330 = vld [vmem:[#allocation7 + $0xa4] sm:$0xf]
    %v331 = vld [vmem:[#allocation7 + $0xa8] sm:$0xff]
    %v332 = vld [vmem:[#allocation7 + $0xb0] sm:$0xf]
    %v333 = vld [vmem:[#allocation7 + $0xb4] sm:$0xff]
    %v334 = vld [vmem:[#allocation7 + $0xbc] sm:$0xf]
    %v335 = vld [vmem:[#allocation7 + $0xc0] sm:$0xff]
    %v336 = vld [vmem:[#allocation7 + $0xc8] sm:$0xf]
    %v337 = vld [vmem:[#allocation7 + $0xcc] sm:$0xff]
    %v338 = vld [vmem:[#allocation7 + $0xd4] sm:$0xf]
    %v339 = vld [vmem:[#allocation7 + $0xd8] sm:$0xff]
    %v340 = vld [vmem:[#allocation7 + $0xe0] sm:$0xf]
    %v341 = vld [vmem:[#allocation7 + $0xe4] sm:$0xff]
    %v342 = vld [vmem:[#allocation7 + $0xec] sm:$0xf]
    %v343 = vld [vmem:[#allocation7 + $0xf0] sm:$0xff]
    %v344 = vld [vmem:[#allocation7 + $0xf8] sm:$0xf]
    %v345 = vld [vmem:[#allocation7 + $0xfc] sm:$0xff]
    %v346 = vld [vmem:[#allocation7 + $0x104] sm:$0xf]
    %v347 = vld [vmem:[#allocation7 + $0x108] sm:$0xff]
    %v348 = vld [vmem:[#allocation7 + $0x110] sm:$0xf]
    %v349 = vld [vmem:[#allocation7 + $0x114] sm:$0xff]
    %v350 = vld [vmem:[#allocation7 + $0x11c] sm:$0xf]
    %v351 = vld [vmem:[#allocation7 + $0x120] sm:$0xff]
    %v352 = vld [vmem:[#allocation7 + $0x128] sm:$0xf]
    %v353 = vld [vmem:[#allocation7 + $0x12c] sm:$0xff]
    %v354 = vld [vmem:[#allocation7 + $0x134] sm:$0xf]
    %v355 = vld [vmem:[#allocation7 + $0x138] sm:$0xff]
    %v356 = vld [vmem:[#allocation7 + $0x140] sm:$0xf]
    %v357 = vld [vmem:[#allocation7 + $0x144] sm:$0xff]
    %v358 = vld [vmem:[#allocation7 + $0x14c] sm:$0xf]
    %v359 = vld [vmem:[#allocation7 + $0x150] sm:$0xff]
    %v360 = vld [vmem:[#allocation7 + $0x158] sm:$0xf]
    %v361 = vld [vmem:[#allocation7 + $0x15c] sm:$0xff]
    %v362 = vld [vmem:[#allocation7 + $0x164] sm:$0xf]
    %v363 = vld [vmem:[#allocation7 + $0x168] sm:$0xff]
    %v364 = vld [vmem:[#allocation7 + $0x170] sm:$0xf]
    %v365 = vld [vmem:[#allocation7 + $0x174] sm:$0xff]
    %v366 = vld [vmem:[#allocation7 + $0x17c] sm:$0xf]
    %v367 = vld [vmem:[#allocation7 + $0x180] sm:$0xff]
    %v368 = vld [vmem:[#allocation7 + $0x188] sm:$0xf]
    %v369 = vld [vmem:[#allocation7 + $0x18c] sm:$0xff]
    %v370 = vld [vmem:[#allocation7 + $0x194] sm:$0xf]
    %v371 = vld [vmem:[#allocation7 + $0x198] sm:$0xff]
    %v372 = vld [vmem:[#allocation7 + $0x1a0] sm:$0xf]
    %v373 = vld [vmem:[#allocation7 + $0x1a4] sm:$0xff]
    %v374 = vld [vmem:[#allocation7 + $0x1ac] sm:$0xf]
    %v375 = vld [vmem:[#allocation7 + $0x1b0] sm:$0xff]
    %v376 = vld [vmem:[#allocation7 + $0x1b8] sm:$0xf]
    %v377 = vld [vmem:[#allocation7 + $0x1bc] sm:$0xff]
    %v378 = vld [vmem:[#allocation7 + $0x1c4] sm:$0xf]
    %v379 = vld [vmem:[#allocation7 + $0x1c8] sm:$0xff]
    %v380 = vld [vmem:[#allocation7 + $0x1d0] sm:$0xf]
    %v381 = vld [vmem:[#allocation7 + $0x1d4] sm:$0xff]
    %v382 = vld [vmem:[#allocation7 + $0x1dc] sm:$0xf]
    %v383 = vld [vmem:[#allocation7 + $0x1e0] sm:$0xff]
    %v384 = vld [vmem:[#allocation7 + $0x1e8] sm:$0xf]
    %v385 = vld [vmem:[#allocation7 + $0x1ec] sm:$0xff]
    %v386 = vld [vmem:[#allocation7 + $0x1f4] sm:$0xf]
    %v387 = vld [vmem:[#allocation7 + $0x1f8] sm:$0xff]
    %v388 = vld [vmem:[#allocation7 + $0x200] sm:$0xf]
    %v389 = vld [vmem:[#allocation7 + $0x204] sm:$0xff]
    %v390 = vld [vmem:[#allocation7 + $0x20c] sm:$0xf]
    %v391 = vld [vmem:[#allocation7 + $0x210] sm:$0xff]
    %v392 = vld [vmem:[#allocation7 + $0x218] sm:$0xf]
    %v393 = vld [vmem:[#allocation7 + $0x21c] sm:$0xff]
    %v394 = vld [vmem:[#allocation7 + $0x224] sm:$0xf]
    %v395 = vld [vmem:[#allocation7 + $0x228] sm:$0xff]
    %v396 = vld [vmem:[#allocation7 + $0x230] sm:$0xf]
    %v397 = vld [vmem:[#allocation7 + $0x234] sm:$0xff]
    %v398 = vld [vmem:[#allocation7 + $0x23c] sm:$0xf]
    %v399 = vld [vmem:[#allocation7 + $0x240] sm:$0xff]
    %v400 = vld [vmem:[#allocation7 + $0x248] sm:$0xf]
    %v401 = vld [vmem:[#allocation7 + $0x24c] sm:$0xff]
    %v402 = vld [vmem:[#allocation7 + $0x254] sm:$0xf]
    %v403 = vld [vmem:[#allocation7 + $0x258] sm:$0xff]
    %v404 = vld [vmem:[#allocation7 + $0x260] sm:$0xf]
    %v405 = vld [vmem:[#allocation7 + $0x264] sm:$0xff]
    %v406 = vld [vmem:[#allocation7 + $0x26c] sm:$0xf]
    %v407 = vld [vmem:[#allocation7 + $0x270] sm:$0xff]
    %v408 = vld [vmem:[#allocation7 + $0x278] sm:$0xf]
    %v409 = vld [vmem:[#allocation7 + $0x27c] sm:$0xff]
    %v410 = vld [vmem:[#allocation7 + $0x284] sm:$0xf]
    %v411 = vld [vmem:[#allocation7 + $0x288] sm:$0xff]
    %v412 = vld [vmem:[#allocation7 + $0x290] sm:$0xf]
    %v413 = vld [vmem:[#allocation7 + $0x294] sm:$0xff]
    %v414 = vld [vmem:[#allocation7 + $0x29c] sm:$0xf]
    %v415 = vld [vmem:[#allocation7 + $0x2a0] sm:$0xff]
    %v416 = vld [vmem:[#allocation7 + $0x2a8] sm:$0xf]
    %v417 = vld [vmem:[#allocation7 + $0x2ac] sm:$0xff]
    %v418 = vld [vmem:[#allocation7 + $0x2b4] sm:$0xf]
    %v419 = vld [vmem:[#allocation7 + $0x2b8] sm:$0xff]
    %v420 = vld [vmem:[#allocation7 + $0x2c0] sm:$0xf]
    %v421 = vld [vmem:[#allocation7 + $0x2c4] sm:$0xff]
    %v422 = vld [vmem:[#allocation7 + $0x2cc] sm:$0xf]
    %v423 = vld [vmem:[#allocation7 + $0x2d0] sm:$0xff]
    %v424 = vld [vmem:[#allocation7 + $0x2d8] sm:$0xf]
    %v425 = vld [vmem:[#allocation7 + $0x2dc] sm:$0xff]
    %v426 = vld [vmem:[#allocation7 + $0x2e4] sm:$0xf]
    %v427 = vld [vmem:[#allocation7 + $0x2e8] sm:$0xff]
    %v428 = vld [vmem:[#allocation7 + $0x2f0] sm:$0xf]
    %v429 = vld [vmem:[#allocation7 + $0x2f4] sm:$0xff]
    %v430 = vld [vmem:[#allocation7 + $0x2fc] sm:$0xf]
    %v431 = vld [vmem:[#allocation15 + $0x4] sm:$0x7]
    %v433 = vlaneseq
    %v434 = vshrl.u32 %v433, 7
    %v435 = vsub.s32 0, %v434
    %v436 = vrot.slane %v431, %v435
    %v437 = vlaneseq
    %v438 = vshrl.u32 %v437, 7
    %v439 = vsub.s32 1, %v438
    %v440 = vrot.slane %v431, %v439
    %v441 = vlaneseq
    %v442 = vshrl.u32 %v441, 7
    %v443 = vsub.s32 2, %v442
    %v444 = vrot.slane %v431, %v443
    %v576 = vunpack.c.l.b16 %v303
    %v577 = vunpack.c.h.b16 %v303
    %v578 = vunpack.c.l.b16 %v304
    %v579 = vunpack.c.l.b16 %v305
    %v580 = vunpack.c.h.b16 %v305
    %v581 = vunpack.c.l.b16 %v306
    %v582 = vunpack.c.l.b16 %v307
    %v583 = vunpack.c.h.b16 %v307
    %v584 = vunpack.c.l.b16 %v308
    %v585 = vunpack.c.l.b16 %v309
    %v586 = vunpack.c.h.b16 %v309
    %v587 = vunpack.c.l.b16 %v310
    %v588 = vunpack.c.l.b16 %v311
    %v589 = vunpack.c.h.b16 %v311
    %v590 = vunpack.c.l.b16 %v312
    %v591 = vunpack.c.l.b16 %v313
    %v592 = vunpack.c.h.b16 %v313
    %v593 = vunpack.c.l.b16 %v314
    %v594 = vunpack.c.l.b16 %v315
    %v595 = vunpack.c.h.b16 %v315
    %v596 = vunpack.c.l.b16 %v316
    %v597 = vunpack.c.l.b16 %v317
    %v598 = vunpack.c.h.b16 %v317
    %v599 = vunpack.c.l.b16 %v318
    %v600 = vunpack.c.l.b16 %v319
    %v601 = vunpack.c.h.b16 %v319
    %v602 = vunpack.c.l.b16 %v320
    %v603 = vunpack.c.l.b16 %v321
    %v604 = vunpack.c.h.b16 %v321
    %v605 = vunpack.c.l.b16 %v322
    %v606 = vunpack.c.l.b16 %v323
    %v607 = vunpack.c.h.b16 %v323
    %v608 = vunpack.c.l.b16 %v324
    %v609 = vunpack.c.l.b16 %v325
    %v610 = vunpack.c.h.b16 %v325
    %v611 = vunpack.c.l.b16 %v326
    %v612 = vunpack.c.l.b16 %v327
    %v613 = vunpack.c.h.b16 %v327
    %v614 = vunpack.c.l.b16 %v328
    %v615 = vunpack.c.l.b16 %v329
    %v616 = vunpack.c.h.b16 %v329
    %v617 = vunpack.c.l.b16 %v330
    %v618 = vunpack.c.l.b16 %v331
    %v619 = vunpack.c.h.b16 %v331
    %v620 = vunpack.c.l.b16 %v332
    %v621 = vunpack.c.l.b16 %v333
    %v622 = vunpack.c.h.b16 %v333
    %v623 = vunpack.c.l.b16 %v334
    %v624 = vunpack.c.l.b16 %v335
    %v625 = vunpack.c.h.b16 %v335
    %v626 = vunpack.c.l.b16 %v336
    %v627 = vunpack.c.l.b16 %v337
    %v628 = vunpack.c.h.b16 %v337
    %v629 = vunpack.c.l.b16 %v338
    %v630 = vunpack.c.l.b16 %v339
    %v631 = vunpack.c.h.b16 %v339
    %v632 = vunpack.c.l.b16 %v340
    %v633 = vunpack.c.l.b16 %v341
    %v634 = vunpack.c.h.b16 %v341
    %v635 = vunpack.c.l.b16 %v342
    %v636 = vunpack.c.l.b16 %v343
    %v637 = vunpack.c.h.b16 %v343
    %v638 = vunpack.c.l.b16 %v344
    %v639 = vunpack.c.l.b16 %v345
    %v640 = vunpack.c.h.b16 %v345
    %v641 = vunpack.c.l.b16 %v346
    %v642 = vunpack.c.l.b16 %v347
    %v643 = vunpack.c.h.b16 %v347
    %v644 = vunpack.c.l.b16 %v348
    %v645 = vunpack.c.l.b16 %v349
    %v646 = vunpack.c.h.b16 %v349
    %v647 = vunpack.c.l.b16 %v350
    %v648 = vunpack.c.l.b16 %v351
    %v649 = vunpack.c.h.b16 %v351
    %v650 = vunpack.c.l.b16 %v352
    %v651 = vunpack.c.l.b16 %v353
    %v652 = vunpack.c.h.b16 %v353
    %v653 = vunpack.c.l.b16 %v354
    %v654 = vunpack.c.l.b16 %v355
    %v655 = vunpack.c.h.b16 %v355
    %v656 = vunpack.c.l.b16 %v356
    %v657 = vunpack.c.l.b16 %v357
    %v658 = vunpack.c.h.b16 %v357
    %v659 = vunpack.c.l.b16 %v358
    %v660 = vunpack.c.l.b16 %v359
    %v661 = vunpack.c.h.b16 %v359
    %v662 = vunpack.c.l.b16 %v360
    %v663 = vunpack.c.l.b16 %v361
    %v664 = vunpack.c.h.b16 %v361
    %v665 = vunpack.c.l.b16 %v362
    %v666 = vunpack.c.l.b16 %v363
    %v667 = vunpack.c.h.b16 %v363
    %v668 = vunpack.c.l.b16 %v364
    %v669 = vunpack.c.l.b16 %v365
    %v670 = vunpack.c.h.b16 %v365
    %v671 = vunpack.c.l.b16 %v366
    %v672 = vunpack.c.l.b16 %v367
    %v673 = vunpack.c.h.b16 %v367
    %v674 = vunpack.c.l.b16 %v368
    %v675 = vunpack.c.l.b16 %v369
    %v676 = vunpack.c.h.b16 %v369
    %v677 = vunpack.c.l.b16 %v370
    %v678 = vunpack.c.l.b16 %v371
    %v679 = vunpack.c.h.b16 %v371
    %v680 = vunpack.c.l.b16 %v372
    %v681 = vunpack.c.l.b16 %v373
    %v682 = vunpack.c.h.b16 %v373
    %v683 = vunpack.c.l.b16 %v374
    %v684 = vunpack.c.l.b16 %v375
    %v685 = vunpack.c.h.b16 %v375
    %v686 = vunpack.c.l.b16 %v376
    %v687 = vunpack.c.l.b16 %v377
    %v688 = vunpack.c.h.b16 %v377
    %v689 = vunpack.c.l.b16 %v378
    %v690 = vunpack.c.l.b16 %v379
    %v691 = vunpack.c.h.b16 %v379
    %v692 = vunpack.c.l.b16 %v380
    %v693 = vunpack.c.l.b16 %v381
    %v694 = vunpack.c.h.b16 %v381
    %v695 = vunpack.c.l.b16 %v382
    %v696 = vunpack.c.l.b16 %v383
    %v697 = vunpack.c.h.b16 %v383
    %v698 = vunpack.c.l.b16 %v384
    %v699 = vunpack.c.l.b16 %v385
    %v700 = vunpack.c.h.b16 %v385
    %v701 = vunpack.c.l.b16 %v386
    %v702 = vunpack.c.l.b16 %v387
    %v703 = vunpack.c.h.b16 %v387
    %v704 = vunpack.c.l.b16 %v388
    %v705 = vunpack.c.l.b16 %v389
    %v706 = vunpack.c.h.b16 %v389
    %v707 = vunpack.c.l.b16 %v390
    %v708 = vunpack.c.l.b16 %v391
    %v709 = vunpack.c.h.b16 %v391
    %v710 = vunpack.c.l.b16 %v392
    %v711 = vunpack.c.l.b16 %v393
    %v712 = vunpack.c.h.b16 %v393
    %v713 = vunpack.c.l.b16 %v394
    %v714 = vunpack.c.l.b16 %v395
    %v715 = vunpack.c.h.b16 %v395
    %v716 = vunpack.c.l.b16 %v396
    %v717 = vunpack.c.l.b16 %v397
    %v718 = vunpack.c.h.b16 %v397
    %v719 = vunpack.c.l.b16 %v398
    %v720 = vunpack.c.l.b16 %v399
    %v721 = vunpack.c.h.b16 %v399
    %v722 = vunpack.c.l.b16 %v400
    %v723 = vunpack.c.l.b16 %v401
    %v724 = vunpack.c.h.b16 %v401
    %v725 = vunpack.c.l.b16 %v402
    %v726 = vunpack.c.l.b16 %v403
    %v727 = vunpack.c.h.b16 %v403
    %v728 = vunpack.c.l.b16 %v404
    %v729 = vunpack.c.l.b16 %v405
    %v730 = vunpack.c.h.b16 %v405
    %v731 = vunpack.c.l.b16 %v406
    %v732 = vunpack.c.l.b16 %v407
    %v733 = vunpack.c.h.b16 %v407
    %v734 = vunpack.c.l.b16 %v408
    %v735 = vunpack.c.l.b16 %v409
    %v736 = vunpack.c.h.b16 %v409
    %v737 = vunpack.c.l.b16 %v410
    %v738 = vunpack.c.l.b16 %v411
    %v739 = vunpack.c.h.b16 %v411
    %v740 = vunpack.c.l.b16 %v412
    %v741 = vunpack.c.l.b16 %v413
    %v742 = vunpack.c.h.b16 %v413
    %v743 = vunpack.c.l.b16 %v414
    %v744 = vunpack.c.l.b16 %v415
    %v745 = vunpack.c.h.b16 %v415
    %v746 = vunpack.c.l.b16 %v416
    %v747 = vunpack.c.l.b16 %v417
    %v748 = vunpack.c.h.b16 %v417
    %v749 = vunpack.c.l.b16 %v418
    %v750 = vunpack.c.l.b16 %v419
    %v751 = vunpack.c.h.b16 %v419
    %v752 = vunpack.c.l.b16 %v420
    %v753 = vunpack.c.l.b16 %v421
    %v754 = vunpack.c.h.b16 %v421
    %v755 = vunpack.c.l.b16 %v422
    %v756 = vunpack.c.l.b16 %v423
    %v757 = vunpack.c.h.b16 %v423
    %v758 = vunpack.c.l.b16 %v424
    %v759 = vunpack.c.l.b16 %v425
    %v760 = vunpack.c.h.b16 %v425
    %v761 = vunpack.c.l.b16 %v426
    %v762 = vunpack.c.l.b16 %v427
    %v763 = vunpack.c.h.b16 %v427
    %v764 = vunpack.c.l.b16 %v428
    %v765 = vunpack.c.l.b16 %v429
    %v766 = vunpack.c.h.b16 %v429
    %v767 = vunpack.c.l.b16 %v430
    %v768 = vpack.c.b16 %v579, %v576
    %v769 = vpack.c.b16 %v580, %v577
    %v770 = vpack.c.b16 %v581, %v578
    %v771 = vpack.c.b16 %v585, %v582
    %v772 = vpack.c.b16 %v586, %v583
    %v773 = vpack.c.b16 %v587, %v584
    %v774 = vpack.c.b16 %v591, %v588
    %v775 = vpack.c.b16 %v592, %v589
    %v776 = vpack.c.b16 %v593, %v590
    %v777 = vpack.c.b16 %v597, %v594
    %v778 = vpack.c.b16 %v598, %v595
    %v779 = vpack.c.b16 %v599, %v596
    %v780 = vpack.c.b16 %v603, %v600
    %v781 = vpack.c.b16 %v604, %v601
    %v782 = vpack.c.b16 %v605, %v602
    %v783 = vpack.c.b16 %v609, %v606
    %v784 = vpack.c.b16 %v610, %v607
    %v785 = vpack.c.b16 %v611, %v608
    %v786 = vpack.c.b16 %v615, %v612
    %v787 = vpack.c.b16 %v616, %v613
    %v788 = vpack.c.b16 %v617, %v614
    %v789 = vpack.c.b16 %v621, %v618
    %v790 = vpack.c.b16 %v622, %v619
    %v791 = vpack.c.b16 %v623, %v620
    %v792 = vpack.c.b16 %v627, %v624
    %v793 = vpack.c.b16 %v628, %v625
    %v794 = vpack.c.b16 %v629, %v626
    %v795 = vpack.c.b16 %v633, %v630
    %v796 = vpack.c.b16 %v634, %v631
    %v797 = vpack.c.b16 %v635, %v632
    %v798 = vpack.c.b16 %v639, %v636
    %v799 = vpack.c.b16 %v640, %v637
    %v800 = vpack.c.b16 %v641, %v638
    %v801 = vpack.c.b16 %v645, %v642
    %v802 = vpack.c.b16 %v646, %v643
    %v803 = vpack.c.b16 %v647, %v644
    %v804 = vpack.c.b16 %v651, %v648
    %v805 = vpack.c.b16 %v652, %v649
    %v806 = vpack.c.b16 %v653, %v650
    %v807 = vpack.c.b16 %v657, %v654
    %v808 = vpack.c.b16 %v658, %v655
    %v809 = vpack.c.b16 %v659, %v656
    %v810 = vpack.c.b16 %v663, %v660
    %v811 = vpack.c.b16 %v664, %v661
    %v812 = vpack.c.b16 %v665, %v662
    %v813 = vpack.c.b16 %v669, %v666
    %v814 = vpack.c.b16 %v670, %v667
    %v815 = vpack.c.b16 %v671, %v668
    %v816 = vpack.c.b16 %v675, %v672
    %v817 = vpack.c.b16 %v676, %v673
    %v818 = vpack.c.b16 %v677, %v674
    %v819 = vpack.c.b16 %v681, %v678
    %v820 = vpack.c.b16 %v682, %v679
    %v821 = vpack.c.b16 %v683, %v680
    %v822 = vpack.c.b16 %v687, %v684
    %v823 = vpack.c.b16 %v688, %v685
    %v824 = vpack.c.b16 %v689, %v686
    %v825 = vpack.c.b16 %v693, %v690
    %v826 = vpack.c.b16 %v694, %v691
    %v827 = vpack.c.b16 %v695, %v692
    %v828 = vpack.c.b16 %v699, %v696
    %v829 = vpack.c.b16 %v700, %v697
    %v830 = vpack.c.b16 %v701, %v698
    %v831 = vpack.c.b16 %v705, %v702
    %v832 = vpack.c.b16 %v706, %v703
    %v833 = vpack.c.b16 %v707, %v704
    %v834 = vpack.c.b16 %v711, %v708
    %v835 = vpack.c.b16 %v712, %v709
    %v836 = vpack.c.b16 %v713, %v710
    %v837 = vpack.c.b16 %v717, %v714
    %v838 = vpack.c.b16 %v718, %v715
    %v839 = vpack.c.b16 %v719, %v716
    %v840 = vpack.c.b16 %v723, %v720
    %v841 = vpack.c.b16 %v724, %v721
    %v842 = vpack.c.b16 %v725, %v722
    %v843 = vpack.c.b16 %v729, %v726
    %v844 = vpack.c.b16 %v730, %v727
    %v845 = vpack.c.b16 %v731, %v728
    %v846 = vpack.c.b16 %v735, %v732
    %v847 = vpack.c.b16 %v736, %v733
    %v848 = vpack.c.b16 %v737, %v734
    %v849 = vpack.c.b16 %v741, %v738
    %v850 = vpack.c.b16 %v742, %v739
    %v851 = vpack.c.b16 %v743, %v740
    %v852 = vpack.c.b16 %v747, %v744
    %v853 = vpack.c.b16 %v748, %v745
    %v854 = vpack.c.b16 %v749, %v746
    %v855 = vpack.c.b16 %v753, %v750
    %v856 = vpack.c.b16 %v754, %v751
    %v857 = vpack.c.b16 %v755, %v752
    %v858 = vpack.c.b16 %v759, %v756
    %v859 = vpack.c.b16 %v760, %v757
    %v860 = vpack.c.b16 %v761, %v758
    %v861 = vpack.c.b16 %v765, %v762
    %v862 = vpack.c.b16 %v766, %v763
    %v863 = vpack.c.b16 %v767, %v764
    %960 = vmatprep.subr.bf16.mxu0 %v790
    %961 = vmatpush1.bf16.msra.mxu0 %v789
    %962 = vmatprep.subr.bf16.mxu0 %v787
    %963 = vmatpush1.bf16.msra.mxu0 %v786
    %964 = vmatprep.subr.bf16.mxu0 %v784
    %965 = vmatpush1.bf16.msra.mxu0 %v783
    %966 = vmatprep.subr.bf16.mxu0 %v781
    %967 = vmatpush1.bf16.msra.mxu0 %v780
    %968 = vmatprep.subr.bf16.mxu0 %v778
    %969 = vmatpush1.bf16.msra.mxu0 %v777
    %970 = vmatprep.subr.bf16.mxu0 %v775
    %971 = vmatpush1.bf16.msra.mxu0 %v774
    %972 = vmatprep.subr.bf16.mxu0 %v772
    %973 = vmatpush1.bf16.msra.mxu0 %v771
    %974 = vmatprep.subr.bf16.mxu0 %v769
    %975 = vmatpush1.bf16.msra.mxu0 %v768
    %976 = vmatprep.subr.bf16.mxu0 %v814
    %977 = vmatpush2.bf16.msra.mxu0 %v813
    %978 = vmatprep.subr.bf16.mxu0 %v811
    %979 = vmatpush2.bf16.msra.mxu0 %v810
    %980 = vmatprep.subr.bf16.mxu0 %v808
    %981 = vmatpush2.bf16.msra.mxu0 %v807
    %982 = vmatprep.subr.bf16.mxu0 %v805
    %983 = vmatpush2.bf16.msra.mxu0 %v804
    %984 = vmatprep.subr.bf16.mxu0 %v802
    %985 = vmatpush2.bf16.msra.mxu0 %v801
    %986 = vmatprep.subr.bf16.mxu0 %v799
    %987 = vmatpush2.bf16.msra.mxu0 %v798
    %988 = vmatprep.subr.bf16.mxu0 %v796
    %989 = vmatpush2.bf16.msra.mxu0 %v795
    %990 = vmatprep.subr.bf16.mxu0 %v793
    %991 = vmatpush2.bf16.msra.mxu0 %v792
    %992 = vmatprep.mubr.bf16.mxu0 %v300
    %993 = vmatmul.mubr.bf16.gmra.mxu0 %v299
    %v994 = vpop.f32.mrf.mxu0
    %v995 = vadd.f32 %v436, %v994
    %v996 = vpop.f32.mrf.mxu0
    %v997 = vadd.f32 %v440, %v996
    %v998 = vpop.f32.mrf.mxu0
    %v999 = vpop.f32.mrf.mxu0
    %1000 = vdwg.mxu0
    %1001 = vmatprep.subr.bf16.mxu0 %v838
    %1002 = vmatpush1.bf16.msra.mxu0 %v837
    %1003 = vmatprep.subr.bf16.mxu0 %v835
    %1004 = vmatpush1.bf16.msra.mxu0 %v834
    %1005 = vmatprep.subr.bf16.mxu0 %v832
    %1006 = vmatpush1.bf16.msra.mxu0 %v831
    %1007 = vmatprep.subr.bf16.mxu0 %v829
    %1008 = vmatpush1.bf16.msra.mxu0 %v828
    %1009 = vmatprep.subr.bf16.mxu0 %v826
    %1010 = vmatpush1.bf16.msra.mxu0 %v825
    %1011 = vmatprep.subr.bf16.mxu0 %v823
    %1012 = vmatpush1.bf16.msra.mxu0 %v822
    %1013 = vmatprep.subr.bf16.mxu0 %v820
    %1014 = vmatpush1.bf16.msra.mxu0 %v819
    %1015 = vmatprep.subr.bf16.mxu0 %v817
    %1016 = vmatpush1.bf16.msra.mxu0 %v816
    %1017 = vmatprep.subr.bf16.mxu0 %v862
    %1018 = vmatpush2.bf16.msra.mxu0 %v861
    %1019 = vmatprep.subr.bf16.mxu0 %v859
    %1020 = vmatpush2.bf16.msra.mxu0 %v858
    %1021 = vmatprep.subr.bf16.mxu0 %v856
    %1022 = vmatpush2.bf16.msra.mxu0 %v855
    %1023 = vmatprep.subr.bf16.mxu0 %v853
    %1024 = vmatpush2.bf16.msra.mxu0 %v852
    %1025 = vmatprep.subr.bf16.mxu0 %v850
    %1026 = vmatpush2.bf16.msra.mxu0 %v849
    %1027 = vmatprep.subr.bf16.mxu0 %v847
    %1028 = vmatpush2.bf16.msra.mxu0 %v846
    %1029 = vmatprep.subr.bf16.mxu0 %v844
    %1030 = vmatpush2.bf16.msra.mxu0 %v843
    %1031 = vmatprep.subr.bf16.mxu0 %v841
    %1032 = vmatpush2.bf16.msra.mxu0 %v840
    %1033 = vmatprep.mubr.bf16.mxu0 %v302
    %1034 = vmatmul.mubr.bf16.gmra.mxu0 %v301
    %v1035 = vpop.f32.mrf.mxu0
    %v1036 = vadd.f32 %v995, %v1035
    %v1037 = vpop.f32.mrf.mxu0
    %v1038 = vadd.f32 %v997, %v1037
    %v1039 = vpop.f32.mrf.mxu0
    %v1040 = vpop.f32.mrf.mxu0
    %1041 = vdwg.mxu0
    %1042 = vmatprep.subr.bf16.mxu0 0
    %1043 = vmatpush1.bf16.msra.mxu0 %v791
    %1044 = vmatprep.subr.bf16.mxu0 0
    %1045 = vmatpush1.bf16.msra.mxu0 %v788
    %1046 = vmatprep.subr.bf16.mxu0 0
    %1047 = vmatpush1.bf16.msra.mxu0 %v785
    %1048 = vmatprep.subr.bf16.mxu0 0
    %1049 = vmatpush1.bf16.msra.mxu0 %v782
    %1050 = vmatprep.subr.bf16.mxu0 0
    %1051 = vmatpush1.bf16.msra.mxu0 %v779
    %1052 = vmatprep.subr.bf16.mxu0 0
    %1053 = vmatpush1.bf16.msra.mxu0 %v776
    %1054 = vmatprep.subr.bf16.mxu0 0
    %1055 = vmatpush1.bf16.msra.mxu0 %v773
    %1056 = vmatprep.subr.bf16.mxu0 0
    %1057 = vmatpush1.bf16.msra.mxu0 %v770
    %1058 = vmatprep.subr.bf16.mxu0 0
    %1059 = vmatpush2.bf16.msra.mxu0 %v815
    %1060 = vmatprep.subr.bf16.mxu0 0
    %1061 = vmatpush2.bf16.msra.mxu0 %v812
    %1062 = vmatprep.subr.bf16.mxu0 0
    %1063 = vmatpush2.bf16.msra.mxu0 %v809
    %1064 = vmatprep.subr.bf16.mxu0 0
    %1065 = vmatpush2.bf16.msra.mxu0 %v806
    %1066 = vmatprep.subr.bf16.mxu0 0
    %1067 = vmatpush2.bf16.msra.mxu0 %v803
    %1068 = vmatprep.subr.bf16.mxu0 0
    %1069 = vmatpush2.bf16.msra.mxu0 %v800
    %1070 = vmatprep.subr.bf16.mxu0 0
    %1071 = vmatpush2.bf16.msra.mxu0 %v797
    %1072 = vmatprep.subr.bf16.mxu0 0
    %1073 = vmatpush2.bf16.msra.mxu0 %v794
    %1074 = vmatprep.mubr.bf16.mxu0 %v300
    %1075 = vmatmul.mubr.bf16.gmra.mxu0 %v299
    %v1076 = vpop.f32.mrf.mxu0
    %v1077 = vadd.f32 %v444, %v1076
    %v1078 = vpop.f32.mrf.mxu0
    %v1079 = vpop.f32.mrf.mxu0
    %v1080 = vpop.f32.mrf.mxu0
    %1081 = vdwg.mxu0
    %1082 = vmatprep.subr.bf16.mxu0 0
    %1083 = vmatpush1.bf16.msra.mxu0 %v839
    %1084 = vmatprep.subr.bf16.mxu0 0
    %1085 = vmatpush1.bf16.msra.mxu0 %v836
    %1086 = vmatprep.subr.bf16.mxu0 0
    %1087 = vmatpush1.bf16.msra.mxu0 %v833
    %1088 = vmatprep.subr.bf16.mxu0 0
    %1089 = vmatpush1.bf16.msra.mxu0 %v830
    %1090 = vmatprep.subr.bf16.mxu0 0
    %1091 = vmatpush1.bf16.msra.mxu0 %v827
    %1092 = vmatprep.subr.bf16.mxu0 0
    %1093 = vmatpush1.bf16.msra.mxu0 %v824
    %1094 = vmatprep.subr.bf16.mxu0 0
    %1095 = vmatpush1.bf16.msra.mxu0 %v821
    %1096 = vmatprep.subr.bf16.mxu0 0
    %1097 = vmatpush1.bf16.msra.mxu0 %v818
    %1098 = vmatprep.subr.bf16.mxu0 0
    %1099 = vmatpush2.bf16.msra.mxu0 %v863
    %1100 = vmatprep.subr.bf16.mxu0 0
    %1101 = vmatpush2.bf16.msra.mxu0 %v860
    %1102 = vmatprep.subr.bf16.mxu0 0
    %1103 = vmatpush2.bf16.msra.mxu0 %v857
    %1104 = vmatprep.subr.bf16.mxu0 0
    %1105 = vmatpush2.bf16.msra.mxu0 %v854
    %1106 = vmatprep.subr.bf16.mxu0 0
    %1107 = vmatpush2.bf16.msra.mxu0 %v851
    %1108 = vmatprep.subr.bf16.mxu0 0
    %1109 = vmatpush2.bf16.msra.mxu0 %v848
    %1110 = vmatprep.subr.bf16.mxu0 0
    %1111 = vmatpush2.bf16.msra.mxu0 %v845
    %1112 = vmatprep.subr.bf16.mxu0 0
    %1113 = vmatpush2.bf16.msra.mxu0 %v842
    %1114 = vmatprep.mubr.bf16.mxu0 %v302
    %1115 = vmatmul.mubr.bf16.gmra.mxu0 %v301
    %v1116 = vpop.f32.mrf.mxu0
    %v1117 = vadd.f32 %v1077, %v1116
    %v1118 = vpop.f32.mrf.mxu0
    %v1119 = vpop.f32.mrf.mxu0
    %v1120 = vpop.f32.mrf.mxu0
    %1121 = vdwg.mxu0
    %v1122 = vmax.f32 %v1036, 0.0
    %v1123 = vmax.f32 %v1038, 0.0
    %v1124 = vmax.f32 %v1117, 0.0
    %v1125 = vpack.c.bf16 %v1122, %v1122
    %v1126 = vpack.c.bf16 %v1123, %v1123
    %v1127 = vpack.c.bf16 %v1124, %v1124
    %v1128 = vld [vmem:[%s3] sm:$0xf]
    %v1129 = vld [vmem:[%s3 + $0x4] sm:$0xf]
    %v1130 = vld [vmem:[%s3 + $0x8] sm:$0xf]
    %v1131 = vld [vmem:[%s3 + $0xc] sm:$0xf]
    %v1132 = vld [vmem:[%s3 + $0x10] sm:$0xf]
    %v1133 = vld [vmem:[%s3 + $0x14] sm:$0xf]
    %v1134 = vld [vmem:[%s3 + $0x18] sm:$0xf]
    %v1135 = vld [vmem:[%s3 + $0x1c] sm:$0xf]
    %v1136 = vld [vmem:[%s3 + $0x20] sm:$0xf]
    %v1137 = vld [vmem:[%s3 + $0x24] sm:$0xf]
    %v1138 = vld [vmem:[%s3 + $0x28] sm:$0xf]
    %v1139 = vld [vmem:[%s3 + $0x2c] sm:$0xf]
    %v1140 = vld [vmem:[%s3 + $0x30] sm:$0xf]
    %v1141 = vld [vmem:[%s3 + $0x34] sm:$0xf]
    %v1142 = vld [vmem:[%s3 + $0x38] sm:$0xf]
    %v1143 = vld [vmem:[%s3 + $0x3c] sm:$0xf]
    %v1144 = vld [vmem:[%s3 + $0x40] sm:$0xf]
    %v1145 = vld [vmem:[%s3 + $0x44] sm:$0xf]
    %v1146 = vld [vmem:[%s3 + $0x48] sm:$0xf]
    %v1147 = vld [vmem:[%s3 + $0x4c] sm:$0xf]
    %v1148 = vld [vmem:[%s3 + $0x50] sm:$0xf]
    %v1149 = vld [vmem:[%s3 + $0x54] sm:$0xf]
    %v1150 = vld [vmem:[%s3 + $0x58] sm:$0xf]
    %v1151 = vld [vmem:[%s3 + $0x5c] sm:$0xf]
    %v1152 = vld [vmem:[%s3 + $0x60] sm:$0xf]
    %v1153 = vld [vmem:[%s3 + $0x64] sm:$0xf]
    %v1154 = vld [vmem:[%s3 + $0x68] sm:$0xf]
    %v1155 = vld [vmem:[%s3 + $0x6c] sm:$0xf]
    %v1156 = vld [vmem:[%s3 + $0x70] sm:$0xf]
    %v1157 = vld [vmem:[%s3 + $0x74] sm:$0xf]
    %v1158 = vld [vmem:[%s3 + $0x78] sm:$0xf]
    %v1159 = vld [vmem:[%s3 + $0x7c] sm:$0xf]
    %v1160 = vld [vmem:[%s3 + $0x80] sm:$0xf]
    %v1161 = vld [vmem:[%s3 + $0x84] sm:$0xf]
    %v1162 = vld [vmem:[%s3 + $0x88] sm:$0xf]
    %v1163 = vld [vmem:[%s3 + $0x8c] sm:$0xf]
    %v1164 = vld [vmem:[%s3 + $0x90] sm:$0xf]
    %v1165 = vld [vmem:[%s3 + $0x94] sm:$0xf]
    %v1166 = vld [vmem:[%s3 + $0x98] sm:$0xf]
    %v1167 = vld [vmem:[%s3 + $0x9c] sm:$0xf]
    %v1168 = vld [vmem:[%s3 + $0xa0] sm:$0xf]
    %v1169 = vld [vmem:[%s3 + $0xa4] sm:$0xf]
    %v1170 = vld [vmem:[%s3 + $0xa8] sm:$0xf]
    %v1171 = vld [vmem:[%s3 + $0xac] sm:$0xf]
    %v1172 = vld [vmem:[%s3 + $0xb0] sm:$0xf]
    %v1173 = vld [vmem:[%s3 + $0xb4] sm:$0xf]
    %v1174 = vld [vmem:[%s3 + $0xb8] sm:$0xf]
    %v1175 = vld [vmem:[%s3 + $0xbc] sm:$0xf]
    %v1176 = vld [vmem:[#allocation15 + $0x1a] sm:$0x1]
    %v1178 = vlaneseq
    %v1179 = vshrl.u32 %v1178, 7
    %v1180 = vsub.s32 0, %v1179
    %v1181 = vrot.slane %v1176, %v1180
    %v1231 = vunpack.c.l.b16 %v1128
    %v1232 = vunpack.c.l.b16 %v1129
    %v1233 = vunpack.c.l.b16 %v1130
    %v1234 = vunpack.c.l.b16 %v1131
    %v1235 = vunpack.c.l.b16 %v1132
    %v1236 = vunpack.c.l.b16 %v1133
    %v1237 = vunpack.c.l.b16 %v1134
    %v1238 = vunpack.c.l.b16 %v1135
    %v1239 = vunpack.c.l.b16 %v1136
    %v1240 = vunpack.c.l.b16 %v1137
    %v1241 = vunpack.c.l.b16 %v1138
    %v1242 = vunpack.c.l.b16 %v1139
    %v1243 = vunpack.c.l.b16 %v1140
    %v1244 = vunpack.c.l.b16 %v1141
    %v1245 = vunpack.c.l.b16 %v1142
    %v1246 = vunpack.c.l.b16 %v1143
    %v1247 = vunpack.c.l.b16 %v1144
    %v1248 = vunpack.c.l.b16 %v1145
    %v1249 = vunpack.c.l.b16 %v1146
    %v1250 = vunpack.c.l.b16 %v1147
    %v1251 = vunpack.c.l.b16 %v1148
    %v1252 = vunpack.c.l.b16 %v1149
    %v1253 = vunpack.c.l.b16 %v1150
    %v1254 = vunpack.c.l.b16 %v1151
    %v1255 = vunpack.c.l.b16 %v1152
    %v1256 = vunpack.c.l.b16 %v1153
    %v1257 = vunpack.c.l.b16 %v1154
    %v1258 = vunpack.c.l.b16 %v1155
    %v1259 = vunpack.c.l.b16 %v1156
    %v1260 = vunpack.c.l.b16 %v1157
    %v1261 = vunpack.c.l.b16 %v1158
    %v1262 = vunpack.c.l.b16 %v1159
    %v1263 = vunpack.c.l.b16 %v1160
    %v1264 = vunpack.c.l.b16 %v1161
    %v1265 = vunpack.c.l.b16 %v1162
    %v1266 = vunpack.c.l.b16 %v1163
    %v1267 = vunpack.c.l.b16 %v1164
    %v1268 = vunpack.c.l.b16 %v1165
    %v1269 = vunpack.c.l.b16 %v1166
    %v1270 = vunpack.c.l.b16 %v1167
    %v1271 = vunpack.c.l.b16 %v1168
    %v1272 = vunpack.c.l.b16 %v1169
    %v1273 = vunpack.c.l.b16 %v1170
    %v1274 = vunpack.c.l.b16 %v1171
    %v1275 = vunpack.c.l.b16 %v1172
    %v1276 = vunpack.c.l.b16 %v1173
    %v1277 = vunpack.c.l.b16 %v1174
    %v1278 = vunpack.c.l.b16 %v1175
    %v1279 = vpack.c.b16 %v1232, %v1231
    %v1280 = vpack.c.b16 %v1234, %v1233
    %v1281 = vpack.c.b16 %v1236, %v1235
    %v1282 = vpack.c.b16 %v1238, %v1237
    %v1283 = vpack.c.b16 %v1240, %v1239
    %v1284 = vpack.c.b16 %v1242, %v1241
    %v1285 = vpack.c.b16 %v1244, %v1243
    %v1286 = vpack.c.b16 %v1246, %v1245
    %v1287 = vpack.c.b16 %v1248, %v1247
    %v1288 = vpack.c.b16 %v1250, %v1249
    %v1289 = vpack.c.b16 %v1252, %v1251
    %v1290 = vpack.c.b16 %v1254, %v1253
    %v1291 = vpack.c.b16 %v1256, %v1255
    %v1292 = vpack.c.b16 %v1258, %v1257
    %v1293 = vpack.c.b16 %v1260, %v1259
    %v1294 = vpack.c.b16 %v1262, %v1261
    %v1295 = vpack.c.b16 %v1264, %v1263
    %v1296 = vpack.c.b16 %v1266, %v1265
    %v1297 = vpack.c.b16 %v1268, %v1267
    %v1298 = vpack.c.b16 %v1270, %v1269
    %v1299 = vpack.c.b16 %v1272, %v1271
    %v1300 = vpack.c.b16 %v1274, %v1273
    %v1301 = vpack.c.b16 %v1276, %v1275
    %v1302 = vpack.c.b16 %v1278, %v1277
    %1327 = vmatprep.subr.bf16.mxu0 0
    %1328 = vmatpush1.bf16.msra.mxu0 %v1286
    %1329 = vmatprep.subr.bf16.mxu0 0
    %1330 = vmatpush1.bf16.msra.mxu0 %v1285
    %1331 = vmatprep.subr.bf16.mxu0 0
    %1332 = vmatpush1.bf16.msra.mxu0 %v1284
    %1333 = vmatprep.subr.bf16.mxu0 0
    %1334 = vmatpush1.bf16.msra.mxu0 %v1283
    %1335 = vmatprep.subr.bf16.mxu0 0
    %1336 = vmatpush1.bf16.msra.mxu0 %v1282
    %1337 = vmatprep.subr.bf16.mxu0 0
    %1338 = vmatpush1.bf16.msra.mxu0 %v1281
    %1339 = vmatprep.subr.bf16.mxu0 0
    %1340 = vmatpush1.bf16.msra.mxu0 %v1280
    %1341 = vmatprep.subr.bf16.mxu0 0
    %1342 = vmatpush1.bf16.msra.mxu0 %v1279
    %1343 = vmatprep.subr.bf16.mxu0 0
    %1344 = vmatpush2.bf16.msra.mxu0 %v1294
    %1345 = vmatprep.subr.bf16.mxu0 0
    %1346 = vmatpush2.bf16.msra.mxu0 %v1293
    %1347 = vmatprep.subr.bf16.mxu0 0
    %1348 = vmatpush2.bf16.msra.mxu0 %v1292
    %1349 = vmatprep.subr.bf16.mxu0 0
    %1350 = vmatpush2.bf16.msra.mxu0 %v1291
    %1351 = vmatprep.subr.bf16.mxu0 0
    %1352 = vmatpush2.bf16.msra.mxu0 %v1290
    %1353 = vmatprep.subr.bf16.mxu0 0
    %1354 = vmatpush2.bf16.msra.mxu0 %v1289
    %1355 = vmatprep.subr.bf16.mxu0 0
    %1356 = vmatpush2.bf16.msra.mxu0 %v1288
    %1357 = vmatprep.subr.bf16.mxu0 0
    %1358 = vmatpush2.bf16.msra.mxu0 %v1287
    %1359 = vmatprep.mubr.bf16.mxu0 %v1126
    %1360 = vmatmul.mubr.bf16.gmra.mxu0 %v1125
    %v1361 = vpop.f32.mrf.mxu0
    %v1362 = vadd.f32 %v1181, %v1361
    %v1363 = vpop.f32.mrf.mxu0
    %v1364 = vpop.f32.mrf.mxu0
    %v1365 = vpop.f32.mrf.mxu0
    %1366 = vdwg.mxu0
    %1367 = vmatprep.subr.bf16.mxu0 0
    %1368 = vmatpush1.bf16.msra.mxu0 %v1302
    %1369 = vmatprep.subr.bf16.mxu0 0
    %1370 = vmatpush1.bf16.msra.mxu0 %v1301
    %1371 = vmatprep.subr.bf16.mxu0 0
    %1372 = vmatpush1.bf16.msra.mxu0 %v1300
    %1373 = vmatprep.subr.bf16.mxu0 0
    %1374 = vmatpush1.bf16.msra.mxu0 %v1299
    %1375 = vmatprep.subr.bf16.mxu0 0
    %1376 = vmatpush1.bf16.msra.mxu0 %v1298
    %1377 = vmatprep.subr.bf16.mxu0 0
    %1378 = vmatpush1.bf16.msra.mxu0 %v1297
    %1379 = vmatprep.subr.bf16.mxu0 0
    %1380 = vmatpush1.bf16.msra.mxu0 %v1296
    %1381 = vmatprep.subr.bf16.mxu0 0
    %1382 = vmatpush1.bf16.msra.mxu0 %v1295
    %1383 = vmatprep.subr.bf16.mxu0 0
    %1384 = vmatpush2.bf16.msra.mxu0 0
    %1385 = vmatprep.subr.bf16.mxu0 0
    %1386 = vmatpush2.bf16.msra.mxu0 0
    %1387 = vmatprep.subr.bf16.mxu0 0
    %1388 = vmatpush2.bf16.msra.mxu0 0
    %1389 = vmatprep.subr.bf16.mxu0 0
    %1390 = vmatpush2.bf16.msra.mxu0 0
    %1391 = vmatprep.subr.bf16.mxu0 0
    %1392 = vmatpush2.bf16.msra.mxu0 0
    %1393 = vmatprep.subr.bf16.mxu0 0
    %1394 = vmatpush2.bf16.msra.mxu0 0
    %1395 = vmatprep.subr.bf16.mxu0 0
    %1396 = vmatpush2.bf16.msra.mxu0 0
    %1397 = vmatprep.subr.bf16.mxu0 0
    %1398 = vmatpush2.bf16.msra.mxu0 0
    %1399 = vmatprep.mubr.bf16.mxu0 0
    %1400 = vmatmul.mubr.bf16.gmra.mxu0 %v1127
    %v1401 = vpop.f32.mrf.mxu0
    %v1402 = vadd.f32 %v1362, %v1401
    %v1403 = vpop.f32.mrf.mxu0
    %v1404 = vpop.f32.mrf.mxu0
    %v1405 = vpop.f32.mrf.mxu0
    %1406 = vdwg.mxu0
    %v1407 = vtanh.pop %v1402
    %v1408 = vmul.f32 %v1407, 2.0
    %v1409 = vpack.c.bf16 %v1408, %v1408
    %v1410 = vld [vmem:[#allocation9] sm:$0xff]
    %v1411 = vld [vmem:[#allocation9 + $0x8] sm:$0xff]
    %v1412 = vld [vmem:[#allocation9 + $0x10] sm:$0xff]
    %v1413 = vld [vmem:[#allocation9 + $0x18] sm:$0xff]
    %v1414 = vld [vmem:[#allocation9 + $0x20] sm:$0xff]
    %v1415 = vld [vmem:[#allocation9 + $0x28] sm:$0xff]
    %v1416 = vld [vmem:[#allocation10] sm:$0xff]
    %v1417 = vld [vmem:[#allocation10 + $0x8] sm:$0xff]
    %v1418 = vld [vmem:[#allocation10 + $0x10] sm:$0xff]
    %v1419 = vld [vmem:[#allocation10 + $0x18] sm:$0xff]
    %v1420 = vld [vmem:[#allocation10 + $0x20] sm:$0xff]
    %v1421 = vld [vmem:[#allocation10 + $0x28] sm:$0xff]
    %v1428 = vunpack.c.l.b16 %v1416
    %v1429 = vunpack.c.h.b16 %v1416
    %v1430 = vunpack.c.l.b16 %v1417
    %v1431 = vunpack.c.h.b16 %v1417
    %v1432 = vunpack.c.l.b16 %v1418
    %v1433 = vunpack.c.h.b16 %v1418
    %v1434 = vunpack.c.l.b16 %v1419
    %v1435 = vunpack.c.h.b16 %v1419
    %v1436 = vunpack.c.l.b16 %v1420
    %v1437 = vunpack.c.h.b16 %v1420
    %v1438 = vunpack.c.l.b16 %v1421
    %v1439 = vunpack.c.h.b16 %v1421
    %v1440 = vpack.c.b16 %v1434, %v1428
    %v1441 = vpack.c.b16 %v1435, %v1429
    %v1442 = vpack.c.b16 %v1436, %v1430
    %v1443 = vpack.c.b16 %v1437, %v1431
    %v1444 = vpack.c.b16 %v1438, %v1432
    %v1445 = vpack.c.b16 %v1439, %v1433
    %v1453 = vsel %vm209, %v1409, 0
    %1455 = vmatprep.subr.bf16.mxu0 0
    %1456 = vmatpush1.bf16.msra.mxu0 0
    %1457 = vmatprep.subr.bf16.mxu0 0
    %1458 = vmatpush1.bf16.msra.mxu0 0
    %1459 = vmatprep.subr.bf16.mxu0 0
    %1460 = vmatpush1.bf16.msra.mxu0 0
    %1461 = vmatprep.subr.bf16.mxu0 0
    %1462 = vmatpush1.bf16.msra.mxu0 0
    %1463 = vmatprep.subr.bf16.mxu0 0
    %1464 = vmatpush1.bf16.msra.mxu0 0
    %1465 = vmatprep.subr.bf16.mxu0 0
    %1466 = vmatpush1.bf16.msra.mxu0 0
    %1467 = vmatprep.subr.bf16.mxu0 0
    %1468 = vmatpush1.bf16.msra.mxu0 0
    %1469 = vmatprep.subr.bf16.mxu0 %v1441
    %1470 = vmatpush1.bf16.msra.mxu0 %v1440
    %1471 = vmatprep.subr.bf16.mxu0 0
    %1472 = vmatpush2.bf16.msra.mxu0 0
    %1473 = vmatprep.subr.bf16.mxu0 0
    %1474 = vmatpush2.bf16.msra.mxu0 0
    %1475 = vmatprep.subr.bf16.mxu0 0
    %1476 = vmatpush2.bf16.msra.mxu0 0
    %1477 = vmatprep.subr.bf16.mxu0 0
    %1478 = vmatpush2.bf16.msra.mxu0 0
    %1479 = vmatprep.subr.bf16.mxu0 0
    %1480 = vmatpush2.bf16.msra.mxu0 0
    %1481 = vmatprep.subr.bf16.mxu0 0
    %1482 = vmatpush2.bf16.msra.mxu0 0
    %1483 = vmatprep.subr.bf16.mxu0 0
    %1484 = vmatpush2.bf16.msra.mxu0 0
    %1485 = vmatprep.subr.bf16.mxu0 0
    %1486 = vmatpush2.bf16.msra.mxu0 0
    %1487 = vmatprep.mubr.bf16.mxu0 0
    %1488 = vmatmul.mubr.bf16.gmra.mxu0 %v1453
    %v1489 = vpop.f32.mrf.mxu0
    %v1490 = vadd.f32 0.0, %v1489
    %v1491 = vpop.f32.mrf.mxu0
    %v1492 = vadd.f32 0.0, %v1491
    %v1493 = vpop.f32.mrf.mxu0
    %v1494 = vpop.f32.mrf.mxu0
    %1495 = vdwg.mxu0
    %1496 = vmatprep.subr.bf16.mxu0 0
    %1497 = vmatpush1.bf16.msra.mxu0 0
    %1498 = vmatprep.subr.bf16.mxu0 0
    %1499 = vmatpush1.bf16.msra.mxu0 0
    %1500 = vmatprep.subr.bf16.mxu0 0
    %1501 = vmatpush1.bf16.msra.mxu0 0
    %1502 = vmatprep.subr.bf16.mxu0 0
    %1503 = vmatpush1.bf16.msra.mxu0 0
    %1504 = vmatprep.subr.bf16.mxu0 0
    %1505 = vmatpush1.bf16.msra.mxu0 0
    %1506 = vmatprep.subr.bf16.mxu0 0
    %1507 = vmatpush1.bf16.msra.mxu0 0
    %1508 = vmatprep.subr.bf16.mxu0 0
    %1509 = vmatpush1.bf16.msra.mxu0 0
    %1510 = vmatprep.subr.bf16.mxu0 %v1443
    %1511 = vmatpush1.bf16.msra.mxu0 %v1442
    %1512 = vmatprep.subr.bf16.mxu0 0
    %1513 = vmatpush2.bf16.msra.mxu0 0
    %1514 = vmatprep.subr.bf16.mxu0 0
    %1515 = vmatpush2.bf16.msra.mxu0 0
    %1516 = vmatprep.subr.bf16.mxu0 0
    %1517 = vmatpush2.bf16.msra.mxu0 0
    %1518 = vmatprep.subr.bf16.mxu0 0
    %1519 = vmatpush2.bf16.msra.mxu0 0
    %1520 = vmatprep.subr.bf16.mxu0 0
    %1521 = vmatpush2.bf16.msra.mxu0 0
    %1522 = vmatprep.subr.bf16.mxu0 0
    %1523 = vmatpush2.bf16.msra.mxu0 0
    %1524 = vmatprep.subr.bf16.mxu0 0
    %1525 = vmatpush2.bf16.msra.mxu0 0
    %1526 = vmatprep.subr.bf16.mxu0 0
    %1527 = vmatpush2.bf16.msra.mxu0 0
    %1528 = vmatprep.mubr.bf16.mxu0 0
    %1529 = vmatmul.mubr.bf16.gmra.mxu0 %v1453
    %v1530 = vpop.f32.mrf.mxu0
    %v1531 = vadd.f32 0.0, %v1530
    %v1532 = vpop.f32.mrf.mxu0
    %v1533 = vadd.f32 0.0, %v1532
    %v1534 = vpop.f32.mrf.mxu0
    %v1535 = vpop.f32.mrf.mxu0
    %1536 = vdwg.mxu0
    %1537 = vmatprep.subr.bf16.mxu0 0
    %1538 = vmatpush1.bf16.msra.mxu0 0
    %1539 = vmatprep.subr.bf16.mxu0 0
    %1540 = vmatpush1.bf16.msra.mxu0 0
    %1541 = vmatprep.subr.bf16.mxu0 0
    %1542 = vmatpush1.bf16.msra.mxu0 0
    %1543 = vmatprep.subr.bf16.mxu0 0
    %1544 = vmatpush1.bf16.msra.mxu0 0
    %1545 = vmatprep.subr.bf16.mxu0 0
    %1546 = vmatpush1.bf16.msra.mxu0 0
    %1547 = vmatprep.subr.bf16.mxu0 0
    %1548 = vmatpush1.bf16.msra.mxu0 0
    %1549 = vmatprep.subr.bf16.mxu0 0
    %1550 = vmatpush1.bf16.msra.mxu0 0
    %1551 = vmatprep.subr.bf16.mxu0 %v1445
    %1552 = vmatpush1.bf16.msra.mxu0 %v1444
    %1553 = vmatprep.subr.bf16.mxu0 0
    %1554 = vmatpush2.bf16.msra.mxu0 0
    %1555 = vmatprep.subr.bf16.mxu0 0
    %1556 = vmatpush2.bf16.msra.mxu0 0
    %1557 = vmatprep.subr.bf16.mxu0 0
    %1558 = vmatpush2.bf16.msra.mxu0 0
    %1559 = vmatprep.subr.bf16.mxu0 0
    %1560 = vmatpush2.bf16.msra.mxu0 0
    %1561 = vmatprep.subr.bf16.mxu0 0
    %1562 = vmatpush2.bf16.msra.mxu0 0
    %1563 = vmatprep.subr.bf16.mxu0 0
    %1564 = vmatpush2.bf16.msra.mxu0 0
    %1565 = vmatprep.subr.bf16.mxu0 0
    %1566 = vmatpush2.bf16.msra.mxu0 0
    %1567 = vmatprep.subr.bf16.mxu0 0
    %1568 = vmatpush2.bf16.msra.mxu0 0
    %1569 = vmatprep.mubr.bf16.mxu0 0
    %1570 = vmatmul.mubr.bf16.gmra.mxu0 %v1453
    %v1571 = vpop.f32.mrf.mxu0
    %v1572 = vadd.f32 0.0, %v1571
    %v1573 = vpop.f32.mrf.mxu0
    %v1574 = vadd.f32 0.0, %v1573
    %v1575 = vpop.f32.mrf.mxu0
    %v1576 = vpop.f32.mrf.mxu0
    %1577 = vdwg.mxu0
    %v1584 = vunpack.c.l.b16 %v1410
    %v1585 = vunpack.c.h.b16 %v1410
    %v1586 = vunpack.c.l.b16 %v1411
    %v1587 = vunpack.c.h.b16 %v1411
    %v1588 = vunpack.c.l.b16 %v1412
    %v1589 = vunpack.c.h.b16 %v1412
    %v1590 = vunpack.c.l.b16 %v1413
    %v1591 = vunpack.c.h.b16 %v1413
    %v1592 = vunpack.c.l.b16 %v1414
    %v1593 = vunpack.c.h.b16 %v1414
    %v1594 = vunpack.c.l.b16 %v1415
    %v1595 = vunpack.c.h.b16 %v1415
    %v1596 = vpack.c.b16 %v1590, %v1584
    %v1597 = vpack.c.b16 %v1591, %v1585
    %v1598 = vpack.c.b16 %v1592, %v1586
    %v1599 = vpack.c.b16 %v1593, %v1587
    %v1600 = vpack.c.b16 %v1594, %v1588
    %v1601 = vpack.c.b16 %v1595, %v1589
    %1608 = vmatprep.subr.bf16.mxu0 0
    %1609 = vmatpush1.bf16.msra.mxu0 0
    %1610 = vmatprep.subr.bf16.mxu0 0
    %1611 = vmatpush1.bf16.msra.mxu0 0
    %1612 = vmatprep.subr.bf16.mxu0 0
    %1613 = vmatpush1.bf16.msra.mxu0 0
    %1614 = vmatprep.subr.bf16.mxu0 0
    %1615 = vmatpush1.bf16.msra.mxu0 0
    %1616 = vmatprep.subr.bf16.mxu0 0
    %1617 = vmatpush1.bf16.msra.mxu0 0
    %1618 = vmatprep.subr.bf16.mxu0 0
    %1619 = vmatpush1.bf16.msra.mxu0 0
    %1620 = vmatprep.subr.bf16.mxu0 0
    %1621 = vmatpush1.bf16.msra.mxu0 0
    %1622 = vmatprep.subr.bf16.mxu0 %v1597
    %1623 = vmatpush1.bf16.msra.mxu0 %v1596
    %1624 = vmatprep.subr.bf16.mxu0 0
    %1625 = vmatpush2.bf16.msra.mxu0 0
    %1626 = vmatprep.subr.bf16.mxu0 0
    %1627 = vmatpush2.bf16.msra.mxu0 0
    %1628 = vmatprep.subr.bf16.mxu0 0
    %1629 = vmatpush2.bf16.msra.mxu0 0
    %1630 = vmatprep.subr.bf16.mxu0 0
    %1631 = vmatpush2.bf16.msra.mxu0 0
    %1632 = vmatprep.subr.bf16.mxu0 0
    %1633 = vmatpush2.bf16.msra.mxu0 0
    %1634 = vmatprep.subr.bf16.mxu0 0
    %1635 = vmatpush2.bf16.msra.mxu0 0
    %1636 = vmatprep.subr.bf16.mxu0 0
    %1637 = vmatpush2.bf16.msra.mxu0 0
    %1638 = vmatprep.subr.bf16.mxu0 0
    %1639 = vmatpush2.bf16.msra.mxu0 0
    %1640 = vmatprep.mubr.bf16.mxu0 0
    %1641 = vmatmul.mubr.bf16.gmra.mxu0 %v211
    %v1642 = vpop.f32.mrf.mxu0
    %v1643 = vadd.f32 %v1490, %v1642
    %v1644 = vpop.f32.mrf.mxu0
    %v1645 = vadd.f32 %v1492, %v1644
    %v1646 = vpop.f32.mrf.mxu0
    %v1647 = vpop.f32.mrf.mxu0
    %1648 = vdwg.mxu0
    %1649 = vmatprep.subr.bf16.mxu0 0
    %1650 = vmatpush1.bf16.msra.mxu0 0
    %1651 = vmatprep.subr.bf16.mxu0 0
    %1652 = vmatpush1.bf16.msra.mxu0 0
    %1653 = vmatprep.subr.bf16.mxu0 0
    %1654 = vmatpush1.bf16.msra.mxu0 0
    %1655 = vmatprep.subr.bf16.mxu0 0
    %1656 = vmatpush1.bf16.msra.mxu0 0
    %1657 = vmatprep.subr.bf16.mxu0 0
    %1658 = vmatpush1.bf16.msra.mxu0 0
    %1659 = vmatprep.subr.bf16.mxu0 0
    %1660 = vmatpush1.bf16.msra.mxu0 0
    %1661 = vmatprep.subr.bf16.mxu0 0
    %1662 = vmatpush1.bf16.msra.mxu0 0
    %1663 = vmatprep.subr.bf16.mxu0 %v1599
    %1664 = vmatpush1.bf16.msra.mxu0 %v1598
    %1665 = vmatprep.subr.bf16.mxu0 0
    %1666 = vmatpush2.bf16.msra.mxu0 0
    %1667 = vmatprep.subr.bf16.mxu0 0
    %1668 = vmatpush2.bf16.msra.mxu0 0
    %1669 = vmatprep.subr.bf16.mxu0 0
    %1670 = vmatpush2.bf16.msra.mxu0 0
    %1671 = vmatprep.subr.bf16.mxu0 0
    %1672 = vmatpush2.bf16.msra.mxu0 0
    %1673 = vmatprep.subr.bf16.mxu0 0
    %1674 = vmatpush2.bf16.msra.mxu0 0
    %1675 = vmatprep.subr.bf16.mxu0 0
    %1676 = vmatpush2.bf16.msra.mxu0 0
    %1677 = vmatprep.subr.bf16.mxu0 0
    %1678 = vmatpush2.bf16.msra.mxu0 0
    %1679 = vmatprep.subr.bf16.mxu0 0
    %1680 = vmatpush2.bf16.msra.mxu0 0
    %1681 = vmatprep.mubr.bf16.mxu0 0
    %1682 = vmatmul.mubr.bf16.gmra.mxu0 %v211
    %v1683 = vpop.f32.mrf.mxu0
    %v1684 = vadd.f32 %v1531, %v1683
    %v1685 = vpop.f32.mrf.mxu0
    %v1686 = vadd.f32 %v1533, %v1685
    %v1687 = vpop.f32.mrf.mxu0
    %v1688 = vpop.f32.mrf.mxu0
    %1689 = vdwg.mxu0
    %1690 = vmatprep.subr.bf16.mxu0 0
    %1691 = vmatpush1.bf16.msra.mxu0 0
    %1692 = vmatprep.subr.bf16.mxu0 0
    %1693 = vmatpush1.bf16.msra.mxu0 0
    %1694 = vmatprep.subr.bf16.mxu0 0
    %1695 = vmatpush1.bf16.msra.mxu0 0
    %1696 = vmatprep.subr.bf16.mxu0 0
    %1697 = vmatpush1.bf16.msra.mxu0 0
    %1698 = vmatprep.subr.bf16.mxu0 0
    %1699 = vmatpush1.bf16.msra.mxu0 0
    %1700 = vmatprep.subr.bf16.mxu0 0
    %1701 = vmatpush1.bf16.msra.mxu0 0
    %1702 = vmatprep.subr.bf16.mxu0 0
    %1703 = vmatpush1.bf16.msra.mxu0 0
    %1704 = vmatprep.subr.bf16.mxu0 %v1601
    %1705 = vmatpush1.bf16.msra.mxu0 %v1600
    %1706 = vmatprep.subr.bf16.mxu0 0
    %1707 = vmatpush2.bf16.msra.mxu0 0
    %1708 = vmatprep.subr.bf16.mxu0 0
    %1709 = vmatpush2.bf16.msra.mxu0 0
    %1710 = vmatprep.subr.bf16.mxu0 0
    %1711 = vmatpush2.bf16.msra.mxu0 0
    %1712 = vmatprep.subr.bf16.mxu0 0
    %1713 = vmatpush2.bf16.msra.mxu0 0
    %1714 = vmatprep.subr.bf16.mxu0 0
    %1715 = vmatpush2.bf16.msra.mxu0 0
    %1716 = vmatprep.subr.bf16.mxu0 0
    %1717 = vmatpush2.bf16.msra.mxu0 0
    %1718 = vmatprep.subr.bf16.mxu0 0
    %1719 = vmatpush2.bf16.msra.mxu0 0
    %1720 = vmatprep.subr.bf16.mxu0 0
    %1721 = vmatpush2.bf16.msra.mxu0 0
    %1722 = vmatprep.mubr.bf16.mxu0 0
    %1723 = vmatmul.mubr.bf16.gmra.mxu0 %v211
    %v1724 = vpop.f32.mrf.mxu0
    %v1725 = vadd.f32 %v1572, %v1724
    %v1726 = vpop.f32.mrf.mxu0
    %v1727 = vadd.f32 %v1574, %v1726
    %v1728 = vpop.f32.mrf.mxu0
    %v1729 = vpop.f32.mrf.mxu0
    %1730 = vdwg.mxu0
    %v1731 = vld [vmem:[#allocation15 + $0x7] sm:$0x3f]
    %v1733 = vlaneseq
    %v1734 = vshrl.u32 %v1733, 7
    %v1735 = vsub.s32 0, %v1734
    %v1736 = vrot.slane %v1731, %v1735
    %v1737 = vlaneseq
    %v1738 = vshrl.u32 %v1737, 7
    %v1739 = vsub.s32 1, %v1738
    %v1740 = vrot.slane %v1731, %v1739
    %v1741 = vlaneseq
    %v1742 = vshrl.u32 %v1741, 7
    %v1743 = vsub.s32 2, %v1742
    %v1744 = vrot.slane %v1731, %v1743
    %v1745 = vlaneseq
    %v1746 = vshrl.u32 %v1745, 7
    %v1747 = vsub.s32 3, %v1746
    %v1748 = vrot.slane %v1731, %v1747
    %v1749 = vlaneseq
    %v1750 = vshrl.u32 %v1749, 7
    %v1751 = vsub.s32 4, %v1750
    %v1752 = vrot.slane %v1731, %v1751
    %v1753 = vlaneseq
    %v1754 = vshrl.u32 %v1753, 7
    %v1755 = vsub.s32 5, %v1754
    %v1756 = vrot.slane %v1731, %v1755
    %v1763 = vadd.f32 %v1643, %v1736
    %v1764 = vadd.f32 %v1645, %v1740
    %v1765 = vadd.f32 %v1684, %v1744
    %v1766 = vadd.f32 %v1686, %v1748
    %v1767 = vadd.f32 %v1725, %v1752
    %v1768 = vadd.f32 %v1727, %v1756
    %v1769 = vmax.f32 %v1763, 0.0
    %v1770 = vmax.f32 %v1764, 0.0
    %v1771 = vmax.f32 %v1765, 0.0
    %v1772 = vmax.f32 %v1766, 0.0
    %v1773 = vmax.f32 %v1767, 0.0
    %v1774 = vmax.f32 %v1768, 0.0
    // Predicated region
    $region86: #{_lambda_.1} parent=1 // pred_check
      %p1775 = pneg %p134
    $region87: #{_lambda_.1} parent=1 // pred_check_branch
      %1777 = sbr.rel (%p1775) target = $region89
    $region88: #{_lambda_.1} parent=1 // pred_region
      %s1778 = smul.u32 4, 96
      %s1779 = smul.u32 %s1778, 6
      %s1780 = sshll.u32 %s1779, 4
      %1781 = dma.done [#allocation4], %s1780
    $region89: #{_lambda_.1} parent=1 // pred_fallthru
      _
    %v1782 = vpack.c.bf16 %v1769, %v1769
    %v1783 = vpack.c.bf16 %v1770, %v1770
    %v1784 = vpack.c.bf16 %v1771, %v1771
    %v1785 = vpack.c.bf16 %v1772, %v1772
    %v1786 = vpack.c.bf16 %v1773, %v1773
    %v1787 = vpack.c.bf16 %v1774, %v1774
    %v1788 = vld [vmem:[#allocation2] sm:$0xff]
    %v1789 = vld [vmem:[#allocation2 + $0x8] sm:$0xff]
    %v1790 = vld [vmem:[#allocation2 + $0x10] sm:$0xff]
    %v1791 = vld [vmem:[#allocation2 + $0x18] sm:$0xff]
    %v1792 = vld [vmem:[#allocation2 + $0x20] sm:$0xff]
    %v1793 = vld [vmem:[#allocation2 + $0x28] sm:$0xff]
    %v1794 = vld [vmem:[#allocation2 + $0x30] sm:$0xff]
    %v1795 = vld [vmem:[#allocation2 + $0x38] sm:$0xff]
    %v1796 = vld [vmem:[#allocation2 + $0x40] sm:$0xff]
    %v1797 = vld [vmem:[#allocation2 + $0x48] sm:$0xff]
    %v1798 = vld [vmem:[#allocation2 + $0x50] sm:$0xff]
    %v1799 = vld [vmem:[#allocation2 + $0x58] sm:$0xff]
    %v1800 = vld [vmem:[#allocation2 + $0x60] sm:$0xff]
    %v1801 = vld [vmem:[#allocation2 + $0x68] sm:$0xff]
    %v1802 = vld [vmem:[#allocation2 + $0x70] sm:$0xff]
    %v1803 = vld [vmem:[#allocation2 + $0x78] sm:$0xff]
    %v1804 = vld [vmem:[#allocation2 + $0x80] sm:$0xff]
    %v1805 = vld [vmem:[#allocation2 + $0x88] sm:$0xff]
    %v1806 = vld [vmem:[#allocation2 + $0x90] sm:$0xff]
    %v1807 = vld [vmem:[#allocation2 + $0x98] sm:$0xff]
    %v1808 = vld [vmem:[#allocation2 + $0xa0] sm:$0xff]
    %v1809 = vld [vmem:[#allocation2 + $0xa8] sm:$0xff]
    %v1810 = vld [vmem:[#allocation2 + $0xb0] sm:$0xff]
    %v1811 = vld [vmem:[#allocation2 + $0xb8] sm:$0xff]
    %v1812 = vld [vmem:[#allocation2 + $0xc0] sm:$0xff]
    %v1813 = vld [vmem:[#allocation2 + $0xc8] sm:$0xff]
    %v1814 = vld [vmem:[#allocation2 + $0xd0] sm:$0xff]
    %v1815 = vld [vmem:[#allocation2 + $0xd8] sm:$0xff]
    %v1816 = vld [vmem:[#allocation2 + $0xe0] sm:$0xff]
    %v1817 = vld [vmem:[#allocation2 + $0xe8] sm:$0xff]
    %v1818 = vld [vmem:[#allocation2 + $0xf0] sm:$0xff]
    %v1819 = vld [vmem:[#allocation2 + $0xf8] sm:$0xff]
    %v1820 = vld [vmem:[#allocation2 + $0x100] sm:$0xff]
    %v1821 = vld [vmem:[#allocation2 + $0x108] sm:$0xff]
    %v1822 = vld [vmem:[#allocation2 + $0x110] sm:$0xff]
    %v1823 = vld [vmem:[#allocation2 + $0x118] sm:$0xff]
    %v1824 = vld [vmem:[#allocation2 + $0x120] sm:$0xff]
    %v1825 = vld [vmem:[#allocation2 + $0x128] sm:$0xff]
    %v1826 = vld [vmem:[#allocation2 + $0x130] sm:$0xff]
    %v1827 = vld [vmem:[#allocation2 + $0x138] sm:$0xff]
    %v1828 = vld [vmem:[#allocation2 + $0x140] sm:$0xff]
    %v1829 = vld [vmem:[#allocation2 + $0x148] sm:$0xff]
    %v1830 = vld [vmem:[#allocation2 + $0x150] sm:$0xff]
    %v1831 = vld [vmem:[#allocation2 + $0x158] sm:$0xff]
    %v1832 = vld [vmem:[#allocation2 + $0x160] sm:$0xff]
    %v1833 = vld [vmem:[#allocation2 + $0x168] sm:$0xff]
    %v1834 = vld [vmem:[#allocation2 + $0x170] sm:$0xff]
    %v1835 = vld [vmem:[#allocation2 + $0x178] sm:$0xff]
    %v1836 = vld [vmem:[#allocation2 + $0x180] sm:$0xff]
    %v1837 = vld [vmem:[#allocation2 + $0x188] sm:$0xff]
    %v1838 = vld [vmem:[#allocation2 + $0x190] sm:$0xff]
    %v1839 = vld [vmem:[#allocation2 + $0x198] sm:$0xff]
    %v1840 = vld [vmem:[#allocation2 + $0x1a0] sm:$0xff]
    %v1841 = vld [vmem:[#allocation2 + $0x1a8] sm:$0xff]
    %v1842 = vld [vmem:[#allocation2 + $0x1b0] sm:$0xff]
    %v1843 = vld [vmem:[#allocation2 + $0x1b8] sm:$0xff]
    %v1844 = vld [vmem:[#allocation2 + $0x1c0] sm:$0xff]
    %v1845 = vld [vmem:[#allocation2 + $0x1c8] sm:$0xff]
    %v1846 = vld [vmem:[#allocation2 + $0x1d0] sm:$0xff]
    %v1847 = vld [vmem:[#allocation2 + $0x1d8] sm:$0xff]
    %v1848 = vld [vmem:[#allocation2 + $0x1e0] sm:$0xff]
    %v1849 = vld [vmem:[#allocation2 + $0x1e8] sm:$0xff]
    %v1850 = vld [vmem:[#allocation2 + $0x1f0] sm:$0xff]
    %v1851 = vld [vmem:[#allocation2 + $0x1f8] sm:$0xff]
    %v1852 = vld [vmem:[#allocation2 + $0x200] sm:$0xff]
    %v1853 = vld [vmem:[#allocation2 + $0x208] sm:$0xff]
    %v1854 = vld [vmem:[#allocation2 + $0x210] sm:$0xff]
    %v1855 = vld [vmem:[#allocation2 + $0x218] sm:$0xff]
    %v1856 = vld [vmem:[#allocation2 + $0x220] sm:$0xff]
    %v1857 = vld [vmem:[#allocation2 + $0x228] sm:$0xff]
    %v1858 = vld [vmem:[#allocation2 + $0x230] sm:$0xff]
    %v1859 = vld [vmem:[#allocation2 + $0x238] sm:$0xff]
    %v1860 = vld [vmem:[#allocation2 + $0x240] sm:$0xff]
    %v1861 = vld [vmem:[#allocation2 + $0x248] sm:$0xff]
    %v1862 = vld [vmem:[#allocation2 + $0x250] sm:$0xff]
    %v1863 = vld [vmem:[#allocation2 + $0x258] sm:$0xff]
    %v1864 = vld [vmem:[#allocation2 + $0x260] sm:$0xff]
    %v1865 = vld [vmem:[#allocation2 + $0x268] sm:$0xff]
    %v1866 = vld [vmem:[#allocation2 + $0x270] sm:$0xff]
    %v1867 = vld [vmem:[#allocation2 + $0x278] sm:$0xff]
    %v1868 = vld [vmem:[#allocation2 + $0x280] sm:$0xff]
    %v1869 = vld [vmem:[#allocation2 + $0x288] sm:$0xff]
    %v1870 = vld [vmem:[#allocation2 + $0x290] sm:$0xff]
    %v1871 = vld [vmem:[#allocation2 + $0x298] sm:$0xff]
    %v1872 = vld [vmem:[#allocation2 + $0x2a0] sm:$0xff]
    %v1873 = vld [vmem:[#allocation2 + $0x2a8] sm:$0xff]
    %v1874 = vld [vmem:[#allocation2 + $0x2b0] sm:$0xff]
    %v1875 = vld [vmem:[#allocation2 + $0x2b8] sm:$0xff]
    %v1876 = vld [vmem:[#allocation2 + $0x2c0] sm:$0xff]
    %v1877 = vld [vmem:[#allocation2 + $0x2c8] sm:$0xff]
    %v1878 = vld [vmem:[#allocation2 + $0x2d0] sm:$0xff]
    %v1879 = vld [vmem:[#allocation2 + $0x2d8] sm:$0xff]
    %v1880 = vld [vmem:[#allocation2 + $0x2e0] sm:$0xff]
    %v1881 = vld [vmem:[#allocation2 + $0x2e8] sm:$0xff]
    %v1882 = vld [vmem:[#allocation2 + $0x2f0] sm:$0xff]
    %v1883 = vld [vmem:[#allocation2 + $0x2f8] sm:$0xff]
    %v1884 = vld [vmem:[#allocation2 + $0x300] sm:$0xff]
    %v1885 = vld [vmem:[#allocation2 + $0x308] sm:$0xff]
    %v1886 = vld [vmem:[#allocation2 + $0x310] sm:$0xff]
    %v1887 = vld [vmem:[#allocation2 + $0x318] sm:$0xff]
    %v1888 = vld [vmem:[#allocation2 + $0x320] sm:$0xff]
    %v1889 = vld [vmem:[#allocation2 + $0x328] sm:$0xff]
    %v1890 = vld [vmem:[#allocation2 + $0x330] sm:$0xff]
    %v1891 = vld [vmem:[#allocation2 + $0x338] sm:$0xff]
    %v1892 = vld [vmem:[#allocation2 + $0x340] sm:$0xff]
    %v1893 = vld [vmem:[#allocation2 + $0x348] sm:$0xff]
    %v1894 = vld [vmem:[#allocation2 + $0x350] sm:$0xff]
    %v1895 = vld [vmem:[#allocation2 + $0x358] sm:$0xff]
    %v1896 = vld [vmem:[#allocation2 + $0x360] sm:$0xff]
    %v1897 = vld [vmem:[#allocation2 + $0x368] sm:$0xff]
    %v1898 = vld [vmem:[#allocation2 + $0x370] sm:$0xff]
    %v1899 = vld [vmem:[#allocation2 + $0x378] sm:$0xff]
    %v1900 = vld [vmem:[#allocation2 + $0x380] sm:$0xff]
    %v1901 = vld [vmem:[#allocation2 + $0x388] sm:$0xff]
    %v1902 = vld [vmem:[#allocation2 + $0x390] sm:$0xff]
    %v1903 = vld [vmem:[#allocation2 + $0x398] sm:$0xff]
    %v1904 = vld [vmem:[#allocation2 + $0x3a0] sm:$0xff]
    %v1905 = vld [vmem:[#allocation2 + $0x3a8] sm:$0xff]
    %v1906 = vld [vmem:[#allocation2 + $0x3b0] sm:$0xff]
    %v1907 = vld [vmem:[#allocation2 + $0x3b8] sm:$0xff]
    %v1908 = vld [vmem:[#allocation2 + $0x3c0] sm:$0xff]
    %v1909 = vld [vmem:[#allocation2 + $0x3c8] sm:$0xff]
    %v1910 = vld [vmem:[#allocation2 + $0x3d0] sm:$0xff]
    %v1911 = vld [vmem:[#allocation2 + $0x3d8] sm:$0xff]
    %v1912 = vld [vmem:[#allocation2 + $0x3e0] sm:$0xff]
    %v1913 = vld [vmem:[#allocation2 + $0x3e8] sm:$0xff]
    %v1914 = vld [vmem:[#allocation2 + $0x3f0] sm:$0xff]
    %v1915 = vld [vmem:[#allocation2 + $0x3f8] sm:$0xff]
    %v1916 = vld [vmem:[#allocation2 + $0x400] sm:$0xff]
    %v1917 = vld [vmem:[#allocation2 + $0x408] sm:$0xff]
    %v1918 = vld [vmem:[#allocation2 + $0x410] sm:$0xff]
    %v1919 = vld [vmem:[#allocation2 + $0x418] sm:$0xff]
    %v1920 = vld [vmem:[#allocation2 + $0x420] sm:$0xff]
    %v1921 = vld [vmem:[#allocation2 + $0x428] sm:$0xff]
    %v1922 = vld [vmem:[#allocation2 + $0x430] sm:$0xff]
    %v1923 = vld [vmem:[#allocation2 + $0x438] sm:$0xff]
    %v1924 = vld [vmem:[#allocation2 + $0x440] sm:$0xff]
    %v1925 = vld [vmem:[#allocation2 + $0x448] sm:$0xff]
    %v1926 = vld [vmem:[#allocation2 + $0x450] sm:$0xff]
    %v1927 = vld [vmem:[#allocation2 + $0x458] sm:$0xff]
    %v1928 = vld [vmem:[#allocation2 + $0x460] sm:$0xff]
    %v1929 = vld [vmem:[#allocation2 + $0x468] sm:$0xff]
    %v1930 = vld [vmem:[#allocation2 + $0x470] sm:$0xff]
    %v1931 = vld [vmem:[#allocation2 + $0x478] sm:$0xff]
    %v1932 = vld [vmem:[#allocation2 + $0x480] sm:$0xff]
    %v1933 = vld [vmem:[#allocation2 + $0x488] sm:$0xff]
    %v1934 = vld [vmem:[#allocation2 + $0x490] sm:$0xff]
    %v1935 = vld [vmem:[#allocation2 + $0x498] sm:$0xff]
    %v1936 = vld [vmem:[#allocation2 + $0x4a0] sm:$0xff]
    %v1937 = vld [vmem:[#allocation2 + $0x4a8] sm:$0xff]
    %v1938 = vld [vmem:[#allocation2 + $0x4b0] sm:$0xff]
    %v1939 = vld [vmem:[#allocation2 + $0x4b8] sm:$0xff]
    %v1940 = vld [vmem:[#allocation2 + $0x4c0] sm:$0xff]
    %v1941 = vld [vmem:[#allocation2 + $0x4c8] sm:$0xff]
    %v1942 = vld [vmem:[#allocation2 + $0x4d0] sm:$0xff]
    %v1943 = vld [vmem:[#allocation2 + $0x4d8] sm:$0xff]
    %v1944 = vld [vmem:[#allocation2 + $0x4e0] sm:$0xff]
    %v1945 = vld [vmem:[#allocation2 + $0x4e8] sm:$0xff]
    %v1946 = vld [vmem:[#allocation2 + $0x4f0] sm:$0xff]
    %v1947 = vld [vmem:[#allocation2 + $0x4f8] sm:$0xff]
    %v1948 = vld [vmem:[#allocation2 + $0x500] sm:$0xff]
    %v1949 = vld [vmem:[#allocation2 + $0x508] sm:$0xff]
    %v1950 = vld [vmem:[#allocation2 + $0x510] sm:$0xff]
    %v1951 = vld [vmem:[#allocation2 + $0x518] sm:$0xff]
    %v1952 = vld [vmem:[#allocation2 + $0x520] sm:$0xff]
    %v1953 = vld [vmem:[#allocation2 + $0x528] sm:$0xff]
    %v1954 = vld [vmem:[#allocation2 + $0x530] sm:$0xff]
    %v1955 = vld [vmem:[#allocation2 + $0x538] sm:$0xff]
    %v1956 = vld [vmem:[#allocation2 + $0x540] sm:$0xff]
    %v1957 = vld [vmem:[#allocation2 + $0x548] sm:$0xff]
    %v1958 = vld [vmem:[#allocation2 + $0x550] sm:$0xff]
    %v1959 = vld [vmem:[#allocation2 + $0x558] sm:$0xff]
    %v1960 = vld [vmem:[#allocation2 + $0x560] sm:$0xff]
    %v1961 = vld [vmem:[#allocation2 + $0x568] sm:$0xff]
    %v1962 = vld [vmem:[#allocation2 + $0x570] sm:$0xff]
    %v1963 = vld [vmem:[#allocation2 + $0x578] sm:$0xff]
    %v1964 = vld [vmem:[#allocation2 + $0x580] sm:$0xff]
    %v1965 = vld [vmem:[#allocation2 + $0x588] sm:$0xff]
    %v1966 = vld [vmem:[#allocation2 + $0x590] sm:$0xff]
    %v1967 = vld [vmem:[#allocation2 + $0x598] sm:$0xff]
    %v1968 = vld [vmem:[#allocation2 + $0x5a0] sm:$0xff]
    %v1969 = vld [vmem:[#allocation2 + $0x5a8] sm:$0xff]
    %v1970 = vld [vmem:[#allocation2 + $0x5b0] sm:$0xff]
    %v1971 = vld [vmem:[#allocation2 + $0x5b8] sm:$0xff]
    %v1972 = vld [vmem:[#allocation2 + $0x5c0] sm:$0xff]
    %v1973 = vld [vmem:[#allocation2 + $0x5c8] sm:$0xff]
    %v1974 = vld [vmem:[#allocation2 + $0x5d0] sm:$0xff]
    %v1975 = vld [vmem:[#allocation2 + $0x5d8] sm:$0xff]
    %v1976 = vld [vmem:[#allocation2 + $0x5e0] sm:$0xff]
    %v1977 = vld [vmem:[#allocation2 + $0x5e8] sm:$0xff]
    %v1978 = vld [vmem:[#allocation2 + $0x5f0] sm:$0xff]
    %v1979 = vld [vmem:[#allocation2 + $0x5f8] sm:$0xff]
    %v1980 = vld [vmem:[#allocation2 + $0x600] sm:$0xff]
    %v1981 = vld [vmem:[#allocation2 + $0x608] sm:$0xff]
    %v1982 = vld [vmem:[#allocation2 + $0x610] sm:$0xff]
    %v1983 = vld [vmem:[#allocation2 + $0x618] sm:$0xff]
    %v1984 = vld [vmem:[#allocation2 + $0x620] sm:$0xff]
    %v1985 = vld [vmem:[#allocation2 + $0x628] sm:$0xff]
    %v1986 = vld [vmem:[#allocation2 + $0x630] sm:$0xff]
    %v1987 = vld [vmem:[#allocation2 + $0x638] sm:$0xff]
    %v1988 = vld [vmem:[#allocation2 + $0x640] sm:$0xff]
    %v1989 = vld [vmem:[#allocation2 + $0x648] sm:$0xff]
    %v1990 = vld [vmem:[#allocation2 + $0x650] sm:$0xff]
    %v1991 = vld [vmem:[#allocation2 + $0x658] sm:$0xff]
    %v1992 = vld [vmem:[#allocation2 + $0x660] sm:$0xff]
    %v1993 = vld [vmem:[#allocation2 + $0x668] sm:$0xff]
    %v1994 = vld [vmem:[#allocation2 + $0x670] sm:$0xff]
    %v1995 = vld [vmem:[#allocation2 + $0x678] sm:$0xff]
    %v1996 = vld [vmem:[#allocation2 + $0x680] sm:$0xff]
    %v1997 = vld [vmem:[#allocation2 + $0x688] sm:$0xff]
    %v1998 = vld [vmem:[#allocation2 + $0x690] sm:$0xff]
    %v1999 = vld [vmem:[#allocation2 + $0x698] sm:$0xff]
    %v2000 = vld [vmem:[#allocation2 + $0x6a0] sm:$0xff]
    %v2001 = vld [vmem:[#allocation2 + $0x6a8] sm:$0xff]
    %v2002 = vld [vmem:[#allocation2 + $0x6b0] sm:$0xff]
    %v2003 = vld [vmem:[#allocation2 + $0x6b8] sm:$0xff]
    %v2004 = vld [vmem:[#allocation2 + $0x6c0] sm:$0xff]
    %v2005 = vld [vmem:[#allocation2 + $0x6c8] sm:$0xff]
    %v2006 = vld [vmem:[#allocation2 + $0x6d0] sm:$0xff]
    %v2007 = vld [vmem:[#allocation2 + $0x6d8] sm:$0xff]
    %v2008 = vld [vmem:[#allocation2 + $0x6e0] sm:$0xff]
    %v2009 = vld [vmem:[#allocation2 + $0x6e8] sm:$0xff]
    %v2010 = vld [vmem:[#allocation2 + $0x6f0] sm:$0xff]
    %v2011 = vld [vmem:[#allocation2 + $0x6f8] sm:$0xff]
    %v2012 = vld [vmem:[#allocation2 + $0x700] sm:$0xff]
    %v2013 = vld [vmem:[#allocation2 + $0x708] sm:$0xff]
    %v2014 = vld [vmem:[#allocation2 + $0x710] sm:$0xff]
    %v2015 = vld [vmem:[#allocation2 + $0x718] sm:$0xff]
    %v2016 = vld [vmem:[#allocation2 + $0x720] sm:$0xff]
    %v2017 = vld [vmem:[#allocation2 + $0x728] sm:$0xff]
    %v2018 = vld [vmem:[#allocation2 + $0x730] sm:$0xff]
    %v2019 = vld [vmem:[#allocation2 + $0x738] sm:$0xff]
    %v2020 = vld [vmem:[#allocation2 + $0x740] sm:$0xff]
    %v2021 = vld [vmem:[#allocation2 + $0x748] sm:$0xff]
    %v2022 = vld [vmem:[#allocation2 + $0x750] sm:$0xff]
    %v2023 = vld [vmem:[#allocation2 + $0x758] sm:$0xff]
    %v2024 = vld [vmem:[#allocation2 + $0x760] sm:$0xff]
    %v2025 = vld [vmem:[#allocation2 + $0x768] sm:$0xff]
    %v2026 = vld [vmem:[#allocation2 + $0x770] sm:$0xff]
    %v2027 = vld [vmem:[#allocation2 + $0x778] sm:$0xff]
    %v2028 = vld [vmem:[#allocation2 + $0x780] sm:$0xff]
    %v2029 = vld [vmem:[#allocation2 + $0x788] sm:$0xff]
    %v2030 = vld [vmem:[#allocation2 + $0x790] sm:$0xff]
    %v2031 = vld [vmem:[#allocation2 + $0x798] sm:$0xff]
    %v2032 = vld [vmem:[#allocation2 + $0x7a0] sm:$0xff]
    %v2033 = vld [vmem:[#allocation2 + $0x7a8] sm:$0xff]
    %v2034 = vld [vmem:[#allocation2 + $0x7b0] sm:$0xff]
    %v2035 = vld [vmem:[#allocation2 + $0x7b8] sm:$0xff]
    %v2036 = vld [vmem:[#allocation2 + $0x7c0] sm:$0xff]
    %v2037 = vld [vmem:[#allocation2 + $0x7c8] sm:$0xff]
    %v2038 = vld [vmem:[#allocation2 + $0x7d0] sm:$0xff]
    %v2039 = vld [vmem:[#allocation2 + $0x7d8] sm:$0xff]
    %v2040 = vld [vmem:[#allocation2 + $0x7e0] sm:$0xff]
    %v2041 = vld [vmem:[#allocation2 + $0x7e8] sm:$0xff]
    %v2042 = vld [vmem:[#allocation2 + $0x7f0] sm:$0xff]
    %v2043 = vld [vmem:[#allocation2 + $0x7f8] sm:$0xff]
    %v2044 = vld [vmem:[#allocation2 + $0x800] sm:$0xff]
    %v2045 = vld [vmem:[#allocation2 + $0x808] sm:$0xff]
    %v2046 = vld [vmem:[#allocation2 + $0x810] sm:$0xff]
    %v2047 = vld [vmem:[#allocation2 + $0x818] sm:$0xff]
    %v2048 = vld [vmem:[#allocation2 + $0x820] sm:$0xff]
    %v2049 = vld [vmem:[#allocation2 + $0x828] sm:$0xff]
    %v2050 = vld [vmem:[#allocation2 + $0x830] sm:$0xff]
    %v2051 = vld [vmem:[#allocation2 + $0x838] sm:$0xff]
    %v2052 = vld [vmem:[#allocation2 + $0x840] sm:$0xff]
    %v2053 = vld [vmem:[#allocation2 + $0x848] sm:$0xff]
    %v2054 = vld [vmem:[#allocation2 + $0x850] sm:$0xff]
    %v2055 = vld [vmem:[#allocation2 + $0x858] sm:$0xff]
    %v2056 = vld [vmem:[#allocation2 + $0x860] sm:$0xff]
    %v2057 = vld [vmem:[#allocation2 + $0x868] sm:$0xff]
    %v2058 = vld [vmem:[#allocation2 + $0x870] sm:$0xff]
    %v2059 = vld [vmem:[#allocation2 + $0x878] sm:$0xff]
    %v2060 = vld [vmem:[#allocation2 + $0x880] sm:$0xff]
    %v2061 = vld [vmem:[#allocation2 + $0x888] sm:$0xff]
    %v2062 = vld [vmem:[#allocation2 + $0x890] sm:$0xff]
    %v2063 = vld [vmem:[#allocation2 + $0x898] sm:$0xff]
    %v2064 = vld [vmem:[#allocation2 + $0x8a0] sm:$0xff]
    %v2065 = vld [vmem:[#allocation2 + $0x8a8] sm:$0xff]
    %v2066 = vld [vmem:[#allocation2 + $0x8b0] sm:$0xff]
    %v2067 = vld [vmem:[#allocation2 + $0x8b8] sm:$0xff]
    %v2068 = vld [vmem:[#allocation2 + $0x8c0] sm:$0xff]
    %v2069 = vld [vmem:[#allocation2 + $0x8c8] sm:$0xff]
    %v2070 = vld [vmem:[#allocation2 + $0x8d0] sm:$0xff]
    %v2071 = vld [vmem:[#allocation2 + $0x8d8] sm:$0xff]
    %v2072 = vld [vmem:[#allocation2 + $0x8e0] sm:$0xff]
    %v2073 = vld [vmem:[#allocation2 + $0x8e8] sm:$0xff]
    %v2074 = vld [vmem:[#allocation2 + $0x8f0] sm:$0xff]
    %v2075 = vld [vmem:[#allocation2 + $0x8f8] sm:$0xff]
    %v2076 = vld [vmem:[#allocation15 + $0xd] sm:$0x3f]
    %v2078 = vlaneseq
    %v2079 = vshrl.u32 %v2078, 7
    %v2080 = vsub.s32 0, %v2079
    %v2081 = vrot.slane %v2076, %v2080
    %v2082 = vlaneseq
    %v2083 = vshrl.u32 %v2082, 7
    %v2084 = vsub.s32 1, %v2083
    %v2085 = vrot.slane %v2076, %v2084
    %v2086 = vlaneseq
    %v2087 = vshrl.u32 %v2086, 7
    %v2088 = vsub.s32 2, %v2087
    %v2089 = vrot.slane %v2076, %v2088
    %v2090 = vlaneseq
    %v2091 = vshrl.u32 %v2090, 7
    %v2092 = vsub.s32 3, %v2091
    %v2093 = vrot.slane %v2076, %v2092
    %v2094 = vlaneseq
    %v2095 = vshrl.u32 %v2094, 7
    %v2096 = vsub.s32 4, %v2095
    %v2097 = vrot.slane %v2076, %v2096
    %v2098 = vlaneseq
    %v2099 = vshrl.u32 %v2098, 7
    %v2100 = vsub.s32 5, %v2099
    %v2101 = vrot.slane %v2076, %v2100
    %v2396 = vunpack.c.l.b16 %v1788
    %v2397 = vunpack.c.h.b16 %v1788
    %v2398 = vunpack.c.l.b16 %v1789
    %v2399 = vunpack.c.h.b16 %v1789
    %v2400 = vunpack.c.l.b16 %v1790
    %v2401 = vunpack.c.h.b16 %v1790
    %v2402 = vunpack.c.l.b16 %v1791
    %v2403 = vunpack.c.h.b16 %v1791
    %v2404 = vunpack.c.l.b16 %v1792
    %v2405 = vunpack.c.h.b16 %v1792
    %v2406 = vunpack.c.l.b16 %v1793
    %v2407 = vunpack.c.h.b16 %v1793
    %v2408 = vunpack.c.l.b16 %v1794
    %v2409 = vunpack.c.h.b16 %v1794
    %v2410 = vunpack.c.l.b16 %v1795
    %v2411 = vunpack.c.h.b16 %v1795
    %v2412 = vunpack.c.l.b16 %v1796
    %v2413 = vunpack.c.h.b16 %v1796
    %v2414 = vunpack.c.l.b16 %v1797
    %v2415 = vunpack.c.h.b16 %v1797
    %v2416 = vunpack.c.l.b16 %v1798
    %v2417 = vunpack.c.h.b16 %v1798
    %v2418 = vunpack.c.l.b16 %v1799
    %v2419 = vunpack.c.h.b16 %v1799
    %v2420 = vunpack.c.l.b16 %v1800
    %v2421 = vunpack.c.h.b16 %v1800
    %v2422 = vunpack.c.l.b16 %v1801
    %v2423 = vunpack.c.h.b16 %v1801
    %v2424 = vunpack.c.l.b16 %v1802
    %v2425 = vunpack.c.h.b16 %v1802
    %v2426 = vunpack.c.l.b16 %v1803
    %v2427 = vunpack.c.h.b16 %v1803
    %v2428 = vunpack.c.l.b16 %v1804
    %v2429 = vunpack.c.h.b16 %v1804
    %v2430 = vunpack.c.l.b16 %v1805
    %v2431 = vunpack.c.h.b16 %v1805
    %v2432 = vunpack.c.l.b16 %v1806
    %v2433 = vunpack.c.h.b16 %v1806
    %v2434 = vunpack.c.l.b16 %v1807
    %v2435 = vunpack.c.h.b16 %v1807
    %v2436 = vunpack.c.l.b16 %v1808
    %v2437 = vunpack.c.h.b16 %v1808
    %v2438 = vunpack.c.l.b16 %v1809
    %v2439 = vunpack.c.h.b16 %v1809
    %v2440 = vunpack.c.l.b16 %v1810
    %v2441 = vunpack.c.h.b16 %v1810
    %v2442 = vunpack.c.l.b16 %v1811
    %v2443 = vunpack.c.h.b16 %v1811
    %v2444 = vunpack.c.l.b16 %v1812
    %v2445 = vunpack.c.h.b16 %v1812
    %v2446 = vunpack.c.l.b16 %v1813
    %v2447 = vunpack.c.h.b16 %v1813
    %v2448 = vunpack.c.l.b16 %v1814
    %v2449 = vunpack.c.h.b16 %v1814
    %v2450 = vunpack.c.l.b16 %v1815
    %v2451 = vunpack.c.h.b16 %v1815
    %v2452 = vunpack.c.l.b16 %v1816
    %v2453 = vunpack.c.h.b16 %v1816
    %v2454 = vunpack.c.l.b16 %v1817
    %v2455 = vunpack.c.h.b16 %v1817
    %v2456 = vunpack.c.l.b16 %v1818
    %v2457 = vunpack.c.h.b16 %v1818
    %v2458 = vunpack.c.l.b16 %v1819
    %v2459 = vunpack.c.h.b16 %v1819
    %v2460 = vunpack.c.l.b16 %v1820
    %v2461 = vunpack.c.h.b16 %v1820
    %v2462 = vunpack.c.l.b16 %v1821
    %v2463 = vunpack.c.h.b16 %v1821
    %v2464 = vunpack.c.l.b16 %v1822
    %v2465 = vunpack.c.h.b16 %v1822
    %v2466 = vunpack.c.l.b16 %v1823
    %v2467 = vunpack.c.h.b16 %v1823
    %v2468 = vunpack.c.l.b16 %v1824
    %v2469 = vunpack.c.h.b16 %v1824
    %v2470 = vunpack.c.l.b16 %v1825
    %v2471 = vunpack.c.h.b16 %v1825
    %v2472 = vunpack.c.l.b16 %v1826
    %v2473 = vunpack.c.h.b16 %v1826
    %v2474 = vunpack.c.l.b16 %v1827
    %v2475 = vunpack.c.h.b16 %v1827
    %v2476 = vunpack.c.l.b16 %v1828
    %v2477 = vunpack.c.h.b16 %v1828
    %v2478 = vunpack.c.l.b16 %v1829
    %v2479 = vunpack.c.h.b16 %v1829
    %v2480 = vunpack.c.l.b16 %v1830
    %v2481 = vunpack.c.h.b16 %v1830
    %v2482 = vunpack.c.l.b16 %v1831
    %v2483 = vunpack.c.h.b16 %v1831
    %v2484 = vunpack.c.l.b16 %v1832
    %v2485 = vunpack.c.h.b16 %v1832
    %v2486 = vunpack.c.l.b16 %v1833
    %v2487 = vunpack.c.h.b16 %v1833
    %v2488 = vunpack.c.l.b16 %v1834
    %v2489 = vunpack.c.h.b16 %v1834
    %v2490 = vunpack.c.l.b16 %v1835
    %v2491 = vunpack.c.h.b16 %v1835
    %v2492 = vunpack.c.l.b16 %v1836
    %v2493 = vunpack.c.h.b16 %v1836
    %v2494 = vunpack.c.l.b16 %v1837
    %v2495 = vunpack.c.h.b16 %v1837
    %v2496 = vunpack.c.l.b16 %v1838
    %v2497 = vunpack.c.h.b16 %v1838
    %v2498 = vunpack.c.l.b16 %v1839
    %v2499 = vunpack.c.h.b16 %v1839
    %v2500 = vunpack.c.l.b16 %v1840
    %v2501 = vunpack.c.h.b16 %v1840
    %v2502 = vunpack.c.l.b16 %v1841
    %v2503 = vunpack.c.h.b16 %v1841
    %v2504 = vunpack.c.l.b16 %v1842
    %v2505 = vunpack.c.h.b16 %v1842
    %v2506 = vunpack.c.l.b16 %v1843
    %v2507 = vunpack.c.h.b16 %v1843
    %v2508 = vunpack.c.l.b16 %v1844
    %v2509 = vunpack.c.h.b16 %v1844
    %v2510 = vunpack.c.l.b16 %v1845
    %v2511 = vunpack.c.h.b16 %v1845
    %v2512 = vunpack.c.l.b16 %v1846
    %v2513 = vunpack.c.h.b16 %v1846
    %v2514 = vunpack.c.l.b16 %v1847
    %v2515 = vunpack.c.h.b16 %v1847
    %v2516 = vunpack.c.l.b16 %v1848
    %v2517 = vunpack.c.h.b16 %v1848
    %v2518 = vunpack.c.l.b16 %v1849
    %v2519 = vunpack.c.h.b16 %v1849
    %v2520 = vunpack.c.l.b16 %v1850
    %v2521 = vunpack.c.h.b16 %v1850
    %v2522 = vunpack.c.l.b16 %v1851
    %v2523 = vunpack.c.h.b16 %v1851
    %v2524 = vunpack.c.l.b16 %v1852
    %v2525 = vunpack.c.h.b16 %v1852
    %v2526 = vunpack.c.l.b16 %v1853
    %v2527 = vunpack.c.h.b16 %v1853
    %v2528 = vunpack.c.l.b16 %v1854
    %v2529 = vunpack.c.h.b16 %v1854
    %v2530 = vunpack.c.l.b16 %v1855
    %v2531 = vunpack.c.h.b16 %v1855
    %v2532 = vunpack.c.l.b16 %v1856
    %v2533 = vunpack.c.h.b16 %v1856
    %v2534 = vunpack.c.l.b16 %v1857
    %v2535 = vunpack.c.h.b16 %v1857
    %v2536 = vunpack.c.l.b16 %v1858
    %v2537 = vunpack.c.h.b16 %v1858
    %v2538 = vunpack.c.l.b16 %v1859
    %v2539 = vunpack.c.h.b16 %v1859
    %v2540 = vunpack.c.l.b16 %v1860
    %v2541 = vunpack.c.h.b16 %v1860
    %v2542 = vunpack.c.l.b16 %v1861
    %v2543 = vunpack.c.h.b16 %v1861
    %v2544 = vunpack.c.l.b16 %v1862
    %v2545 = vunpack.c.h.b16 %v1862
    %v2546 = vunpack.c.l.b16 %v1863
    %v2547 = vunpack.c.h.b16 %v1863
    %v2548 = vunpack.c.l.b16 %v1864
    %v2549 = vunpack.c.h.b16 %v1864
    %v2550 = vunpack.c.l.b16 %v1865
    %v2551 = vunpack.c.h.b16 %v1865
    %v2552 = vunpack.c.l.b16 %v1866
    %v2553 = vunpack.c.h.b16 %v1866
    %v2554 = vunpack.c.l.b16 %v1867
    %v2555 = vunpack.c.h.b16 %v1867
    %v2556 = vunpack.c.l.b16 %v1868
    %v2557 = vunpack.c.h.b16 %v1868
    %v2558 = vunpack.c.l.b16 %v1869
    %v2559 = vunpack.c.h.b16 %v1869
    %v2560 = vunpack.c.l.b16 %v1870
    %v2561 = vunpack.c.h.b16 %v1870
    %v2562 = vunpack.c.l.b16 %v1871
    %v2563 = vunpack.c.h.b16 %v1871
    %v2564 = vunpack.c.l.b16 %v1872
    %v2565 = vunpack.c.h.b16 %v1872
    %v2566 = vunpack.c.l.b16 %v1873
    %v2567 = vunpack.c.h.b16 %v1873
    %v2568 = vunpack.c.l.b16 %v1874
    %v2569 = vunpack.c.h.b16 %v1874
    %v2570 = vunpack.c.l.b16 %v1875
    %v2571 = vunpack.c.h.b16 %v1875
    %v2572 = vunpack.c.l.b16 %v1876
    %v2573 = vunpack.c.h.b16 %v1876
    %v2574 = vunpack.c.l.b16 %v1877
    %v2575 = vunpack.c.h.b16 %v1877
    %v2576 = vunpack.c.l.b16 %v1878
    %v2577 = vunpack.c.h.b16 %v1878
    %v2578 = vunpack.c.l.b16 %v1879
    %v2579 = vunpack.c.h.b16 %v1879
    %v2580 = vunpack.c.l.b16 %v1880
    %v2581 = vunpack.c.h.b16 %v1880
    %v2582 = vunpack.c.l.b16 %v1881
    %v2583 = vunpack.c.h.b16 %v1881
    %v2584 = vunpack.c.l.b16 %v1882
    %v2585 = vunpack.c.h.b16 %v1882
    %v2586 = vunpack.c.l.b16 %v1883
    %v2587 = vunpack.c.h.b16 %v1883
    %v2588 = vunpack.c.l.b16 %v1884
    %v2589 = vunpack.c.h.b16 %v1884
    %v2590 = vunpack.c.l.b16 %v1885
    %v2591 = vunpack.c.h.b16 %v1885
    %v2592 = vunpack.c.l.b16 %v1886
    %v2593 = vunpack.c.h.b16 %v1886
    %v2594 = vunpack.c.l.b16 %v1887
    %v2595 = vunpack.c.h.b16 %v1887
    %v2596 = vunpack.c.l.b16 %v1888
    %v2597 = vunpack.c.h.b16 %v1888
    %v2598 = vunpack.c.l.b16 %v1889
    %v2599 = vunpack.c.h.b16 %v1889
    %v2600 = vunpack.c.l.b16 %v1890
    %v2601 = vunpack.c.h.b16 %v1890
    %v2602 = vunpack.c.l.b16 %v1891
    %v2603 = vunpack.c.h.b16 %v1891
    %v2604 = vunpack.c.l.b16 %v1892
    %v2605 = vunpack.c.h.b16 %v1892
    %v2606 = vunpack.c.l.b16 %v1893
    %v2607 = vunpack.c.h.b16 %v1893
    %v2608 = vunpack.c.l.b16 %v1894
    %v2609 = vunpack.c.h.b16 %v1894
    %v2610 = vunpack.c.l.b16 %v1895
    %v2611 = vunpack.c.h.b16 %v1895
    %v2612 = vunpack.c.l.b16 %v1896
    %v2613 = vunpack.c.h.b16 %v1896
    %v2614 = vunpack.c.l.b16 %v1897
    %v2615 = vunpack.c.h.b16 %v1897
    %v2616 = vunpack.c.l.b16 %v1898
    %v2617 = vunpack.c.h.b16 %v1898
    %v2618 = vunpack.c.l.b16 %v1899
    %v2619 = vunpack.c.h.b16 %v1899
    %v2620 = vunpack.c.l.b16 %v1900
    %v2621 = vunpack.c.h.b16 %v1900
    %v2622 = vunpack.c.l.b16 %v1901
    %v2623 = vunpack.c.h.b16 %v1901
    %v2624 = vunpack.c.l.b16 %v1902
    %v2625 = vunpack.c.h.b16 %v1902
    %v2626 = vunpack.c.l.b16 %v1903
    %v2627 = vunpack.c.h.b16 %v1903
    %v2628 = vunpack.c.l.b16 %v1904
    %v2629 = vunpack.c.h.b16 %v1904
    %v2630 = vunpack.c.l.b16 %v1905
    %v2631 = vunpack.c.h.b16 %v1905
    %v2632 = vunpack.c.l.b16 %v1906
    %v2633 = vunpack.c.h.b16 %v1906
    %v2634 = vunpack.c.l.b16 %v1907
    %v2635 = vunpack.c.h.b16 %v1907
    %v2636 = vunpack.c.l.b16 %v1908
    %v2637 = vunpack.c.h.b16 %v1908
    %v2638 = vunpack.c.l.b16 %v1909
    %v2639 = vunpack.c.h.b16 %v1909
    %v2640 = vunpack.c.l.b16 %v1910
    %v2641 = vunpack.c.h.b16 %v1910
    %v2642 = vunpack.c.l.b16 %v1911
    %v2643 = vunpack.c.h.b16 %v1911
    %v2644 = vunpack.c.l.b16 %v1912
    %v2645 = vunpack.c.h.b16 %v1912
    %v2646 = vunpack.c.l.b16 %v1913
    %v2647 = vunpack.c.h.b16 %v1913
    %v2648 = vunpack.c.l.b16 %v1914
    %v2649 = vunpack.c.h.b16 %v1914
    %v2650 = vunpack.c.l.b16 %v1915
    %v2651 = vunpack.c.h.b16 %v1915
    %v2652 = vunpack.c.l.b16 %v1916
    %v2653 = vunpack.c.h.b16 %v1916
    %v2654 = vunpack.c.l.b16 %v1917
    %v2655 = vunpack.c.h.b16 %v1917
    %v2656 = vunpack.c.l.b16 %v1918
    %v2657 = vunpack.c.h.b16 %v1918
    %v2658 = vunpack.c.l.b16 %v1919
    %v2659 = vunpack.c.h.b16 %v1919
    %v2660 = vunpack.c.l.b16 %v1920
    %v2661 = vunpack.c.h.b16 %v1920
    %v2662 = vunpack.c.l.b16 %v1921
    %v2663 = vunpack.c.h.b16 %v1921
    %v2664 = vunpack.c.l.b16 %v1922
    %v2665 = vunpack.c.h.b16 %v1922
    %v2666 = vunpack.c.l.b16 %v1923
    %v2667 = vunpack.c.h.b16 %v1923
    %v2668 = vunpack.c.l.b16 %v1924
    %v2669 = vunpack.c.h.b16 %v1924
    %v2670 = vunpack.c.l.b16 %v1925
    %v2671 = vunpack.c.h.b16 %v1925
    %v2672 = vunpack.c.l.b16 %v1926
    %v2673 = vunpack.c.h.b16 %v1926
    %v2674 = vunpack.c.l.b16 %v1927
    %v2675 = vunpack.c.h.b16 %v1927
    %v2676 = vunpack.c.l.b16 %v1928
    %v2677 = vunpack.c.h.b16 %v1928
    %v2678 = vunpack.c.l.b16 %v1929
    %v2679 = vunpack.c.h.b16 %v1929
    %v2680 = vunpack.c.l.b16 %v1930
    %v2681 = vunpack.c.h.b16 %v1930
    %v2682 = vunpack.c.l.b16 %v1931
    %v2683 = vunpack.c.h.b16 %v1931
    %v2684 = vunpack.c.l.b16 %v1932
    %v2685 = vunpack.c.h.b16 %v1932
    %v2686 = vunpack.c.l.b16 %v1933
    %v2687 = vunpack.c.h.b16 %v1933
    %v2688 = vunpack.c.l.b16 %v1934
    %v2689 = vunpack.c.h.b16 %v1934
    %v2690 = vunpack.c.l.b16 %v1935
    %v2691 = vunpack.c.h.b16 %v1935
    %v2692 = vunpack.c.l.b16 %v1936
    %v2693 = vunpack.c.h.b16 %v1936
    %v2694 = vunpack.c.l.b16 %v1937
    %v2695 = vunpack.c.h.b16 %v1937
    %v2696 = vunpack.c.l.b16 %v1938
    %v2697 = vunpack.c.h.b16 %v1938
    %v2698 = vunpack.c.l.b16 %v1939
    %v2699 = vunpack.c.h.b16 %v1939
    %v2700 = vunpack.c.l.b16 %v1940
    %v2701 = vunpack.c.h.b16 %v1940
    %v2702 = vunpack.c.l.b16 %v1941
    %v2703 = vunpack.c.h.b16 %v1941
    %v2704 = vunpack.c.l.b16 %v1942
    %v2705 = vunpack.c.h.b16 %v1942
    %v2706 = vunpack.c.l.b16 %v1943
    %v2707 = vunpack.c.h.b16 %v1943
    %v2708 = vunpack.c.l.b16 %v1944
    %v2709 = vunpack.c.h.b16 %v1944
    %v2710 = vunpack.c.l.b16 %v1945
    %v2711 = vunpack.c.h.b16 %v1945
    %v2712 = vunpack.c.l.b16 %v1946
    %v2713 = vunpack.c.h.b16 %v1946
    %v2714 = vunpack.c.l.b16 %v1947
    %v2715 = vunpack.c.h.b16 %v1947
    %v2716 = vunpack.c.l.b16 %v1948
    %v2717 = vunpack.c.h.b16 %v1948
    %v2718 = vunpack.c.l.b16 %v1949
    %v2719 = vunpack.c.h.b16 %v1949
    %v2720 = vunpack.c.l.b16 %v1950
    %v2721 = vunpack.c.h.b16 %v1950
    %v2722 = vunpack.c.l.b16 %v1951
    %v2723 = vunpack.c.h.b16 %v1951
    %v2724 = vunpack.c.l.b16 %v1952
    %v2725 = vunpack.c.h.b16 %v1952
    %v2726 = vunpack.c.l.b16 %v1953
    %v2727 = vunpack.c.h.b16 %v1953
    %v2728 = vunpack.c.l.b16 %v1954
    %v2729 = vunpack.c.h.b16 %v1954
    %v2730 = vunpack.c.l.b16 %v1955
    %v2731 = vunpack.c.h.b16 %v1955
    %v2732 = vunpack.c.l.b16 %v1956
    %v2733 = vunpack.c.h.b16 %v1956
    %v2734 = vunpack.c.l.b16 %v1957
    %v2735 = vunpack.c.h.b16 %v1957
    %v2736 = vunpack.c.l.b16 %v1958
    %v2737 = vunpack.c.h.b16 %v1958
    %v2738 = vunpack.c.l.b16 %v1959
    %v2739 = vunpack.c.h.b16 %v1959
    %v2740 = vunpack.c.l.b16 %v1960
    %v2741 = vunpack.c.h.b16 %v1960
    %v2742 = vunpack.c.l.b16 %v1961
    %v2743 = vunpack.c.h.b16 %v1961
    %v2744 = vunpack.c.l.b16 %v1962
    %v2745 = vunpack.c.h.b16 %v1962
    %v2746 = vunpack.c.l.b16 %v1963
    %v2747 = vunpack.c.h.b16 %v1963
    %v2748 = vunpack.c.l.b16 %v1964
    %v2749 = vunpack.c.h.b16 %v1964
    %v2750 = vunpack.c.l.b16 %v1965
    %v2751 = vunpack.c.h.b16 %v1965
    %v2752 = vunpack.c.l.b16 %v1966
    %v2753 = vunpack.c.h.b16 %v1966
    %v2754 = vunpack.c.l.b16 %v1967
    %v2755 = vunpack.c.h.b16 %v1967
    %v2756 = vunpack.c.l.b16 %v1968
    %v2757 = vunpack.c.h.b16 %v1968
    %v2758 = vunpack.c.l.b16 %v1969
    %v2759 = vunpack.c.h.b16 %v1969
    %v2760 = vunpack.c.l.b16 %v1970
    %v2761 = vunpack.c.h.b16 %v1970
    %v2762 = vunpack.c.l.b16 %v1971
    %v2763 = vunpack.c.h.b16 %v1971
    %v2764 = vunpack.c.l.b16 %v1972
    %v2765 = vunpack.c.h.b16 %v1972
    %v2766 = vunpack.c.l.b16 %v1973
    %v2767 = vunpack.c.h.b16 %v1973
    %v2768 = vunpack.c.l.b16 %v1974
    %v2769 = vunpack.c.h.b16 %v1974
    %v2770 = vunpack.c.l.b16 %v1975
    %v2771 = vunpack.c.h.b16 %v1975
    %v2772 = vunpack.c.l.b16 %v1976
    %v2773 = vunpack.c.h.b16 %v1976
    %v2774 = vunpack.c.l.b16 %v1977
    %v2775 = vunpack.c.h.b16 %v1977
    %v2776 = vunpack.c.l.b16 %v1978
    %v2777 = vunpack.c.h.b16 %v1978
    %v2778 = vunpack.c.l.b16 %v1979
    %v2779 = vunpack.c.h.b16 %v1979
    %v2780 = vunpack.c.l.b16 %v1980
    %v2781 = vunpack.c.h.b16 %v1980
    %v2782 = vunpack.c.l.b16 %v1981
    %v2783 = vunpack.c.h.b16 %v1981
    %v2784 = vunpack.c.l.b16 %v1982
    %v2785 = vunpack.c.h.b16 %v1982
    %v2786 = vunpack.c.l.b16 %v1983
    %v2787 = vunpack.c.h.b16 %v1983
    %v2788 = vunpack.c.l.b16 %v1984
    %v2789 = vunpack.c.h.b16 %v1984
    %v2790 = vunpack.c.l.b16 %v1985
    %v2791 = vunpack.c.h.b16 %v1985
    %v2792 = vunpack.c.l.b16 %v1986
    %v2793 = vunpack.c.h.b16 %v1986
    %v2794 = vunpack.c.l.b16 %v1987
    %v2795 = vunpack.c.h.b16 %v1987
    %v2796 = vunpack.c.l.b16 %v1988
    %v2797 = vunpack.c.h.b16 %v1988
    %v2798 = vunpack.c.l.b16 %v1989
    %v2799 = vunpack.c.h.b16 %v1989
    %v2800 = vunpack.c.l.b16 %v1990
    %v2801 = vunpack.c.h.b16 %v1990
    %v2802 = vunpack.c.l.b16 %v1991
    %v2803 = vunpack.c.h.b16 %v1991
    %v2804 = vunpack.c.l.b16 %v1992
    %v2805 = vunpack.c.h.b16 %v1992
    %v2806 = vunpack.c.l.b16 %v1993
    %v2807 = vunpack.c.h.b16 %v1993
    %v2808 = vunpack.c.l.b16 %v1994
    %v2809 = vunpack.c.h.b16 %v1994
    %v2810 = vunpack.c.l.b16 %v1995
    %v2811 = vunpack.c.h.b16 %v1995
    %v2812 = vunpack.c.l.b16 %v1996
    %v2813 = vunpack.c.h.b16 %v1996
    %v2814 = vunpack.c.l.b16 %v1997
    %v2815 = vunpack.c.h.b16 %v1997
    %v2816 = vunpack.c.l.b16 %v1998
    %v2817 = vunpack.c.h.b16 %v1998
    %v2818 = vunpack.c.l.b16 %v1999
    %v2819 = vunpack.c.h.b16 %v1999
    %v2820 = vunpack.c.l.b16 %v2000
    %v2821 = vunpack.c.h.b16 %v2000
    %v2822 = vunpack.c.l.b16 %v2001
    %v2823 = vunpack.c.h.b16 %v2001
    %v2824 = vunpack.c.l.b16 %v2002
    %v2825 = vunpack.c.h.b16 %v2002
    %v2826 = vunpack.c.l.b16 %v2003
    %v2827 = vunpack.c.h.b16 %v2003
    %v2828 = vunpack.c.l.b16 %v2004
    %v2829 = vunpack.c.h.b16 %v2004
    %v2830 = vunpack.c.l.b16 %v2005
    %v2831 = vunpack.c.h.b16 %v2005
    %v2832 = vunpack.c.l.b16 %v2006
    %v2833 = vunpack.c.h.b16 %v2006
    %v2834 = vunpack.c.l.b16 %v2007
    %v2835 = vunpack.c.h.b16 %v2007
    %v2836 = vunpack.c.l.b16 %v2008
    %v2837 = vunpack.c.h.b16 %v2008
    %v2838 = vunpack.c.l.b16 %v2009
    %v2839 = vunpack.c.h.b16 %v2009
    %v2840 = vunpack.c.l.b16 %v2010
    %v2841 = vunpack.c.h.b16 %v2010
    %v2842 = vunpack.c.l.b16 %v2011
    %v2843 = vunpack.c.h.b16 %v2011
    %v2844 = vunpack.c.l.b16 %v2012
    %v2845 = vunpack.c.h.b16 %v2012
    %v2846 = vunpack.c.l.b16 %v2013
    %v2847 = vunpack.c.h.b16 %v2013
    %v2848 = vunpack.c.l.b16 %v2014
    %v2849 = vunpack.c.h.b16 %v2014
    %v2850 = vunpack.c.l.b16 %v2015
    %v2851 = vunpack.c.h.b16 %v2015
    %v2852 = vunpack.c.l.b16 %v2016
    %v2853 = vunpack.c.h.b16 %v2016
    %v2854 = vunpack.c.l.b16 %v2017
    %v2855 = vunpack.c.h.b16 %v2017
    %v2856 = vunpack.c.l.b16 %v2018
    %v2857 = vunpack.c.h.b16 %v2018
    %v2858 = vunpack.c.l.b16 %v2019
    %v2859 = vunpack.c.h.b16 %v2019
    %v2860 = vunpack.c.l.b16 %v2020
    %v2861 = vunpack.c.h.b16 %v2020
    %v2862 = vunpack.c.l.b16 %v2021
    %v2863 = vunpack.c.h.b16 %v2021
    %v2864 = vunpack.c.l.b16 %v2022
    %v2865 = vunpack.c.h.b16 %v2022
    %v2866 = vunpack.c.l.b16 %v2023
    %v2867 = vunpack.c.h.b16 %v2023
    %v2868 = vunpack.c.l.b16 %v2024
    %v2869 = vunpack.c.h.b16 %v2024
    %v2870 = vunpack.c.l.b16 %v2025
    %v2871 = vunpack.c.h.b16 %v2025
    %v2872 = vunpack.c.l.b16 %v2026
    %v2873 = vunpack.c.h.b16 %v2026
    %v2874 = vunpack.c.l.b16 %v2027
    %v2875 = vunpack.c.h.b16 %v2027
    %v2876 = vunpack.c.l.b16 %v2028
    %v2877 = vunpack.c.h.b16 %v2028
    %v2878 = vunpack.c.l.b16 %v2029
    %v2879 = vunpack.c.h.b16 %v2029
    %v2880 = vunpack.c.l.b16 %v2030
    %v2881 = vunpack.c.h.b16 %v2030
    %v2882 = vunpack.c.l.b16 %v2031
    %v2883 = vunpack.c.h.b16 %v2031
    %v2884 = vunpack.c.l.b16 %v2032
    %v2885 = vunpack.c.h.b16 %v2032
    %v2886 = vunpack.c.l.b16 %v2033
    %v2887 = vunpack.c.h.b16 %v2033
    %v2888 = vunpack.c.l.b16 %v2034
    %v2889 = vunpack.c.h.b16 %v2034
    %v2890 = vunpack.c.l.b16 %v2035
    %v2891 = vunpack.c.h.b16 %v2035
    %v2892 = vunpack.c.l.b16 %v2036
    %v2893 = vunpack.c.h.b16 %v2036
    %v2894 = vunpack.c.l.b16 %v2037
    %v2895 = vunpack.c.h.b16 %v2037
    %v2896 = vunpack.c.l.b16 %v2038
    %v2897 = vunpack.c.h.b16 %v2038
    %v2898 = vunpack.c.l.b16 %v2039
    %v2899 = vunpack.c.h.b16 %v2039
    %v2900 = vunpack.c.l.b16 %v2040
    %v2901 = vunpack.c.h.b16 %v2040
    %v2902 = vunpack.c.l.b16 %v2041
    %v2903 = vunpack.c.h.b16 %v2041
    %v2904 = vunpack.c.l.b16 %v2042
    %v2905 = vunpack.c.h.b16 %v2042
    %v2906 = vunpack.c.l.b16 %v2043
    %v2907 = vunpack.c.h.b16 %v2043
    %v2908 = vunpack.c.l.b16 %v2044
    %v2909 = vunpack.c.h.b16 %v2044
    %v2910 = vunpack.c.l.b16 %v2045
    %v2911 = vunpack.c.h.b16 %v2045
    %v2912 = vunpack.c.l.b16 %v2046
    %v2913 = vunpack.c.h.b16 %v2046
    %v2914 = vunpack.c.l.b16 %v2047
    %v2915 = vunpack.c.h.b16 %v2047
    %v2916 = vunpack.c.l.b16 %v2048
    %v2917 = vunpack.c.h.b16 %v2048
    %v2918 = vunpack.c.l.b16 %v2049
    %v2919 = vunpack.c.h.b16 %v2049
    %v2920 = vunpack.c.l.b16 %v2050
    %v2921 = vunpack.c.h.b16 %v2050
    %v2922 = vunpack.c.l.b16 %v2051
    %v2923 = vunpack.c.h.b16 %v2051
    %v2924 = vunpack.c.l.b16 %v2052
    %v2925 = vunpack.c.h.b16 %v2052
    %v2926 = vunpack.c.l.b16 %v2053
    %v2927 = vunpack.c.h.b16 %v2053
    %v2928 = vunpack.c.l.b16 %v2054
    %v2929 = vunpack.c.h.b16 %v2054
    %v2930 = vunpack.c.l.b16 %v2055
    %v2931 = vunpack.c.h.b16 %v2055
    %v2932 = vunpack.c.l.b16 %v2056
    %v2933 = vunpack.c.h.b16 %v2056
    %v2934 = vunpack.c.l.b16 %v2057
    %v2935 = vunpack.c.h.b16 %v2057
    %v2936 = vunpack.c.l.b16 %v2058
    %v2937 = vunpack.c.h.b16 %v2058
    %v2938 = vunpack.c.l.b16 %v2059
    %v2939 = vunpack.c.h.b16 %v2059
    %v2940 = vunpack.c.l.b16 %v2060
    %v2941 = vunpack.c.h.b16 %v2060
    %v2942 = vunpack.c.l.b16 %v2061
    %v2943 = vunpack.c.h.b16 %v2061
    %v2944 = vunpack.c.l.b16 %v2062
    %v2945 = vunpack.c.h.b16 %v2062
    %v2946 = vunpack.c.l.b16 %v2063
    %v2947 = vunpack.c.h.b16 %v2063
    %v2948 = vunpack.c.l.b16 %v2064
    %v2949 = vunpack.c.h.b16 %v2064
    %v2950 = vunpack.c.l.b16 %v2065
    %v2951 = vunpack.c.h.b16 %v2065
    %v2952 = vunpack.c.l.b16 %v2066
    %v2953 = vunpack.c.h.b16 %v2066
    %v2954 = vunpack.c.l.b16 %v2067
    %v2955 = vunpack.c.h.b16 %v2067
    %v2956 = vunpack.c.l.b16 %v2068
    %v2957 = vunpack.c.h.b16 %v2068
    %v2958 = vunpack.c.l.b16 %v2069
    %v2959 = vunpack.c.h.b16 %v2069
    %v2960 = vunpack.c.l.b16 %v2070
    %v2961 = vunpack.c.h.b16 %v2070
    %v2962 = vunpack.c.l.b16 %v2071
    %v2963 = vunpack.c.h.b16 %v2071
    %v2964 = vunpack.c.l.b16 %v2072
    %v2965 = vunpack.c.h.b16 %v2072
    %v2966 = vunpack.c.l.b16 %v2073
    %v2967 = vunpack.c.h.b16 %v2073
    %v2968 = vunpack.c.l.b16 %v2074
    %v2969 = vunpack.c.h.b16 %v2074
    %v2970 = vunpack.c.l.b16 %v2075
    %v2971 = vunpack.c.h.b16 %v2075
    %v2972 = vpack.c.b16 %v2402, %v2396
    %v2973 = vpack.c.b16 %v2403, %v2397
    %v2974 = vpack.c.b16 %v2404, %v2398
    %v2975 = vpack.c.b16 %v2405, %v2399
    %v2976 = vpack.c.b16 %v2406, %v2400
    %v2977 = vpack.c.b16 %v2407, %v2401
    %v2978 = vpack.c.b16 %v2414, %v2408
    %v2979 = vpack.c.b16 %v2415, %v2409
    %v2980 = vpack.c.b16 %v2416, %v2410
    %v2981 = vpack.c.b16 %v2417, %v2411
    %v2982 = vpack.c.b16 %v2418, %v2412
    %v2983 = vpack.c.b16 %v2419, %v2413
    %v2984 = vpack.c.b16 %v2426, %v2420
    %v2985 = vpack.c.b16 %v2427, %v2421
    %v2986 = vpack.c.b16 %v2428, %v2422
    %v2987 = vpack.c.b16 %v2429, %v2423
    %v2988 = vpack.c.b16 %v2430, %v2424
    %v2989 = vpack.c.b16 %v2431, %v2425
    %v2990 = vpack.c.b16 %v2438, %v2432
    %v2991 = vpack.c.b16 %v2439, %v2433
    %v2992 = vpack.c.b16 %v2440, %v2434
    %v2993 = vpack.c.b16 %v2441, %v2435
    %v2994 = vpack.c.b16 %v2442, %v2436
    %v2995 = vpack.c.b16 %v2443, %v2437
    %v2996 = vpack.c.b16 %v2450, %v2444
    %v2997 = vpack.c.b16 %v2451, %v2445
    %v2998 = vpack.c.b16 %v2452, %v2446
    %v2999 = vpack.c.b16 %v2453, %v2447
    %v3000 = vpack.c.b16 %v2454, %v2448
    %v3001 = vpack.c.b16 %v2455, %v2449
    %v3002 = vpack.c.b16 %v2462, %v2456
    %v3003 = vpack.c.b16 %v2463, %v2457
    %v3004 = vpack.c.b16 %v2464, %v2458
    %v3005 = vpack.c.b16 %v2465, %v2459
    %v3006 = vpack.c.b16 %v2466, %v2460
    %v3007 = vpack.c.b16 %v2467, %v2461
    %v3008 = vpack.c.b16 %v2474, %v2468
    %v3009 = vpack.c.b16 %v2475, %v2469
    %v3010 = vpack.c.b16 %v2476, %v2470
    %v3011 = vpack.c.b16 %v2477, %v2471
    %v3012 = vpack.c.b16 %v2478, %v2472
    %v3013 = vpack.c.b16 %v2479, %v2473
    %v3014 = vpack.c.b16 %v2486, %v2480
    %v3015 = vpack.c.b16 %v2487, %v2481
    %v3016 = vpack.c.b16 %v2488, %v2482
    %v3017 = vpack.c.b16 %v2489, %v2483
    %v3018 = vpack.c.b16 %v2490, %v2484
    %v3019 = vpack.c.b16 %v2491, %v2485
    %v3020 = vpack.c.b16 %v2498, %v2492
    %v3021 = vpack.c.b16 %v2499, %v2493
    %v3022 = vpack.c.b16 %v2500, %v2494
    %v3023 = vpack.c.b16 %v2501, %v2495
    %v3024 = vpack.c.b16 %v2502, %v2496
    %v3025 = vpack.c.b16 %v2503, %v2497
    %v3026 = vpack.c.b16 %v2510, %v2504
    %v3027 = vpack.c.b16 %v2511, %v2505
    %v3028 = vpack.c.b16 %v2512, %v2506
    %v3029 = vpack.c.b16 %v2513, %v2507
    %v3030 = vpack.c.b16 %v2514, %v2508
    %v3031 = vpack.c.b16 %v2515, %v2509
    %v3032 = vpack.c.b16 %v2522, %v2516
    %v3033 = vpack.c.b16 %v2523, %v2517
    %v3034 = vpack.c.b16 %v2524, %v2518
    %v3035 = vpack.c.b16 %v2525, %v2519
    %v3036 = vpack.c.b16 %v2526, %v2520
    %v3037 = vpack.c.b16 %v2527, %v2521
    %v3038 = vpack.c.b16 %v2534, %v2528
    %v3039 = vpack.c.b16 %v2535, %v2529
    %v3040 = vpack.c.b16 %v2536, %v2530
    %v3041 = vpack.c.b16 %v2537, %v2531
    %v3042 = vpack.c.b16 %v2538, %v2532
    %v3043 = vpack.c.b16 %v2539, %v2533
    %v3044 = vpack.c.b16 %v2546, %v2540
    %v3045 = vpack.c.b16 %v2547, %v2541
    %v3046 = vpack.c.b16 %v2548, %v2542
    %v3047 = vpack.c.b16 %v2549, %v2543
    %v3048 = vpack.c.b16 %v2550, %v2544
    %v3049 = vpack.c.b16 %v2551, %v2545
    %v3050 = vpack.c.b16 %v2558, %v2552
    %v3051 = vpack.c.b16 %v2559, %v2553
    %v3052 = vpack.c.b16 %v2560, %v2554
    %v3053 = vpack.c.b16 %v2561, %v2555
    %v3054 = vpack.c.b16 %v2562, %v2556
    %v3055 = vpack.c.b16 %v2563, %v2557
    %v3056 = vpack.c.b16 %v2570, %v2564
    %v3057 = vpack.c.b16 %v2571, %v2565
    %v3058 = vpack.c.b16 %v2572, %v2566
    %v3059 = vpack.c.b16 %v2573, %v2567
    %v3060 = vpack.c.b16 %v2574, %v2568
    %v3061 = vpack.c.b16 %v2575, %v2569
    %v3062 = vpack.c.b16 %v2582, %v2576
    %v3063 = vpack.c.b16 %v2583, %v2577
    %v3064 = vpack.c.b16 %v2584, %v2578
    %v3065 = vpack.c.b16 %v2585, %v2579
    %v3066 = vpack.c.b16 %v2586, %v2580
    %v3067 = vpack.c.b16 %v2587, %v2581
    %v3068 = vpack.c.b16 %v2594, %v2588
    %v3069 = vpack.c.b16 %v2595, %v2589
    %v3070 = vpack.c.b16 %v2596, %v2590
    %v3071 = vpack.c.b16 %v2597, %v2591
    %v3072 = vpack.c.b16 %v2598, %v2592
    %v3073 = vpack.c.b16 %v2599, %v2593
    %v3074 = vpack.c.b16 %v2606, %v2600
    %v3075 = vpack.c.b16 %v2607, %v2601
    %v3076 = vpack.c.b16 %v2608, %v2602
    %v3077 = vpack.c.b16 %v2609, %v2603
    %v3078 = vpack.c.b16 %v2610, %v2604
    %v3079 = vpack.c.b16 %v2611, %v2605
    %v3080 = vpack.c.b16 %v2618, %v2612
    %v3081 = vpack.c.b16 %v2619, %v2613
    %v3082 = vpack.c.b16 %v2620, %v2614
    %v3083 = vpack.c.b16 %v2621, %v2615
    %v3084 = vpack.c.b16 %v2622, %v2616
    %v3085 = vpack.c.b16 %v2623, %v2617
    %v3086 = vpack.c.b16 %v2630, %v2624
    %v3087 = vpack.c.b16 %v2631, %v2625
    %v3088 = vpack.c.b16 %v2632, %v2626
    %v3089 = vpack.c.b16 %v2633, %v2627
    %v3090 = vpack.c.b16 %v2634, %v2628
    %v3091 = vpack.c.b16 %v2635, %v2629
    %v3092 = vpack.c.b16 %v2642, %v2636
    %v3093 = vpack.c.b16 %v2643, %v2637
    %v3094 = vpack.c.b16 %v2644, %v2638
    %v3095 = vpack.c.b16 %v2645, %v2639
    %v3096 = vpack.c.b16 %v2646, %v2640
    %v3097 = vpack.c.b16 %v2647, %v2641
    %v3098 = vpack.c.b16 %v2654, %v2648
    %v3099 = vpack.c.b16 %v2655, %v2649
    %v3100 = vpack.c.b16 %v2656, %v2650
    %v3101 = vpack.c.b16 %v2657, %v2651
    %v3102 = vpack.c.b16 %v2658, %v2652
    %v3103 = vpack.c.b16 %v2659, %v2653
    %v3104 = vpack.c.b16 %v2666, %v2660
    %v3105 = vpack.c.b16 %v2667, %v2661
    %v3106 = vpack.c.b16 %v2668, %v2662
    %v3107 = vpack.c.b16 %v2669, %v2663
    %v3108 = vpack.c.b16 %v2670, %v2664
    %v3109 = vpack.c.b16 %v2671, %v2665
    %v3110 = vpack.c.b16 %v2678, %v2672
    %v3111 = vpack.c.b16 %v2679, %v2673
    %v3112 = vpack.c.b16 %v2680, %v2674
    %v3113 = vpack.c.b16 %v2681, %v2675
    %v3114 = vpack.c.b16 %v2682, %v2676
    %v3115 = vpack.c.b16 %v2683, %v2677
    %v3116 = vpack.c.b16 %v2690, %v2684
    %v3117 = vpack.c.b16 %v2691, %v2685
    %v3118 = vpack.c.b16 %v2692, %v2686
    %v3119 = vpack.c.b16 %v2693, %v2687
    %v3120 = vpack.c.b16 %v2694, %v2688
    %v3121 = vpack.c.b16 %v2695, %v2689
    %v3122 = vpack.c.b16 %v2702, %v2696
    %v3123 = vpack.c.b16 %v2703, %v2697
    %v3124 = vpack.c.b16 %v2704, %v2698
    %v3125 = vpack.c.b16 %v2705, %v2699
    %v3126 = vpack.c.b16 %v2706, %v2700
    %v3127 = vpack.c.b16 %v2707, %v2701
    %v3128 = vpack.c.b16 %v2714, %v2708
    %v3129 = vpack.c.b16 %v2715, %v2709
    %v3130 = vpack.c.b16 %v2716, %v2710
    %v3131 = vpack.c.b16 %v2717, %v2711
    %v3132 = vpack.c.b16 %v2718, %v2712
    %v3133 = vpack.c.b16 %v2719, %v2713
    %v3134 = vpack.c.b16 %v2726, %v2720
    %v3135 = vpack.c.b16 %v2727, %v2721
    %v3136 = vpack.c.b16 %v2728, %v2722
    %v3137 = vpack.c.b16 %v2729, %v2723
    %v3138 = vpack.c.b16 %v2730, %v2724
    %v3139 = vpack.c.b16 %v2731, %v2725
    %v3140 = vpack.c.b16 %v2738, %v2732
    %v3141 = vpack.c.b16 %v2739, %v2733
    %v3142 = vpack.c.b16 %v2740, %v2734
    %v3143 = vpack.c.b16 %v2741, %v2735
    %v3144 = vpack.c.b16 %v2742, %v2736
    %v3145 = vpack.c.b16 %v2743, %v2737
    %v3146 = vpack.c.b16 %v2750, %v2744
    %v3147 = vpack.c.b16 %v2751, %v2745
    %v3148 = vpack.c.b16 %v2752, %v2746
    %v3149 = vpack.c.b16 %v2753, %v2747
    %v3150 = vpack.c.b16 %v2754, %v2748
    %v3151 = vpack.c.b16 %v2755, %v2749
    %v3152 = vpack.c.b16 %v2762, %v2756
    %v3153 = vpack.c.b16 %v2763, %v2757
    %v3154 = vpack.c.b16 %v2764, %v2758
    %v3155 = vpack.c.b16 %v2765, %v2759
    %v3156 = vpack.c.b16 %v2766, %v2760
    %v3157 = vpack.c.b16 %v2767, %v2761
    %v3158 = vpack.c.b16 %v2774, %v2768
    %v3159 = vpack.c.b16 %v2775, %v2769
    %v3160 = vpack.c.b16 %v2776, %v2770
    %v3161 = vpack.c.b16 %v2777, %v2771
    %v3162 = vpack.c.b16 %v2778, %v2772
    %v3163 = vpack.c.b16 %v2779, %v2773
    %v3164 = vpack.c.b16 %v2786, %v2780
    %v3165 = vpack.c.b16 %v2787, %v2781
    %v3166 = vpack.c.b16 %v2788, %v2782
    %v3167 = vpack.c.b16 %v2789, %v2783
    %v3168 = vpack.c.b16 %v2790, %v2784
    %v3169 = vpack.c.b16 %v2791, %v2785
    %v3170 = vpack.c.b16 %v2798, %v2792
    %v3171 = vpack.c.b16 %v2799, %v2793
    %v3172 = vpack.c.b16 %v2800, %v2794
    %v3173 = vpack.c.b16 %v2801, %v2795
    %v3174 = vpack.c.b16 %v2802, %v2796
    %v3175 = vpack.c.b16 %v2803, %v2797
    %v3176 = vpack.c.b16 %v2810, %v2804
    %v3177 = vpack.c.b16 %v2811, %v2805
    %v3178 = vpack.c.b16 %v2812, %v2806
    %v3179 = vpack.c.b16 %v2813, %v2807
    %v3180 = vpack.c.b16 %v2814, %v2808
    %v3181 = vpack.c.b16 %v2815, %v2809
    %v3182 = vpack.c.b16 %v2822, %v2816
    %v3183 = vpack.c.b16 %v2823, %v2817
    %v3184 = vpack.c.b16 %v2824, %v2818
    %v3185 = vpack.c.b16 %v2825, %v2819
    %v3186 = vpack.c.b16 %v2826, %v2820
    %v3187 = vpack.c.b16 %v2827, %v2821
    %v3188 = vpack.c.b16 %v2834, %v2828
    %v3189 = vpack.c.b16 %v2835, %v2829
    %v3190 = vpack.c.b16 %v2836, %v2830
    %v3191 = vpack.c.b16 %v2837, %v2831
    %v3192 = vpack.c.b16 %v2838, %v2832
    %v3193 = vpack.c.b16 %v2839, %v2833
    %v3194 = vpack.c.b16 %v2846, %v2840
    %v3195 = vpack.c.b16 %v2847, %v2841
    %v3196 = vpack.c.b16 %v2848, %v2842
    %v3197 = vpack.c.b16 %v2849, %v2843
    %v3198 = vpack.c.b16 %v2850, %v2844
    %v3199 = vpack.c.b16 %v2851, %v2845
    %v3200 = vpack.c.b16 %v2858, %v2852
    %v3201 = vpack.c.b16 %v2859, %v2853
    %v3202 = vpack.c.b16 %v2860, %v2854
    %v3203 = vpack.c.b16 %v2861, %v2855
    %v3204 = vpack.c.b16 %v2862, %v2856
    %v3205 = vpack.c.b16 %v2863, %v2857
    %v3206 = vpack.c.b16 %v2870, %v2864
    %v3207 = vpack.c.b16 %v2871, %v2865
    %v3208 = vpack.c.b16 %v2872, %v2866
    %v3209 = vpack.c.b16 %v2873, %v2867
    %v3210 = vpack.c.b16 %v2874, %v2868
    %v3211 = vpack.c.b16 %v2875, %v2869
    %v3212 = vpack.c.b16 %v2882, %v2876
    %v3213 = vpack.c.b16 %v2883, %v2877
    %v3214 = vpack.c.b16 %v2884, %v2878
    %v3215 = vpack.c.b16 %v2885, %v2879
    %v3216 = vpack.c.b16 %v2886, %v2880
    %v3217 = vpack.c.b16 %v2887, %v2881
    %v3218 = vpack.c.b16 %v2894, %v2888
    %v3219 = vpack.c.b16 %v2895, %v2889
    %v3220 = vpack.c.b16 %v2896, %v2890
    %v3221 = vpack.c.b16 %v2897, %v2891
    %v3222 = vpack.c.b16 %v2898, %v2892
    %v3223 = vpack.c.b16 %v2899, %v2893
    %v3224 = vpack.c.b16 %v2906, %v2900
    %v3225 = vpack.c.b16 %v2907, %v2901
    %v3226 = vpack.c.b16 %v2908, %v2902
    %v3227 = vpack.c.b16 %v2909, %v2903
    %v3228 = vpack.c.b16 %v2910, %v2904
    %v3229 = vpack.c.b16 %v2911, %v2905
    %v3230 = vpack.c.b16 %v2918, %v2912
    %v3231 = vpack.c.b16 %v2919, %v2913
    %v3232 = vpack.c.b16 %v2920, %v2914
    %v3233 = vpack.c.b16 %v2921, %v2915
    %v3234 = vpack.c.b16 %v2922, %v2916
    %v3235 = vpack.c.b16 %v2923, %v2917
    %v3236 = vpack.c.b16 %v2930, %v2924
    %v3237 = vpack.c.b16 %v2931, %v2925
    %v3238 = vpack.c.b16 %v2932, %v2926
    %v3239 = vpack.c.b16 %v2933, %v2927
    %v3240 = vpack.c.b16 %v2934, %v2928
    %v3241 = vpack.c.b16 %v2935, %v2929
    %v3242 = vpack.c.b16 %v2942, %v2936
    %v3243 = vpack.c.b16 %v2943, %v2937
    %v3244 = vpack.c.b16 %v2944, %v2938
    %v3245 = vpack.c.b16 %v2945, %v2939
    %v3246 = vpack.c.b16 %v2946, %v2940
    %v3247 = vpack.c.b16 %v2947, %v2941
    %v3248 = vpack.c.b16 %v2954, %v2948
    %v3249 = vpack.c.b16 %v2955, %v2949
    %v3250 = vpack.c.b16 %v2956, %v2950
    %v3251 = vpack.c.b16 %v2957, %v2951
    %v3252 = vpack.c.b16 %v2958, %v2952
    %v3253 = vpack.c.b16 %v2959, %v2953
    %v3254 = vpack.c.b16 %v2966, %v2960
    %v3255 = vpack.c.b16 %v2967, %v2961
    %v3256 = vpack.c.b16 %v2968, %v2962
    %v3257 = vpack.c.b16 %v2969, %v2963
    %v3258 = vpack.c.b16 %v2970, %v2964
    %v3259 = vpack.c.b16 %v2971, %v2965
    %3548 = vmatprep.subr.bf16.mxu0 %v3015
    %3549 = vmatpush1.bf16.msra.mxu0 %v3014
    %3550 = vmatprep.subr.bf16.mxu0 %v3009
    %3551 = vmatpush1.bf16.msra.mxu0 %v3008
    %3552 = vmatprep.subr.bf16.mxu0 %v3003
    %3553 = vmatpush1.bf16.msra.mxu0 %v3002
    %3554 = vmatprep.subr.bf16.mxu0 %v2997
    %3555 = vmatpush1.bf16.msra.mxu0 %v2996
    %3556 = vmatprep.subr.bf16.mxu0 %v2991
    %3557 = vmatpush1.bf16.msra.mxu0 %v2990
    %3558 = vmatprep.subr.bf16.mxu0 %v2985
    %3559 = vmatpush1.bf16.msra.mxu0 %v2984
    %3560 = vmatprep.subr.bf16.mxu0 %v2979
    %3561 = vmatpush1.bf16.msra.mxu0 %v2978
    %3562 = vmatprep.subr.bf16.mxu0 %v2973
    %3563 = vmatpush1.bf16.msra.mxu0 %v2972
    %3564 = vmatprep.subr.bf16.mxu0 %v3063
    %3565 = vmatpush2.bf16.msra.mxu0 %v3062
    %3566 = vmatprep.subr.bf16.mxu0 %v3057
    %3567 = vmatpush2.bf16.msra.mxu0 %v3056
    %3568 = vmatprep.subr.bf16.mxu0 %v3051
    %3569 = vmatpush2.bf16.msra.mxu0 %v3050
    %3570 = vmatprep.subr.bf16.mxu0 %v3045
    %3571 = vmatpush2.bf16.msra.mxu0 %v3044
    %3572 = vmatprep.subr.bf16.mxu0 %v3039
    %3573 = vmatpush2.bf16.msra.mxu0 %v3038
    %3574 = vmatprep.subr.bf16.mxu0 %v3033
    %3575 = vmatpush2.bf16.msra.mxu0 %v3032
    %3576 = vmatprep.subr.bf16.mxu0 %v3027
    %3577 = vmatpush2.bf16.msra.mxu0 %v3026
    %3578 = vmatprep.subr.bf16.mxu0 %v3021
    %3579 = vmatpush2.bf16.msra.mxu0 %v3020
    %3580 = vmatprep.mubr.bf16.mxu0 %v1783
    %3581 = vmatmul.mubr.bf16.gmra.mxu0 %v1782
    %v3582 = vpop.f32.mrf.mxu0
    %v3583 = vadd.f32 %v2081, %v3582
    %v3584 = vpop.f32.mrf.mxu0
    %v3585 = vadd.f32 %v2085, %v3584
    %v3586 = vpop.f32.mrf.mxu0
    %v3587 = vpop.f32.mrf.mxu0
    %3588 = vdwg.mxu0
    %3589 = vmatprep.subr.bf16.mxu0 %v3111
    %3590 = vmatpush1.bf16.msra.mxu0 %v3110
    %3591 = vmatprep.subr.bf16.mxu0 %v3105
    %3592 = vmatpush1.bf16.msra.mxu0 %v3104
    %3593 = vmatprep.subr.bf16.mxu0 %v3099
    %3594 = vmatpush1.bf16.msra.mxu0 %v3098
    %3595 = vmatprep.subr.bf16.mxu0 %v3093
    %3596 = vmatpush1.bf16.msra.mxu0 %v3092
    %3597 = vmatprep.subr.bf16.mxu0 %v3087
    %3598 = vmatpush1.bf16.msra.mxu0 %v3086
    %3599 = vmatprep.subr.bf16.mxu0 %v3081
    %3600 = vmatpush1.bf16.msra.mxu0 %v3080
    %3601 = vmatprep.subr.bf16.mxu0 %v3075
    %3602 = vmatpush1.bf16.msra.mxu0 %v3074
    %3603 = vmatprep.subr.bf16.mxu0 %v3069
    %3604 = vmatpush1.bf16.msra.mxu0 %v3068
    %3605 = vmatprep.subr.bf16.mxu0 %v3159
    %3606 = vmatpush2.bf16.msra.mxu0 %v3158
    %3607 = vmatprep.subr.bf16.mxu0 %v3153
    %3608 = vmatpush2.bf16.msra.mxu0 %v3152
    %3609 = vmatprep.subr.bf16.mxu0 %v3147
    %3610 = vmatpush2.bf16.msra.mxu0 %v3146
    %3611 = vmatprep.subr.bf16.mxu0 %v3141
    %3612 = vmatpush2.bf16.msra.mxu0 %v3140
    %3613 = vmatprep.subr.bf16.mxu0 %v3135
    %3614 = vmatpush2.bf16.msra.mxu0 %v3134
    %3615 = vmatprep.subr.bf16.mxu0 %v3129
    %3616 = vmatpush2.bf16.msra.mxu0 %v3128
    %3617 = vmatprep.subr.bf16.mxu0 %v3123
    %3618 = vmatpush2.bf16.msra.mxu0 %v3122
    %3619 = vmatprep.subr.bf16.mxu0 %v3117
    %3620 = vmatpush2.bf16.msra.mxu0 %v3116
    %3621 = vmatprep.mubr.bf16.mxu0 %v1785
    %3622 = vmatmul.mubr.bf16.gmra.mxu0 %v1784
    %v3623 = vpop.f32.mrf.mxu0
    %v3624 = vadd.f32 %v3583, %v3623
    %v3625 = vpop.f32.mrf.mxu0
    %v3626 = vadd.f32 %v3585, %v3625
    %v3627 = vpop.f32.mrf.mxu0
    %v3628 = vpop.f32.mrf.mxu0
    %3629 = vdwg.mxu0
    %3630 = vmatprep.subr.bf16.mxu0 %v3207
    %3631 = vmatpush1.bf16.msra.mxu0 %v3206
    %3632 = vmatprep.subr.bf16.mxu0 %v3201
    %3633 = vmatpush1.bf16.msra.mxu0 %v3200
    %3634 = vmatprep.subr.bf16.mxu0 %v3195
    %3635 = vmatpush1.bf16.msra.mxu0 %v3194
    %3636 = vmatprep.subr.bf16.mxu0 %v3189
    %3637 = vmatpush1.bf16.msra.mxu0 %v3188
    %3638 = vmatprep.subr.bf16.mxu0 %v3183
    %3639 = vmatpush1.bf16.msra.mxu0 %v3182
    %3640 = vmatprep.subr.bf16.mxu0 %v3177
    %3641 = vmatpush1.bf16.msra.mxu0 %v3176
    %3642 = vmatprep.subr.bf16.mxu0 %v3171
    %3643 = vmatpush1.bf16.msra.mxu0 %v3170
    %3644 = vmatprep.subr.bf16.mxu0 %v3165
    %3645 = vmatpush1.bf16.msra.mxu0 %v3164
    %3646 = vmatprep.subr.bf16.mxu0 %v3255
    %3647 = vmatpush2.bf16.msra.mxu0 %v3254
    %3648 = vmatprep.subr.bf16.mxu0 %v3249
    %3649 = vmatpush2.bf16.msra.mxu0 %v3248
    %3650 = vmatprep.subr.bf16.mxu0 %v3243
    %3651 = vmatpush2.bf16.msra.mxu0 %v3242
    %3652 = vmatprep.subr.bf16.mxu0 %v3237
    %3653 = vmatpush2.bf16.msra.mxu0 %v3236
    %3654 = vmatprep.subr.bf16.mxu0 %v3231
    %3655 = vmatpush2.bf16.msra.mxu0 %v3230
    %3656 = vmatprep.subr.bf16.mxu0 %v3225
    %3657 = vmatpush2.bf16.msra.mxu0 %v3224
    %3658 = vmatprep.subr.bf16.mxu0 %v3219
    %3659 = vmatpush2.bf16.msra.mxu0 %v3218
    %3660 = vmatprep.subr.bf16.mxu0 %v3213
    %3661 = vmatpush2.bf16.msra.mxu0 %v3212
    %3662 = vmatprep.mubr.bf16.mxu0 %v1787
    %3663 = vmatmul.mubr.bf16.gmra.mxu0 %v1786
    %v3664 = vpop.f32.mrf.mxu0
    %v3665 = vadd.f32 %v3624, %v3664
    %v3666 = vpop.f32.mrf.mxu0
    %v3667 = vadd.f32 %v3626, %v3666
    %v3668 = vpop.f32.mrf.mxu0
    %v3669 = vpop.f32.mrf.mxu0
    %3670 = vdwg.mxu0
    %3671 = vmatprep.subr.bf16.mxu0 %v3017
    %3672 = vmatpush1.bf16.msra.mxu0 %v3016
    %3673 = vmatprep.subr.bf16.mxu0 %v3011
    %3674 = vmatpush1.bf16.msra.mxu0 %v3010
    %3675 = vmatprep.subr.bf16.mxu0 %v3005
    %3676 = vmatpush1.bf16.msra.mxu0 %v3004
    %3677 = vmatprep.subr.bf16.mxu0 %v2999
    %3678 = vmatpush1.bf16.msra.mxu0 %v2998
    %3679 = vmatprep.subr.bf16.mxu0 %v2993
    %3680 = vmatpush1.bf16.msra.mxu0 %v2992
    %3681 = vmatprep.subr.bf16.mxu0 %v2987
    %3682 = vmatpush1.bf16.msra.mxu0 %v2986
    %3683 = vmatprep.subr.bf16.mxu0 %v2981
    %3684 = vmatpush1.bf16.msra.mxu0 %v2980
    %3685 = vmatprep.subr.bf16.mxu0 %v2975
    %3686 = vmatpush1.bf16.msra.mxu0 %v2974
    %3687 = vmatprep.subr.bf16.mxu0 %v3065
    %3688 = vmatpush2.bf16.msra.mxu0 %v3064
    %3689 = vmatprep.subr.bf16.mxu0 %v3059
    %3690 = vmatpush2.bf16.msra.mxu0 %v3058
    %3691 = vmatprep.subr.bf16.mxu0 %v3053
    %3692 = vmatpush2.bf16.msra.mxu0 %v3052
    %3693 = vmatprep.subr.bf16.mxu0 %v3047
    %3694 = vmatpush2.bf16.msra.mxu0 %v3046
    %3695 = vmatprep.subr.bf16.mxu0 %v3041
    %3696 = vmatpush2.bf16.msra.mxu0 %v3040
    %3697 = vmatprep.subr.bf16.mxu0 %v3035
    %3698 = vmatpush2.bf16.msra.mxu0 %v3034
    %3699 = vmatprep.subr.bf16.mxu0 %v3029
    %3700 = vmatpush2.bf16.msra.mxu0 %v3028
    %3701 = vmatprep.subr.bf16.mxu0 %v3023
    %3702 = vmatpush2.bf16.msra.mxu0 %v3022
    %3703 = vmatprep.mubr.bf16.mxu0 %v1783
    %3704 = vmatmul.mubr.bf16.gmra.mxu0 %v1782
    %v3705 = vpop.f32.mrf.mxu0
    %v3706 = vadd.f32 %v2089, %v3705
    %v3707 = vpop.f32.mrf.mxu0
    %v3708 = vadd.f32 %v2093, %v3707
    %v3709 = vpop.f32.mrf.mxu0
    %v3710 = vpop.f32.mrf.mxu0
    %3711 = vdwg.mxu0
    %3712 = vmatprep.subr.bf16.mxu0 %v3113
    %3713 = vmatpush1.bf16.msra.mxu0 %v3112
    %3714 = vmatprep.subr.bf16.mxu0 %v3107
    %3715 = vmatpush1.bf16.msra.mxu0 %v3106
    %3716 = vmatprep.subr.bf16.mxu0 %v3101
    %3717 = vmatpush1.bf16.msra.mxu0 %v3100
    %3718 = vmatprep.subr.bf16.mxu0 %v3095
    %3719 = vmatpush1.bf16.msra.mxu0 %v3094
    %3720 = vmatprep.subr.bf16.mxu0 %v3089
    %3721 = vmatpush1.bf16.msra.mxu0 %v3088
    %3722 = vmatprep.subr.bf16.mxu0 %v3083
    %3723 = vmatpush1.bf16.msra.mxu0 %v3082
    %3724 = vmatprep.subr.bf16.mxu0 %v3077
    %3725 = vmatpush1.bf16.msra.mxu0 %v3076
    %3726 = vmatprep.subr.bf16.mxu0 %v3071
    %3727 = vmatpush1.bf16.msra.mxu0 %v3070
    %3728 = vmatprep.subr.bf16.mxu0 %v3161
    %3729 = vmatpush2.bf16.msra.mxu0 %v3160
    %3730 = vmatprep.subr.bf16.mxu0 %v3155
    %3731 = vmatpush2.bf16.msra.mxu0 %v3154
    %3732 = vmatprep.subr.bf16.mxu0 %v3149
    %3733 = vmatpush2.bf16.msra.mxu0 %v3148
    %3734 = vmatprep.subr.bf16.mxu0 %v3143
    %3735 = vmatpush2.bf16.msra.mxu0 %v3142
    %3736 = vmatprep.subr.bf16.mxu0 %v3137
    %3737 = vmatpush2.bf16.msra.mxu0 %v3136
    %3738 = vmatprep.subr.bf16.mxu0 %v3131
    %3739 = vmatpush2.bf16.msra.mxu0 %v3130
    %3740 = vmatprep.subr.bf16.mxu0 %v3125
    %3741 = vmatpush2.bf16.msra.mxu0 %v3124
    %3742 = vmatprep.subr.bf16.mxu0 %v3119
    %3743 = vmatpush2.bf16.msra.mxu0 %v3118
    %3744 = vmatprep.mubr.bf16.mxu0 %v1785
    %3745 = vmatmul.mubr.bf16.gmra.mxu0 %v1784
    %v3746 = vpop.f32.mrf.mxu0
    %v3747 = vadd.f32 %v3706, %v3746
    %v3748 = vpop.f32.mrf.mxu0
    %v3749 = vadd.f32 %v3708, %v3748
    %v3750 = vpop.f32.mrf.mxu0
    %v3751 = vpop.f32.mrf.mxu0
    %3752 = vdwg.mxu0
    %3753 = vmatprep.subr.bf16.mxu0 %v3209
    %3754 = vmatpush1.bf16.msra.mxu0 %v3208
    %3755 = vmatprep.subr.bf16.mxu0 %v3203
    %3756 = vmatpush1.bf16.msra.mxu0 %v3202
    %3757 = vmatprep.subr.bf16.mxu0 %v3197
    %3758 = vmatpush1.bf16.msra.mxu0 %v3196
    %3759 = vmatprep.subr.bf16.mxu0 %v3191
    %3760 = vmatpush1.bf16.msra.mxu0 %v3190
    %3761 = vmatprep.subr.bf16.mxu0 %v3185
    %3762 = vmatpush1.bf16.msra.mxu0 %v3184
    %3763 = vmatprep.subr.bf16.mxu0 %v3179
    %3764 = vmatpush1.bf16.msra.mxu0 %v3178
    %3765 = vmatprep.subr.bf16.mxu0 %v3173
    %3766 = vmatpush1.bf16.msra.mxu0 %v3172
    %3767 = vmatprep.subr.bf16.mxu0 %v3167
    %3768 = vmatpush1.bf16.msra.mxu0 %v3166
    %3769 = vmatprep.subr.bf16.mxu0 %v3257
    %3770 = vmatpush2.bf16.msra.mxu0 %v3256
    %3771 = vmatprep.subr.bf16.mxu0 %v3251
    %3772 = vmatpush2.bf16.msra.mxu0 %v3250
    %3773 = vmatprep.subr.bf16.mxu0 %v3245
    %3774 = vmatpush2.bf16.msra.mxu0 %v3244
    %3775 = vmatprep.subr.bf16.mxu0 %v3239
    %3776 = vmatpush2.bf16.msra.mxu0 %v3238
    %3777 = vmatprep.subr.bf16.mxu0 %v3233
    %3778 = vmatpush2.bf16.msra.mxu0 %v3232
    %3779 = vmatprep.subr.bf16.mxu0 %v3227
    %3780 = vmatpush2.bf16.msra.mxu0 %v3226
    %3781 = vmatprep.subr.bf16.mxu0 %v3221
    %3782 = vmatpush2.bf16.msra.mxu0 %v3220
    %3783 = vmatprep.subr.bf16.mxu0 %v3215
    %3784 = vmatpush2.bf16.msra.mxu0 %v3214
    %3785 = vmatprep.mubr.bf16.mxu0 %v1787
    %3786 = vmatmul.mubr.bf16.gmra.mxu0 %v1786
    %v3787 = vpop.f32.mrf.mxu0
    %v3788 = vadd.f32 %v3747, %v3787
    %v3789 = vpop.f32.mrf.mxu0
    %v3790 = vadd.f32 %v3749, %v3789
    %v3791 = vpop.f32.mrf.mxu0
    %v3792 = vpop.f32.mrf.mxu0
    %3793 = vdwg.mxu0
    %3794 = vmatprep.subr.bf16.mxu0 %v3019
    %3795 = vmatpush1.bf16.msra.mxu0 %v3018
    %3796 = vmatprep.subr.bf16.mxu0 %v3013
    %3797 = vmatpush1.bf16.msra.mxu0 %v3012
    %3798 = vmatprep.subr.bf16.mxu0 %v3007
    %3799 = vmatpush1.bf16.msra.mxu0 %v3006
    %3800 = vmatprep.subr.bf16.mxu0 %v3001
    %3801 = vmatpush1.bf16.msra.mxu0 %v3000
    %3802 = vmatprep.subr.bf16.mxu0 %v2995
    %3803 = vmatpush1.bf16.msra.mxu0 %v2994
    %3804 = vmatprep.subr.bf16.mxu0 %v2989
    %3805 = vmatpush1.bf16.msra.mxu0 %v2988
    %3806 = vmatprep.subr.bf16.mxu0 %v2983
    %3807 = vmatpush1.bf16.msra.mxu0 %v2982
    %3808 = vmatprep.subr.bf16.mxu0 %v2977
    %3809 = vmatpush1.bf16.msra.mxu0 %v2976
    %3810 = vmatprep.subr.bf16.mxu0 %v3067
    %3811 = vmatpush2.bf16.msra.mxu0 %v3066
    %3812 = vmatprep.subr.bf16.mxu0 %v3061
    %3813 = vmatpush2.bf16.msra.mxu0 %v3060
    %3814 = vmatprep.subr.bf16.mxu0 %v3055
    %3815 = vmatpush2.bf16.msra.mxu0 %v3054
    %3816 = vmatprep.subr.bf16.mxu0 %v3049
    %3817 = vmatpush2.bf16.msra.mxu0 %v3048
    %3818 = vmatprep.subr.bf16.mxu0 %v3043
    %3819 = vmatpush2.bf16.msra.mxu0 %v3042
    %3820 = vmatprep.subr.bf16.mxu0 %v3037
    %3821 = vmatpush2.bf16.msra.mxu0 %v3036
    %3822 = vmatprep.subr.bf16.mxu0 %v3031
    %3823 = vmatpush2.bf16.msra.mxu0 %v3030
    %3824 = vmatprep.subr.bf16.mxu0 %v3025
    %3825 = vmatpush2.bf16.msra.mxu0 %v3024
    %3826 = vmatprep.mubr.bf16.mxu0 %v1783
    %3827 = vmatmul.mubr.bf16.gmra.mxu0 %v1782
    %v3828 = vpop.f32.mrf.mxu0
    %v3829 = vadd.f32 %v2097, %v3828
    %v3830 = vpop.f32.mrf.mxu0
    %v3831 = vadd.f32 %v2101, %v3830
    %v3832 = vpop.f32.mrf.mxu0
    %v3833 = vpop.f32.mrf.mxu0
    %3834 = vdwg.mxu0
    %3835 = vmatprep.subr.bf16.mxu0 %v3115
    %3836 = vmatpush1.bf16.msra.mxu0 %v3114
    %3837 = vmatprep.subr.bf16.mxu0 %v3109
    %3838 = vmatpush1.bf16.msra.mxu0 %v3108
    %3839 = vmatprep.subr.bf16.mxu0 %v3103
    %3840 = vmatpush1.bf16.msra.mxu0 %v3102
    %3841 = vmatprep.subr.bf16.mxu0 %v3097
    %3842 = vmatpush1.bf16.msra.mxu0 %v3096
    %3843 = vmatprep.subr.bf16.mxu0 %v3091
    %3844 = vmatpush1.bf16.msra.mxu0 %v3090
    %3845 = vmatprep.subr.bf16.mxu0 %v3085
    %3846 = vmatpush1.bf16.msra.mxu0 %v3084
    %3847 = vmatprep.subr.bf16.mxu0 %v3079
    %3848 = vmatpush1.bf16.msra.mxu0 %v3078
    %3849 = vmatprep.subr.bf16.mxu0 %v3073
    %3850 = vmatpush1.bf16.msra.mxu0 %v3072
    %3851 = vmatprep.subr.bf16.mxu0 %v3163
    %3852 = vmatpush2.bf16.msra.mxu0 %v3162
    %3853 = vmatprep.subr.bf16.mxu0 %v3157
    %3854 = vmatpush2.bf16.msra.mxu0 %v3156
    %3855 = vmatprep.subr.bf16.mxu0 %v3151
    %3856 = vmatpush2.bf16.msra.mxu0 %v3150
    %3857 = vmatprep.subr.bf16.mxu0 %v3145
    %3858 = vmatpush2.bf16.msra.mxu0 %v3144
    %3859 = vmatprep.subr.bf16.mxu0 %v3139
    %3860 = vmatpush2.bf16.msra.mxu0 %v3138
    %3861 = vmatprep.subr.bf16.mxu0 %v3133
    %3862 = vmatpush2.bf16.msra.mxu0 %v3132
    %3863 = vmatprep.subr.bf16.mxu0 %v3127
    %3864 = vmatpush2.bf16.msra.mxu0 %v3126
    %3865 = vmatprep.subr.bf16.mxu0 %v3121
    %3866 = vmatpush2.bf16.msra.mxu0 %v3120
    %3867 = vmatprep.mubr.bf16.mxu0 %v1785
    %3868 = vmatmul.mubr.bf16.gmra.mxu0 %v1784
    %v3869 = vpop.f32.mrf.mxu0
    %v3870 = vadd.f32 %v3829, %v3869
    %v3871 = vpop.f32.mrf.mxu0
    %v3872 = vadd.f32 %v3831, %v3871
    %v3873 = vpop.f32.mrf.mxu0
    %v3874 = vpop.f32.mrf.mxu0
    %3875 = vdwg.mxu0
    %3876 = vmatprep.subr.bf16.mxu0 %v3211
    %3877 = vmatpush1.bf16.msra.mxu0 %v3210
    %3878 = vmatprep.subr.bf16.mxu0 %v3205
    %3879 = vmatpush1.bf16.msra.mxu0 %v3204
    %3880 = vmatprep.subr.bf16.mxu0 %v3199
    %3881 = vmatpush1.bf16.msra.mxu0 %v3198
    %3882 = vmatprep.subr.bf16.mxu0 %v3193
    %3883 = vmatpush1.bf16.msra.mxu0 %v3192
    %3884 = vmatprep.subr.bf16.mxu0 %v3187
    %3885 = vmatpush1.bf16.msra.mxu0 %v3186
    %3886 = vmatprep.subr.bf16.mxu0 %v3181
    %3887 = vmatpush1.bf16.msra.mxu0 %v3180
    %3888 = vmatprep.subr.bf16.mxu0 %v3175
    %3889 = vmatpush1.bf16.msra.mxu0 %v3174
    %3890 = vmatprep.subr.bf16.mxu0 %v3169
    %3891 = vmatpush1.bf16.msra.mxu0 %v3168
    %3892 = vmatprep.subr.bf16.mxu0 %v3259
    %3893 = vmatpush2.bf16.msra.mxu0 %v3258
    %3894 = vmatprep.subr.bf16.mxu0 %v3253
    %3895 = vmatpush2.bf16.msra.mxu0 %v3252
    %3896 = vmatprep.subr.bf16.mxu0 %v3247
    %3897 = vmatpush2.bf16.msra.mxu0 %v3246
    %3898 = vmatprep.subr.bf16.mxu0 %v3241
    %3899 = vmatpush2.bf16.msra.mxu0 %v3240
    %3900 = vmatprep.subr.bf16.mxu0 %v3235
    %3901 = vmatpush2.bf16.msra.mxu0 %v3234
    %3902 = vmatprep.subr.bf16.mxu0 %v3229
    %3903 = vmatpush2.bf16.msra.mxu0 %v3228
    %3904 = vmatprep.subr.bf16.mxu0 %v3223
    %3905 = vmatpush2.bf16.msra.mxu0 %v3222
    %3906 = vmatprep.subr.bf16.mxu0 %v3217
    %3907 = vmatpush2.bf16.msra.mxu0 %v3216
    %3908 = vmatprep.mubr.bf16.mxu0 %v1787
    %3909 = vmatmul.mubr.bf16.gmra.mxu0 %v1786
    %v3910 = vpop.f32.mrf.mxu0
    %v3911 = vadd.f32 %v3870, %v3910
    %v3912 = vpop.f32.mrf.mxu0
    %v3913 = vadd.f32 %v3872, %v3912
    %v3914 = vpop.f32.mrf.mxu0
    %v3915 = vpop.f32.mrf.mxu0
    %3916 = vdwg.mxu0
    %v3917 = vmax.f32 %v3665, 0.0
    %v3918 = vmax.f32 %v3667, 0.0
    %v3919 = vmax.f32 %v3788, 0.0
    %v3920 = vmax.f32 %v3790, 0.0
    %v3921 = vmax.f32 %v3911, 0.0
    %v3922 = vmax.f32 %v3913, 0.0
    %v3923 = vpack.c.bf16 %v3917, %v3917
    %v3924 = vpack.c.bf16 %v3918, %v3918
    %v3925 = vpack.c.bf16 %v3919, %v3919
    %v3926 = vpack.c.bf16 %v3920, %v3920
    %v3927 = vpack.c.bf16 %v3921, %v3921
    %v3928 = vpack.c.bf16 %v3922, %v3922
    %v3929 = vld [vmem:[%s6] sm:$0xf]
    %v3930 = vld [vmem:[%s6 + $0x4] sm:$0xf]
    %v3931 = vld [vmem:[%s6 + $0x8] sm:$0xf]
    %v3932 = vld [vmem:[%s6 + $0xc] sm:$0xf]
    %v3933 = vld [vmem:[%s6 + $0x10] sm:$0xf]
    %v3934 = vld [vmem:[%s6 + $0x14] sm:$0xf]
    %v3935 = vld [vmem:[%s6 + $0x18] sm:$0xf]
    %v3936 = vld [vmem:[%s6 + $0x1c] sm:$0xf]
    %v3937 = vld [vmem:[%s6 + $0x20] sm:$0xf]
    %v3938 = vld [vmem:[%s6 + $0x24] sm:$0xf]
    %v3939 = vld [vmem:[%s6 + $0x28] sm:$0xf]
    %v3940 = vld [vmem:[%s6 + $0x2c] sm:$0xf]
    %v3941 = vld [vmem:[%s6 + $0x30] sm:$0xf]
    %v3942 = vld [vmem:[%s6 + $0x34] sm:$0xf]
    %v3943 = vld [vmem:[%s6 + $0x38] sm:$0xf]
    %v3944 = vld [vmem:[%s6 + $0x3c] sm:$0xf]
    %v3945 = vld [vmem:[%s6 + $0x40] sm:$0xf]
    %v3946 = vld [vmem:[%s6 + $0x44] sm:$0xf]
    %v3947 = vld [vmem:[%s6 + $0x48] sm:$0xf]
    %v3948 = vld [vmem:[%s6 + $0x4c] sm:$0xf]
    %v3949 = vld [vmem:[%s6 + $0x50] sm:$0xf]
    %v3950 = vld [vmem:[%s6 + $0x54] sm:$0xf]
    %v3951 = vld [vmem:[%s6 + $0x58] sm:$0xf]
    %v3952 = vld [vmem:[%s6 + $0x5c] sm:$0xf]
    %v3953 = vld [vmem:[%s6 + $0x60] sm:$0xf]
    %v3954 = vld [vmem:[%s6 + $0x64] sm:$0xf]
    %v3955 = vld [vmem:[%s6 + $0x68] sm:$0xf]
    %v3956 = vld [vmem:[%s6 + $0x6c] sm:$0xf]
    %v3957 = vld [vmem:[%s6 + $0x70] sm:$0xf]
    %v3958 = vld [vmem:[%s6 + $0x74] sm:$0xf]
    %v3959 = vld [vmem:[%s6 + $0x78] sm:$0xf]
    %v3960 = vld [vmem:[%s6 + $0x7c] sm:$0xf]
    %v3961 = vld [vmem:[%s6 + $0x80] sm:$0xf]
    %v3962 = vld [vmem:[%s6 + $0x84] sm:$0xf]
    %v3963 = vld [vmem:[%s6 + $0x88] sm:$0xf]
    %v3964 = vld [vmem:[%s6 + $0x8c] sm:$0xf]
    %v3965 = vld [vmem:[%s6 + $0x90] sm:$0xf]
    %v3966 = vld [vmem:[%s6 + $0x94] sm:$0xf]
    %v3967 = vld [vmem:[%s6 + $0x98] sm:$0xf]
    %v3968 = vld [vmem:[%s6 + $0x9c] sm:$0xf]
    %v3969 = vld [vmem:[%s6 + $0xa0] sm:$0xf]
    %v3970 = vld [vmem:[%s6 + $0xa4] sm:$0xf]
    %v3971 = vld [vmem:[%s6 + $0xa8] sm:$0xf]
    %v3972 = vld [vmem:[%s6 + $0xac] sm:$0xf]
    %v3973 = vld [vmem:[%s6 + $0xb0] sm:$0xf]
    %v3974 = vld [vmem:[%s6 + $0xb4] sm:$0xf]
    %v3975 = vld [vmem:[%s6 + $0xb8] sm:$0xf]
    %v3976 = vld [vmem:[%s6 + $0xbc] sm:$0xf]
    %v3977 = vld [vmem:[%s6 + $0xc0] sm:$0xf]
    %v3978 = vld [vmem:[%s6 + $0xc4] sm:$0xf]
    %v3979 = vld [vmem:[%s6 + $0xc8] sm:$0xf]
    %v3980 = vld [vmem:[%s6 + $0xcc] sm:$0xf]
    %v3981 = vld [vmem:[%s6 + $0xd0] sm:$0xf]
    %v3982 = vld [vmem:[%s6 + $0xd4] sm:$0xf]
    %v3983 = vld [vmem:[%s6 + $0xd8] sm:$0xf]
    %v3984 = vld [vmem:[%s6 + $0xdc] sm:$0xf]
    %v3985 = vld [vmem:[%s6 + $0xe0] sm:$0xf]
    %v3986 = vld [vmem:[%s6 + $0xe4] sm:$0xf]
    %v3987 = vld [vmem:[%s6 + $0xe8] sm:$0xf]
    %v3988 = vld [vmem:[%s6 + $0xec] sm:$0xf]
    %v3989 = vld [vmem:[%s6 + $0xf0] sm:$0xf]
    %v3990 = vld [vmem:[%s6 + $0xf4] sm:$0xf]
    %v3991 = vld [vmem:[%s6 + $0xf8] sm:$0xf]
    %v3992 = vld [vmem:[%s6 + $0xfc] sm:$0xf]
    %v3993 = vld [vmem:[%s6 + $0x100] sm:$0xf]
    %v3994 = vld [vmem:[%s6 + $0x104] sm:$0xf]
    %v3995 = vld [vmem:[%s6 + $0x108] sm:$0xf]
    %v3996 = vld [vmem:[%s6 + $0x10c] sm:$0xf]
    %v3997 = vld [vmem:[%s6 + $0x110] sm:$0xf]
    %v3998 = vld [vmem:[%s6 + $0x114] sm:$0xf]
    %v3999 = vld [vmem:[%s6 + $0x118] sm:$0xf]
    %v4000 = vld [vmem:[%s6 + $0x11c] sm:$0xf]
    %v4001 = vld [vmem:[%s6 + $0x120] sm:$0xf]
    %v4002 = vld [vmem:[%s6 + $0x124] sm:$0xf]
    %v4003 = vld [vmem:[%s6 + $0x128] sm:$0xf]
    %v4004 = vld [vmem:[%s6 + $0x12c] sm:$0xf]
    %v4005 = vld [vmem:[%s6 + $0x130] sm:$0xf]
    %v4006 = vld [vmem:[%s6 + $0x134] sm:$0xf]
    %v4007 = vld [vmem:[%s6 + $0x138] sm:$0xf]
    %v4008 = vld [vmem:[%s6 + $0x13c] sm:$0xf]
    %v4009 = vld [vmem:[%s6 + $0x140] sm:$0xf]
    %v4010 = vld [vmem:[%s6 + $0x144] sm:$0xf]
    %v4011 = vld [vmem:[%s6 + $0x148] sm:$0xf]
    %v4012 = vld [vmem:[%s6 + $0x14c] sm:$0xf]
    %v4013 = vld [vmem:[%s6 + $0x150] sm:$0xf]
    %v4014 = vld [vmem:[%s6 + $0x154] sm:$0xf]
    %v4015 = vld [vmem:[%s6 + $0x158] sm:$0xf]
    %v4016 = vld [vmem:[%s6 + $0x15c] sm:$0xf]
    %v4017 = vld [vmem:[%s6 + $0x160] sm:$0xf]
    %v4018 = vld [vmem:[%s6 + $0x164] sm:$0xf]
    %v4019 = vld [vmem:[%s6 + $0x168] sm:$0xf]
    %v4020 = vld [vmem:[%s6 + $0x16c] sm:$0xf]
    %v4021 = vld [vmem:[%s6 + $0x170] sm:$0xf]
    %v4022 = vld [vmem:[%s6 + $0x174] sm:$0xf]
    %v4023 = vld [vmem:[%s6 + $0x178] sm:$0xf]
    %v4024 = vld [vmem:[%s6 + $0x17c] sm:$0xf]
    %v4025 = vld [vmem:[#allocation15 + $0x1b] sm:$0x1]
    %v4027 = vlaneseq
    %v4028 = vshrl.u32 %v4027, 7
    %v4029 = vsub.s32 0, %v4028
    %v4030 = vrot.slane %v4025, %v4029
    %v4128 = vunpack.c.l.b16 %v3929
    %v4129 = vunpack.c.l.b16 %v3930
    %v4130 = vunpack.c.l.b16 %v3931
    %v4131 = vunpack.c.l.b16 %v3932
    %v4132 = vunpack.c.l.b16 %v3933
    %v4133 = vunpack.c.l.b16 %v3934
    %v4134 = vunpack.c.l.b16 %v3935
    %v4135 = vunpack.c.l.b16 %v3936
    %v4136 = vunpack.c.l.b16 %v3937
    %v4137 = vunpack.c.l.b16 %v3938
    %v4138 = vunpack.c.l.b16 %v3939
    %v4139 = vunpack.c.l.b16 %v3940
    %v4140 = vunpack.c.l.b16 %v3941
    %v4141 = vunpack.c.l.b16 %v3942
    %v4142 = vunpack.c.l.b16 %v3943
    %v4143 = vunpack.c.l.b16 %v3944
    %v4144 = vunpack.c.l.b16 %v3945
    %v4145 = vunpack.c.l.b16 %v3946
    %v4146 = vunpack.c.l.b16 %v3947
    %v4147 = vunpack.c.l.b16 %v3948
    %v4148 = vunpack.c.l.b16 %v3949
    %v4149 = vunpack.c.l.b16 %v3950
    %v4150 = vunpack.c.l.b16 %v3951
    %v4151 = vunpack.c.l.b16 %v3952
    %v4152 = vunpack.c.l.b16 %v3953
    %v4153 = vunpack.c.l.b16 %v3954
    %v4154 = vunpack.c.l.b16 %v3955
    %v4155 = vunpack.c.l.b16 %v3956
    %v4156 = vunpack.c.l.b16 %v3957
    %v4157 = vunpack.c.l.b16 %v3958
    %v4158 = vunpack.c.l.b16 %v3959
    %v4159 = vunpack.c.l.b16 %v3960
    %v4160 = vunpack.c.l.b16 %v3961
    %v4161 = vunpack.c.l.b16 %v3962
    %v4162 = vunpack.c.l.b16 %v3963
    %v4163 = vunpack.c.l.b16 %v3964
    %v4164 = vunpack.c.l.b16 %v3965
    %v4165 = vunpack.c.l.b16 %v3966
    %v4166 = vunpack.c.l.b16 %v3967
    %v4167 = vunpack.c.l.b16 %v3968
    %v4168 = vunpack.c.l.b16 %v3969
    %v4169 = vunpack.c.l.b16 %v3970
    %v4170 = vunpack.c.l.b16 %v3971
    %v4171 = vunpack.c.l.b16 %v3972
    %v4172 = vunpack.c.l.b16 %v3973
    %v4173 = vunpack.c.l.b16 %v3974
    %v4174 = vunpack.c.l.b16 %v3975
    %v4175 = vunpack.c.l.b16 %v3976
    %v4176 = vunpack.c.l.b16 %v3977
    %v4177 = vunpack.c.l.b16 %v3978
    %v4178 = vunpack.c.l.b16 %v3979
    %v4179 = vunpack.c.l.b16 %v3980
    %v4180 = vunpack.c.l.b16 %v3981
    %v4181 = vunpack.c.l.b16 %v3982
    %v4182 = vunpack.c.l.b16 %v3983
    %v4183 = vunpack.c.l.b16 %v3984
    %v4184 = vunpack.c.l.b16 %v3985
    %v4185 = vunpack.c.l.b16 %v3986
    %v4186 = vunpack.c.l.b16 %v3987
    %v4187 = vunpack.c.l.b16 %v3988
    %v4188 = vunpack.c.l.b16 %v3989
    %v4189 = vunpack.c.l.b16 %v3990
    %v4190 = vunpack.c.l.b16 %v3991
    %v4191 = vunpack.c.l.b16 %v3992
    %v4192 = vunpack.c.l.b16 %v3993
    %v4193 = vunpack.c.l.b16 %v3994
    %v4194 = vunpack.c.l.b16 %v3995
    %v4195 = vunpack.c.l.b16 %v3996
    %v4196 = vunpack.c.l.b16 %v3997
    %v4197 = vunpack.c.l.b16 %v3998
    %v4198 = vunpack.c.l.b16 %v3999
    %v4199 = vunpack.c.l.b16 %v4000
    %v4200 = vunpack.c.l.b16 %v4001
    %v4201 = vunpack.c.l.b16 %v4002
    %v4202 = vunpack.c.l.b16 %v4003
    %v4203 = vunpack.c.l.b16 %v4004
    %v4204 = vunpack.c.l.b16 %v4005
    %v4205 = vunpack.c.l.b16 %v4006
    %v4206 = vunpack.c.l.b16 %v4007
    %v4207 = vunpack.c.l.b16 %v4008
    %v4208 = vunpack.c.l.b16 %v4009
    %v4209 = vunpack.c.l.b16 %v4010
    %v4210 = vunpack.c.l.b16 %v4011
    %v4211 = vunpack.c.l.b16 %v4012
    %v4212 = vunpack.c.l.b16 %v4013
    %v4213 = vunpack.c.l.b16 %v4014
    %v4214 = vunpack.c.l.b16 %v4015
    %v4215 = vunpack.c.l.b16 %v4016
    %v4216 = vunpack.c.l.b16 %v4017
    %v4217 = vunpack.c.l.b16 %v4018
    %v4218 = vunpack.c.l.b16 %v4019
    %v4219 = vunpack.c.l.b16 %v4020
    %v4220 = vunpack.c.l.b16 %v4021
    %v4221 = vunpack.c.l.b16 %v4022
    %v4222 = vunpack.c.l.b16 %v4023
    %v4223 = vunpack.c.l.b16 %v4024
    %v4224 = vpack.c.b16 %v4129, %v4128
    %v4225 = vpack.c.b16 %v4131, %v4130
    %v4226 = vpack.c.b16 %v4133, %v4132
    %v4227 = vpack.c.b16 %v4135, %v4134
    %v4228 = vpack.c.b16 %v4137, %v4136
    %v4229 = vpack.c.b16 %v4139, %v4138
    %v4230 = vpack.c.b16 %v4141, %v4140
    %v4231 = vpack.c.b16 %v4143, %v4142
    %v4232 = vpack.c.b16 %v4145, %v4144
    %v4233 = vpack.c.b16 %v4147, %v4146
    %v4234 = vpack.c.b16 %v4149, %v4148
    %v4235 = vpack.c.b16 %v4151, %v4150
    %v4236 = vpack.c.b16 %v4153, %v4152
    %v4237 = vpack.c.b16 %v4155, %v4154
    %v4238 = vpack.c.b16 %v4157, %v4156
    %v4239 = vpack.c.b16 %v4159, %v4158
    %v4240 = vpack.c.b16 %v4161, %v4160
    %v4241 = vpack.c.b16 %v4163, %v4162
    %v4242 = vpack.c.b16 %v4165, %v4164
    %v4243 = vpack.c.b16 %v4167, %v4166
    %v4244 = vpack.c.b16 %v4169, %v4168
    %v4245 = vpack.c.b16 %v4171, %v4170
    %v4246 = vpack.c.b16 %v4173, %v4172
    %v4247 = vpack.c.b16 %v4175, %v4174
    %v4248 = vpack.c.b16 %v4177, %v4176
    %v4249 = vpack.c.b16 %v4179, %v4178
    %v4250 = vpack.c.b16 %v4181, %v4180
    %v4251 = vpack.c.b16 %v4183, %v4182
    %v4252 = vpack.c.b16 %v4185, %v4184
    %v4253 = vpack.c.b16 %v4187, %v4186
    %v4254 = vpack.c.b16 %v4189, %v4188
    %v4255 = vpack.c.b16 %v4191, %v4190
    %v4256 = vpack.c.b16 %v4193, %v4192
    %v4257 = vpack.c.b16 %v4195, %v4194
    %v4258 = vpack.c.b16 %v4197, %v4196
    %v4259 = vpack.c.b16 %v4199, %v4198
    %v4260 = vpack.c.b16 %v4201, %v4200
    %v4261 = vpack.c.b16 %v4203, %v4202
    %v4262 = vpack.c.b16 %v4205, %v4204
    %v4263 = vpack.c.b16 %v4207, %v4206
    %v4264 = vpack.c.b16 %v4209, %v4208
    %v4265 = vpack.c.b16 %v4211, %v4210
    %v4266 = vpack.c.b16 %v4213, %v4212
    %v4267 = vpack.c.b16 %v4215, %v4214
    %v4268 = vpack.c.b16 %v4217, %v4216
    %v4269 = vpack.c.b16 %v4219, %v4218
    %v4270 = vpack.c.b16 %v4221, %v4220
    %v4271 = vpack.c.b16 %v4223, %v4222
    %4320 = vmatprep.subr.bf16.mxu0 0
    %4321 = vmatpush1.bf16.msra.mxu0 %v4231
    %4322 = vmatprep.subr.bf16.mxu0 0
    %4323 = vmatpush1.bf16.msra.mxu0 %v4230
    %4324 = vmatprep.subr.bf16.mxu0 0
    %4325 = vmatpush1.bf16.msra.mxu0 %v4229
    %4326 = vmatprep.subr.bf16.mxu0 0
    %4327 = vmatpush1.bf16.msra.mxu0 %v4228
    %4328 = vmatprep.subr.bf16.mxu0 0
    %4329 = vmatpush1.bf16.msra.mxu0 %v4227
    %4330 = vmatprep.subr.bf16.mxu0 0
    %4331 = vmatpush1.bf16.msra.mxu0 %v4226
    %4332 = vmatprep.subr.bf16.mxu0 0
    %4333 = vmatpush1.bf16.msra.mxu0 %v4225
    %4334 = vmatprep.subr.bf16.mxu0 0
    %4335 = vmatpush1.bf16.msra.mxu0 %v4224
    %4336 = vmatprep.subr.bf16.mxu0 0
    %4337 = vmatpush2.bf16.msra.mxu0 %v4239
    %4338 = vmatprep.subr.bf16.mxu0 0
    %4339 = vmatpush2.bf16.msra.mxu0 %v4238
    %4340 = vmatprep.subr.bf16.mxu0 0
    %4341 = vmatpush2.bf16.msra.mxu0 %v4237
    %4342 = vmatprep.subr.bf16.mxu0 0
    %4343 = vmatpush2.bf16.msra.mxu0 %v4236
    %4344 = vmatprep.subr.bf16.mxu0 0
    %4345 = vmatpush2.bf16.msra.mxu0 %v4235
    %4346 = vmatprep.subr.bf16.mxu0 0
    %4347 = vmatpush2.bf16.msra.mxu0 %v4234
    %4348 = vmatprep.subr.bf16.mxu0 0
    %4349 = vmatpush2.bf16.msra.mxu0 %v4233
    %4350 = vmatprep.subr.bf16.mxu0 0
    %4351 = vmatpush2.bf16.msra.mxu0 %v4232
    %4352 = vmatprep.mubr.bf16.mxu0 %v3924
    %4353 = vmatmul.mubr.bf16.gmra.mxu0 %v3923
    %v4354 = vpop.f32.mrf.mxu0
    %v4355 = vadd.f32 %v4030, %v4354
    %v4356 = vpop.f32.mrf.mxu0
    %v4357 = vpop.f32.mrf.mxu0
    %v4358 = vpop.f32.mrf.mxu0
    %4359 = vdwg.mxu0
    %4360 = vmatprep.subr.bf16.mxu0 0
    %4361 = vmatpush1.bf16.msra.mxu0 %v4247
    %4362 = vmatprep.subr.bf16.mxu0 0
    %4363 = vmatpush1.bf16.msra.mxu0 %v4246
    %4364 = vmatprep.subr.bf16.mxu0 0
    %4365 = vmatpush1.bf16.msra.mxu0 %v4245
    %4366 = vmatprep.subr.bf16.mxu0 0
    %4367 = vmatpush1.bf16.msra.mxu0 %v4244
    %4368 = vmatprep.subr.bf16.mxu0 0
    %4369 = vmatpush1.bf16.msra.mxu0 %v4243
    %4370 = vmatprep.subr.bf16.mxu0 0
    %4371 = vmatpush1.bf16.msra.mxu0 %v4242
    %4372 = vmatprep.subr.bf16.mxu0 0
    %4373 = vmatpush1.bf16.msra.mxu0 %v4241
    %4374 = vmatprep.subr.bf16.mxu0 0
    %4375 = vmatpush1.bf16.msra.mxu0 %v4240
    %4376 = vmatprep.subr.bf16.mxu0 0
    %4377 = vmatpush2.bf16.msra.mxu0 %v4255
    %4378 = vmatprep.subr.bf16.mxu0 0
    %4379 = vmatpush2.bf16.msra.mxu0 %v4254
    %4380 = vmatprep.subr.bf16.mxu0 0
    %4381 = vmatpush2.bf16.msra.mxu0 %v4253
    %4382 = vmatprep.subr.bf16.mxu0 0
    %4383 = vmatpush2.bf16.msra.mxu0 %v4252
    %4384 = vmatprep.subr.bf16.mxu0 0
    %4385 = vmatpush2.bf16.msra.mxu0 %v4251
    %4386 = vmatprep.subr.bf16.mxu0 0
    %4387 = vmatpush2.bf16.msra.mxu0 %v4250
    %4388 = vmatprep.subr.bf16.mxu0 0
    %4389 = vmatpush2.bf16.msra.mxu0 %v4249
    %4390 = vmatprep.subr.bf16.mxu0 0
    %4391 = vmatpush2.bf16.msra.mxu0 %v4248
    %4392 = vmatprep.mubr.bf16.mxu0 %v3926
    %4393 = vmatmul.mubr.bf16.gmra.mxu0 %v3925
    %v4394 = vpop.f32.mrf.mxu0
    %v4395 = vadd.f32 %v4355, %v4394
    %v4396 = vpop.f32.mrf.mxu0
    %v4397 = vpop.f32.mrf.mxu0
    %v4398 = vpop.f32.mrf.mxu0
    %4399 = vdwg.mxu0
    %4400 = vmatprep.subr.bf16.mxu0 0
    %4401 = vmatpush1.bf16.msra.mxu0 %v4263
    %4402 = vmatprep.subr.bf16.mxu0 0
    %4403 = vmatpush1.bf16.msra.mxu0 %v4262
    %4404 = vmatprep.subr.bf16.mxu0 0
    %4405 = vmatpush1.bf16.msra.mxu0 %v4261
    %4406 = vmatprep.subr.bf16.mxu0 0
    %4407 = vmatpush1.bf16.msra.mxu0 %v4260
    %4408 = vmatprep.subr.bf16.mxu0 0
    %4409 = vmatpush1.bf16.msra.mxu0 %v4259
    %4410 = vmatprep.subr.bf16.mxu0 0
    %4411 = vmatpush1.bf16.msra.mxu0 %v4258
    %4412 = vmatprep.subr.bf16.mxu0 0
    %4413 = vmatpush1.bf16.msra.mxu0 %v4257
    %4414 = vmatprep.subr.bf16.mxu0 0
    %4415 = vmatpush1.bf16.msra.mxu0 %v4256
    %4416 = vmatprep.subr.bf16.mxu0 0
    %4417 = vmatpush2.bf16.msra.mxu0 %v4271
    %4418 = vmatprep.subr.bf16.mxu0 0
    %4419 = vmatpush2.bf16.msra.mxu0 %v4270
    %4420 = vmatprep.subr.bf16.mxu0 0
    %4421 = vmatpush2.bf16.msra.mxu0 %v4269
    %4422 = vmatprep.subr.bf16.mxu0 0
    %4423 = vmatpush2.bf16.msra.mxu0 %v4268
    %4424 = vmatprep.subr.bf16.mxu0 0
    %4425 = vmatpush2.bf16.msra.mxu0 %v4267
    %4426 = vmatprep.subr.bf16.mxu0 0
    %4427 = vmatpush2.bf16.msra.mxu0 %v4266
    %4428 = vmatprep.subr.bf16.mxu0 0
    %4429 = vmatpush2.bf16.msra.mxu0 %v4265
    %4430 = vmatprep.subr.bf16.mxu0 0
    %4431 = vmatpush2.bf16.msra.mxu0 %v4264
    %4432 = vmatprep.mubr.bf16.mxu0 %v3928
    %4433 = vmatmul.mubr.bf16.gmra.mxu0 %v3927
    %v4434 = vpop.f32.mrf.mxu0
    %v4435 = vadd.f32 %v4395, %v4434
    %v4436 = vpop.f32.mrf.mxu0
    %v4437 = vpop.f32.mrf.mxu0
    %v4438 = vpop.f32.mrf.mxu0
    %4439 = vdwg.mxu0
    %v4440 = vtanh.pop %v4435
    %v4441 = vpack.c.bf16 %v4440, %v4440
    %v4442 = vld [vmem:[#allocation12] sm:$0xff]
    %v4443 = vld [vmem:[#allocation12 + $0x8] sm:$0xff]
    %v4444 = vld [vmem:[#allocation12 + $0x10] sm:$0xff]
    %v4445 = vld [vmem:[#allocation12 + $0x18] sm:$0xff]
    %v4446 = vld [vmem:[#allocation13] sm:$0xff]
    %v4447 = vld [vmem:[#allocation13 + $0x8] sm:$0xff]
    %v4448 = vld [vmem:[#allocation13 + $0x10] sm:$0xff]
    %v4449 = vld [vmem:[#allocation13 + $0x18] sm:$0xff]
    %v4454 = vunpack.c.l.b16 %v4446
    %v4455 = vunpack.c.h.b16 %v4446
    %v4456 = vunpack.c.l.b16 %v4447
    %v4457 = vunpack.c.h.b16 %v4447
    %v4458 = vunpack.c.l.b16 %v4448
    %v4459 = vunpack.c.h.b16 %v4448
    %v4460 = vunpack.c.l.b16 %v4449
    %v4461 = vunpack.c.h.b16 %v4449
    %v4462 = vpack.c.b16 %v4458, %v4454
    %v4463 = vpack.c.b16 %v4459, %v4455
    %v4464 = vpack.c.b16 %v4460, %v4456
    %v4465 = vpack.c.b16 %v4461, %v4457
    %v4471 = vsel %vm209, %v4441, 0
    %4473 = vmatprep.subr.bf16.mxu0 0
    %4474 = vmatpush1.bf16.msra.mxu0 0
    %4475 = vmatprep.subr.bf16.mxu0 0
    %4476 = vmatpush1.bf16.msra.mxu0 0
    %4477 = vmatprep.subr.bf16.mxu0 0
    %4478 = vmatpush1.bf16.msra.mxu0 0
    %4479 = vmatprep.subr.bf16.mxu0 0
    %4480 = vmatpush1.bf16.msra.mxu0 0
    %4481 = vmatprep.subr.bf16.mxu0 0
    %4482 = vmatpush1.bf16.msra.mxu0 0
    %4483 = vmatprep.subr.bf16.mxu0 0
    %4484 = vmatpush1.bf16.msra.mxu0 0
    %4485 = vmatprep.subr.bf16.mxu0 0
    %4486 = vmatpush1.bf16.msra.mxu0 0
    %4487 = vmatprep.subr.bf16.mxu0 %v4463
    %4488 = vmatpush1.bf16.msra.mxu0 %v4462
    %4489 = vmatprep.subr.bf16.mxu0 0
    %4490 = vmatpush2.bf16.msra.mxu0 0
    %4491 = vmatprep.subr.bf16.mxu0 0
    %4492 = vmatpush2.bf16.msra.mxu0 0
    %4493 = vmatprep.subr.bf16.mxu0 0
    %4494 = vmatpush2.bf16.msra.mxu0 0
    %4495 = vmatprep.subr.bf16.mxu0 0
    %4496 = vmatpush2.bf16.msra.mxu0 0
    %4497 = vmatprep.subr.bf16.mxu0 0
    %4498 = vmatpush2.bf16.msra.mxu0 0
    %4499 = vmatprep.subr.bf16.mxu0 0
    %4500 = vmatpush2.bf16.msra.mxu0 0
    %4501 = vmatprep.subr.bf16.mxu0 0
    %4502 = vmatpush2.bf16.msra.mxu0 0
    %4503 = vmatprep.subr.bf16.mxu0 0
    %4504 = vmatpush2.bf16.msra.mxu0 0
    %4505 = vmatprep.mubr.bf16.mxu0 0
    %4506 = vmatmul.mubr.bf16.gmra.mxu0 %v4471
    %v4507 = vpop.f32.mrf.mxu0
    %v4508 = vadd.f32 0.0, %v4507
    %v4509 = vpop.f32.mrf.mxu0
    %v4510 = vadd.f32 0.0, %v4509
    %v4511 = vpop.f32.mrf.mxu0
    %v4512 = vpop.f32.mrf.mxu0
    %4513 = vdwg.mxu0
    %4514 = vmatprep.subr.bf16.mxu0 0
    %4515 = vmatpush1.bf16.msra.mxu0 0
    %4516 = vmatprep.subr.bf16.mxu0 0
    %4517 = vmatpush1.bf16.msra.mxu0 0
    %4518 = vmatprep.subr.bf16.mxu0 0
    %4519 = vmatpush1.bf16.msra.mxu0 0
    %4520 = vmatprep.subr.bf16.mxu0 0
    %4521 = vmatpush1.bf16.msra.mxu0 0
    %4522 = vmatprep.subr.bf16.mxu0 0
    %4523 = vmatpush1.bf16.msra.mxu0 0
    %4524 = vmatprep.subr.bf16.mxu0 0
    %4525 = vmatpush1.bf16.msra.mxu0 0
    %4526 = vmatprep.subr.bf16.mxu0 0
    %4527 = vmatpush1.bf16.msra.mxu0 0
    %4528 = vmatprep.subr.bf16.mxu0 %v4465
    %4529 = vmatpush1.bf16.msra.mxu0 %v4464
    %4530 = vmatprep.subr.bf16.mxu0 0
    %4531 = vmatpush2.bf16.msra.mxu0 0
    %4532 = vmatprep.subr.bf16.mxu0 0
    %4533 = vmatpush2.bf16.msra.mxu0 0
    %4534 = vmatprep.subr.bf16.mxu0 0
    %4535 = vmatpush2.bf16.msra.mxu0 0
    %4536 = vmatprep.subr.bf16.mxu0 0
    %4537 = vmatpush2.bf16.msra.mxu0 0
    %4538 = vmatprep.subr.bf16.mxu0 0
    %4539 = vmatpush2.bf16.msra.mxu0 0
    %4540 = vmatprep.subr.bf16.mxu0 0
    %4541 = vmatpush2.bf16.msra.mxu0 0
    %4542 = vmatprep.subr.bf16.mxu0 0
    %4543 = vmatpush2.bf16.msra.mxu0 0
    %4544 = vmatprep.subr.bf16.mxu0 0
    %4545 = vmatpush2.bf16.msra.mxu0 0
    %4546 = vmatprep.mubr.bf16.mxu0 0
    %4547 = vmatmul.mubr.bf16.gmra.mxu0 %v4471
    %v4548 = vpop.f32.mrf.mxu0
    %v4549 = vadd.f32 0.0, %v4548
    %v4550 = vpop.f32.mrf.mxu0
    %v4551 = vadd.f32 0.0, %v4550
    %v4552 = vpop.f32.mrf.mxu0
    %v4553 = vpop.f32.mrf.mxu0
    %4554 = vdwg.mxu0
    %v4559 = vunpack.c.l.b16 %v4442
    %v4560 = vunpack.c.h.b16 %v4442
    %v4561 = vunpack.c.l.b16 %v4443
    %v4562 = vunpack.c.h.b16 %v4443
    %v4563 = vunpack.c.l.b16 %v4444
    %v4564 = vunpack.c.h.b16 %v4444
    %v4565 = vunpack.c.l.b16 %v4445
    %v4566 = vunpack.c.h.b16 %v4445
    %v4567 = vpack.c.b16 %v4563, %v4559
    %v4568 = vpack.c.b16 %v4564, %v4560
    %v4569 = vpack.c.b16 %v4565, %v4561
    %v4570 = vpack.c.b16 %v4566, %v4562
    %4575 = vmatprep.subr.bf16.mxu0 0
    %4576 = vmatpush1.bf16.msra.mxu0 0
    %4577 = vmatprep.subr.bf16.mxu0 0
    %4578 = vmatpush1.bf16.msra.mxu0 0
    %4579 = vmatprep.subr.bf16.mxu0 0
    %4580 = vmatpush1.bf16.msra.mxu0 0
    %4581 = vmatprep.subr.bf16.mxu0 0
    %4582 = vmatpush1.bf16.msra.mxu0 0
    %4583 = vmatprep.subr.bf16.mxu0 0
    %4584 = vmatpush1.bf16.msra.mxu0 0
    %4585 = vmatprep.subr.bf16.mxu0 0
    %4586 = vmatpush1.bf16.msra.mxu0 0
    %4587 = vmatprep.subr.bf16.mxu0 0
    %4588 = vmatpush1.bf16.msra.mxu0 0
    %4589 = vmatprep.subr.bf16.mxu0 %v4568
    %4590 = vmatpush1.bf16.msra.mxu0 %v4567
    %4591 = vmatprep.subr.bf16.mxu0 0
    %4592 = vmatpush2.bf16.msra.mxu0 0
    %4593 = vmatprep.subr.bf16.mxu0 0
    %4594 = vmatpush2.bf16.msra.mxu0 0
    %4595 = vmatprep.subr.bf16.mxu0 0
    %4596 = vmatpush2.bf16.msra.mxu0 0
    %4597 = vmatprep.subr.bf16.mxu0 0
    %4598 = vmatpush2.bf16.msra.mxu0 0
    %4599 = vmatprep.subr.bf16.mxu0 0
    %4600 = vmatpush2.bf16.msra.mxu0 0
    %4601 = vmatprep.subr.bf16.mxu0 0
    %4602 = vmatpush2.bf16.msra.mxu0 0
    %4603 = vmatprep.subr.bf16.mxu0 0
    %4604 = vmatpush2.bf16.msra.mxu0 0
    %4605 = vmatprep.subr.bf16.mxu0 0
    %4606 = vmatpush2.bf16.msra.mxu0 0
    %4607 = vmatprep.mubr.bf16.mxu0 0
    %4608 = vmatmul.mubr.bf16.gmra.mxu0 %v211
    %v4609 = vpop.f32.mrf.mxu0
    %v4610 = vadd.f32 %v4508, %v4609
    %v4611 = vpop.f32.mrf.mxu0
    %v4612 = vadd.f32 %v4510, %v4611
    %v4613 = vpop.f32.mrf.mxu0
    %v4614 = vpop.f32.mrf.mxu0
    %4615 = vdwg.mxu0
    %4616 = vmatprep.subr.bf16.mxu0 0
    %4617 = vmatpush1.bf16.msra.mxu0 0
    %4618 = vmatprep.subr.bf16.mxu0 0
    %4619 = vmatpush1.bf16.msra.mxu0 0
    %4620 = vmatprep.subr.bf16.mxu0 0
    %4621 = vmatpush1.bf16.msra.mxu0 0
    %4622 = vmatprep.subr.bf16.mxu0 0
    %4623 = vmatpush1.bf16.msra.mxu0 0
    %4624 = vmatprep.subr.bf16.mxu0 0
    %4625 = vmatpush1.bf16.msra.mxu0 0
    %4626 = vmatprep.subr.bf16.mxu0 0
    %4627 = vmatpush1.bf16.msra.mxu0 0
    %4628 = vmatprep.subr.bf16.mxu0 0
    %4629 = vmatpush1.bf16.msra.mxu0 0
    %4630 = vmatprep.subr.bf16.mxu0 %v4570
    %4631 = vmatpush1.bf16.msra.mxu0 %v4569
    %4632 = vmatprep.subr.bf16.mxu0 0
    %4633 = vmatpush2.bf16.msra.mxu0 0
    %4634 = vmatprep.subr.bf16.mxu0 0
    %4635 = vmatpush2.bf16.msra.mxu0 0
    %4636 = vmatprep.subr.bf16.mxu0 0
    %4637 = vmatpush2.bf16.msra.mxu0 0
    %4638 = vmatprep.subr.bf16.mxu0 0
    %4639 = vmatpush2.bf16.msra.mxu0 0
    %4640 = vmatprep.subr.bf16.mxu0 0
    %4641 = vmatpush2.bf16.msra.mxu0 0
    %4642 = vmatprep.subr.bf16.mxu0 0
    %4643 = vmatpush2.bf16.msra.mxu0 0
    %4644 = vmatprep.subr.bf16.mxu0 0
    %4645 = vmatpush2.bf16.msra.mxu0 0
    %4646 = vmatprep.subr.bf16.mxu0 0
    %4647 = vmatpush2.bf16.msra.mxu0 0
    %4648 = vmatprep.mubr.bf16.mxu0 0
    %4649 = vmatmul.mubr.bf16.gmra.mxu0 %v211
    %v4650 = vpop.f32.mrf.mxu0
    %v4651 = vadd.f32 %v4549, %v4650
    %v4652 = vpop.f32.mrf.mxu0
    %v4653 = vadd.f32 %v4551, %v4652
    %v4654 = vpop.f32.mrf.mxu0
    %v4655 = vpop.f32.mrf.mxu0
    %4656 = vdwg.mxu0
    %v4657 = vld [vmem:[#allocation15 + $0x13] sm:$0xf]
    %v4659 = vlaneseq
    %v4660 = vshrl.u32 %v4659, 7
    %v4661 = vsub.s32 0, %v4660
    %v4662 = vrot.slane %v4657, %v4661
    %v4663 = vlaneseq
    %v4664 = vshrl.u32 %v4663, 7
    %v4665 = vsub.s32 1, %v4664
    %v4666 = vrot.slane %v4657, %v4665
    %v4667 = vlaneseq
    %v4668 = vshrl.u32 %v4667, 7
    %v4669 = vsub.s32 2, %v4668
    %v4670 = vrot.slane %v4657, %v4669
    %v4671 = vlaneseq
    %v4672 = vshrl.u32 %v4671, 7
    %v4673 = vsub.s32 3, %v4672
    %v4674 = vrot.slane %v4657, %v4673
    %v4679 = vadd.f32 %v4610, %v4662
    %v4680 = vadd.f32 %v4612, %v4666
    %v4681 = vadd.f32 %v4651, %v4670
    %v4682 = vadd.f32 %v4653, %v4674
    %v4683 = vmax.f32 %v4679, 0.0
    %v4684 = vmax.f32 %v4680, 0.0
    %v4685 = vmax.f32 %v4681, 0.0
    %v4686 = vmax.f32 %v4682, 0.0
    // Predicated region
    $region90: #{_lambda_.1} parent=1 // pred_check
      %p4687 = pneg %p134
    $region91: #{_lambda_.1} parent=1 // pred_check_branch
      %4689 = sbr.rel (%p4687) target = $region93
    $region92: #{_lambda_.1} parent=1 // pred_region
      %s4690 = scalar_lea.sflag [#allocation4], 1
      %s4691 = smul.u32 4, 64
      %s4692 = smul.u32 %s4691, 3
      %s4693 = sshll.u32 %s4692, 4
      %4694 = dma.done %s4690, %s4693
    $region93: #{_lambda_.1} parent=1 // pred_fallthru
      _
    %v4695 = vpack.c.bf16 %v4683, %v4683
    %v4696 = vpack.c.bf16 %v4684, %v4684
    %v4697 = vpack.c.bf16 %v4685, %v4685
    %v4698 = vpack.c.bf16 %v4686, %v4686
    %v4699 = vld [vmem:[#allocation3] sm:$0xff]
    %v4700 = vld [vmem:[#allocation3 + $0x8] sm:$0xf]
    %v4701 = vld [vmem:[#allocation3 + $0xc] sm:$0xff]
    %v4702 = vld [vmem:[#allocation3 + $0x14] sm:$0xf]
    %v4703 = vld [vmem:[#allocation3 + $0x18] sm:$0xff]
    %v4704 = vld [vmem:[#allocation3 + $0x20] sm:$0xf]
    %v4705 = vld [vmem:[#allocation3 + $0x24] sm:$0xff]
    %v4706 = vld [vmem:[#allocation3 + $0x2c] sm:$0xf]
    %v4707 = vld [vmem:[#allocation3 + $0x30] sm:$0xff]
    %v4708 = vld [vmem:[#allocation3 + $0x38] sm:$0xf]
    %v4709 = vld [vmem:[#allocation3 + $0x3c] sm:$0xff]
    %v4710 = vld [vmem:[#allocation3 + $0x44] sm:$0xf]
    %v4711 = vld [vmem:[#allocation3 + $0x48] sm:$0xff]
    %v4712 = vld [vmem:[#allocation3 + $0x50] sm:$0xf]
    %v4713 = vld [vmem:[#allocation3 + $0x54] sm:$0xff]
    %v4714 = vld [vmem:[#allocation3 + $0x5c] sm:$0xf]
    %v4715 = vld [vmem:[#allocation3 + $0x60] sm:$0xff]
    %v4716 = vld [vmem:[#allocation3 + $0x68] sm:$0xf]
    %v4717 = vld [vmem:[#allocation3 + $0x6c] sm:$0xff]
    %v4718 = vld [vmem:[#allocation3 + $0x74] sm:$0xf]
    %v4719 = vld [vmem:[#allocation3 + $0x78] sm:$0xff]
    %v4720 = vld [vmem:[#allocation3 + $0x80] sm:$0xf]
    %v4721 = vld [vmem:[#allocation3 + $0x84] sm:$0xff]
    %v4722 = vld [vmem:[#allocation3 + $0x8c] sm:$0xf]
    %v4723 = vld [vmem:[#allocation3 + $0x90] sm:$0xff]
    %v4724 = vld [vmem:[#allocation3 + $0x98] sm:$0xf]
    %v4725 = vld [vmem:[#allocation3 + $0x9c] sm:$0xff]
    %v4726 = vld [vmem:[#allocation3 + $0xa4] sm:$0xf]
    %v4727 = vld [vmem:[#allocation3 + $0xa8] sm:$0xff]
    %v4728 = vld [vmem:[#allocation3 + $0xb0] sm:$0xf]
    %v4729 = vld [vmem:[#allocation3 + $0xb4] sm:$0xff]
    %v4730 = vld [vmem:[#allocation3 + $0xbc] sm:$0xf]
    %v4731 = vld [vmem:[#allocation3 + $0xc0] sm:$0xff]
    %v4732 = vld [vmem:[#allocation3 + $0xc8] sm:$0xf]
    %v4733 = vld [vmem:[#allocation3 + $0xcc] sm:$0xff]
    %v4734 = vld [vmem:[#allocation3 + $0xd4] sm:$0xf]
    %v4735 = vld [vmem:[#allocation3 + $0xd8] sm:$0xff]
    %v4736 = vld [vmem:[#allocation3 + $0xe0] sm:$0xf]
    %v4737 = vld [vmem:[#allocation3 + $0xe4] sm:$0xff]
    %v4738 = vld [vmem:[#allocation3 + $0xec] sm:$0xf]
    %v4739 = vld [vmem:[#allocation3 + $0xf0] sm:$0xff]
    %v4740 = vld [vmem:[#allocation3 + $0xf8] sm:$0xf]
    %v4741 = vld [vmem:[#allocation3 + $0xfc] sm:$0xff]
    %v4742 = vld [vmem:[#allocation3 + $0x104] sm:$0xf]
    %v4743 = vld [vmem:[#allocation3 + $0x108] sm:$0xff]
    %v4744 = vld [vmem:[#allocation3 + $0x110] sm:$0xf]
    %v4745 = vld [vmem:[#allocation3 + $0x114] sm:$0xff]
    %v4746 = vld [vmem:[#allocation3 + $0x11c] sm:$0xf]
    %v4747 = vld [vmem:[#allocation3 + $0x120] sm:$0xff]
    %v4748 = vld [vmem:[#allocation3 + $0x128] sm:$0xf]
    %v4749 = vld [vmem:[#allocation3 + $0x12c] sm:$0xff]
    %v4750 = vld [vmem:[#allocation3 + $0x134] sm:$0xf]
    %v4751 = vld [vmem:[#allocation3 + $0x138] sm:$0xff]
    %v4752 = vld [vmem:[#allocation3 + $0x140] sm:$0xf]
    %v4753 = vld [vmem:[#allocation3 + $0x144] sm:$0xff]
    %v4754 = vld [vmem:[#allocation3 + $0x14c] sm:$0xf]
    %v4755 = vld [vmem:[#allocation3 + $0x150] sm:$0xff]
    %v4756 = vld [vmem:[#allocation3 + $0x158] sm:$0xf]
    %v4757 = vld [vmem:[#allocation3 + $0x15c] sm:$0xff]
    %v4758 = vld [vmem:[#allocation3 + $0x164] sm:$0xf]
    %v4759 = vld [vmem:[#allocation3 + $0x168] sm:$0xff]
    %v4760 = vld [vmem:[#allocation3 + $0x170] sm:$0xf]
    %v4761 = vld [vmem:[#allocation3 + $0x174] sm:$0xff]
    %v4762 = vld [vmem:[#allocation3 + $0x17c] sm:$0xf]
    %v4763 = vld [vmem:[#allocation3 + $0x180] sm:$0xff]
    %v4764 = vld [vmem:[#allocation3 + $0x188] sm:$0xf]
    %v4765 = vld [vmem:[#allocation3 + $0x18c] sm:$0xff]
    %v4766 = vld [vmem:[#allocation3 + $0x194] sm:$0xf]
    %v4767 = vld [vmem:[#allocation3 + $0x198] sm:$0xff]
    %v4768 = vld [vmem:[#allocation3 + $0x1a0] sm:$0xf]
    %v4769 = vld [vmem:[#allocation3 + $0x1a4] sm:$0xff]
    %v4770 = vld [vmem:[#allocation3 + $0x1ac] sm:$0xf]
    %v4771 = vld [vmem:[#allocation3 + $0x1b0] sm:$0xff]
    %v4772 = vld [vmem:[#allocation3 + $0x1b8] sm:$0xf]
    %v4773 = vld [vmem:[#allocation3 + $0x1bc] sm:$0xff]
    %v4774 = vld [vmem:[#allocation3 + $0x1c4] sm:$0xf]
    %v4775 = vld [vmem:[#allocation3 + $0x1c8] sm:$0xff]
    %v4776 = vld [vmem:[#allocation3 + $0x1d0] sm:$0xf]
    %v4777 = vld [vmem:[#allocation3 + $0x1d4] sm:$0xff]
    %v4778 = vld [vmem:[#allocation3 + $0x1dc] sm:$0xf]
    %v4779 = vld [vmem:[#allocation3 + $0x1e0] sm:$0xff]
    %v4780 = vld [vmem:[#allocation3 + $0x1e8] sm:$0xf]
    %v4781 = vld [vmem:[#allocation3 + $0x1ec] sm:$0xff]
    %v4782 = vld [vmem:[#allocation3 + $0x1f4] sm:$0xf]
    %v4783 = vld [vmem:[#allocation3 + $0x1f8] sm:$0xff]
    %v4784 = vld [vmem:[#allocation3 + $0x200] sm:$0xf]
    %v4785 = vld [vmem:[#allocation3 + $0x204] sm:$0xff]
    %v4786 = vld [vmem:[#allocation3 + $0x20c] sm:$0xf]
    %v4787 = vld [vmem:[#allocation3 + $0x210] sm:$0xff]
    %v4788 = vld [vmem:[#allocation3 + $0x218] sm:$0xf]
    %v4789 = vld [vmem:[#allocation3 + $0x21c] sm:$0xff]
    %v4790 = vld [vmem:[#allocation3 + $0x224] sm:$0xf]
    %v4791 = vld [vmem:[#allocation3 + $0x228] sm:$0xff]
    %v4792 = vld [vmem:[#allocation3 + $0x230] sm:$0xf]
    %v4793 = vld [vmem:[#allocation3 + $0x234] sm:$0xff]
    %v4794 = vld [vmem:[#allocation3 + $0x23c] sm:$0xf]
    %v4795 = vld [vmem:[#allocation3 + $0x240] sm:$0xff]
    %v4796 = vld [vmem:[#allocation3 + $0x248] sm:$0xf]
    %v4797 = vld [vmem:[#allocation3 + $0x24c] sm:$0xff]
    %v4798 = vld [vmem:[#allocation3 + $0x254] sm:$0xf]
    %v4799 = vld [vmem:[#allocation3 + $0x258] sm:$0xff]
    %v4800 = vld [vmem:[#allocation3 + $0x260] sm:$0xf]
    %v4801 = vld [vmem:[#allocation3 + $0x264] sm:$0xff]
    %v4802 = vld [vmem:[#allocation3 + $0x26c] sm:$0xf]
    %v4803 = vld [vmem:[#allocation3 + $0x270] sm:$0xff]
    %v4804 = vld [vmem:[#allocation3 + $0x278] sm:$0xf]
    %v4805 = vld [vmem:[#allocation3 + $0x27c] sm:$0xff]
    %v4806 = vld [vmem:[#allocation3 + $0x284] sm:$0xf]
    %v4807 = vld [vmem:[#allocation3 + $0x288] sm:$0xff]
    %v4808 = vld [vmem:[#allocation3 + $0x290] sm:$0xf]
    %v4809 = vld [vmem:[#allocation3 + $0x294] sm:$0xff]
    %v4810 = vld [vmem:[#allocation3 + $0x29c] sm:$0xf]
    %v4811 = vld [vmem:[#allocation3 + $0x2a0] sm:$0xff]
    %v4812 = vld [vmem:[#allocation3 + $0x2a8] sm:$0xf]
    %v4813 = vld [vmem:[#allocation3 + $0x2ac] sm:$0xff]
    %v4814 = vld [vmem:[#allocation3 + $0x2b4] sm:$0xf]
    %v4815 = vld [vmem:[#allocation3 + $0x2b8] sm:$0xff]
    %v4816 = vld [vmem:[#allocation3 + $0x2c0] sm:$0xf]
    %v4817 = vld [vmem:[#allocation3 + $0x2c4] sm:$0xff]
    %v4818 = vld [vmem:[#allocation3 + $0x2cc] sm:$0xf]
    %v4819 = vld [vmem:[#allocation3 + $0x2d0] sm:$0xff]
    %v4820 = vld [vmem:[#allocation3 + $0x2d8] sm:$0xf]
    %v4821 = vld [vmem:[#allocation3 + $0x2dc] sm:$0xff]
    %v4822 = vld [vmem:[#allocation3 + $0x2e4] sm:$0xf]
    %v4823 = vld [vmem:[#allocation3 + $0x2e8] sm:$0xff]
    %v4824 = vld [vmem:[#allocation3 + $0x2f0] sm:$0xf]
    %v4825 = vld [vmem:[#allocation3 + $0x2f4] sm:$0xff]
    %v4826 = vld [vmem:[#allocation3 + $0x2fc] sm:$0xf]
    %v4827 = vld [vmem:[#allocation15 + $0x17] sm:$0x7]
    %v4829 = vlaneseq
    %v4830 = vshrl.u32 %v4829, 7
    %v4831 = vsub.s32 0, %v4830
    %v4832 = vrot.slane %v4827, %v4831
    %v4833 = vlaneseq
    %v4834 = vshrl.u32 %v4833, 7
    %v4835 = vsub.s32 1, %v4834
    %v4836 = vrot.slane %v4827, %v4835
    %v4837 = vlaneseq
    %v4838 = vshrl.u32 %v4837, 7
    %v4839 = vsub.s32 2, %v4838
    %v4840 = vrot.slane %v4827, %v4839
    %v4972 = vunpack.c.l.b16 %v4699
    %v4973 = vunpack.c.h.b16 %v4699
    %v4974 = vunpack.c.l.b16 %v4700
    %v4975 = vunpack.c.l.b16 %v4701
    %v4976 = vunpack.c.h.b16 %v4701
    %v4977 = vunpack.c.l.b16 %v4702
    %v4978 = vunpack.c.l.b16 %v4703
    %v4979 = vunpack.c.h.b16 %v4703
    %v4980 = vunpack.c.l.b16 %v4704
    %v4981 = vunpack.c.l.b16 %v4705
    %v4982 = vunpack.c.h.b16 %v4705
    %v4983 = vunpack.c.l.b16 %v4706
    %v4984 = vunpack.c.l.b16 %v4707
    %v4985 = vunpack.c.h.b16 %v4707
    %v4986 = vunpack.c.l.b16 %v4708
    %v4987 = vunpack.c.l.b16 %v4709
    %v4988 = vunpack.c.h.b16 %v4709
    %v4989 = vunpack.c.l.b16 %v4710
    %v4990 = vunpack.c.l.b16 %v4711
    %v4991 = vunpack.c.h.b16 %v4711
    %v4992 = vunpack.c.l.b16 %v4712
    %v4993 = vunpack.c.l.b16 %v4713
    %v4994 = vunpack.c.h.b16 %v4713
    %v4995 = vunpack.c.l.b16 %v4714
    %v4996 = vunpack.c.l.b16 %v4715
    %v4997 = vunpack.c.h.b16 %v4715
    %v4998 = vunpack.c.l.b16 %v4716
    %v4999 = vunpack.c.l.b16 %v4717
    %v5000 = vunpack.c.h.b16 %v4717
    %v5001 = vunpack.c.l.b16 %v4718
    %v5002 = vunpack.c.l.b16 %v4719
    %v5003 = vunpack.c.h.b16 %v4719
    %v5004 = vunpack.c.l.b16 %v4720
    %v5005 = vunpack.c.l.b16 %v4721
    %v5006 = vunpack.c.h.b16 %v4721
    %v5007 = vunpack.c.l.b16 %v4722
    %v5008 = vunpack.c.l.b16 %v4723
    %v5009 = vunpack.c.h.b16 %v4723
    %v5010 = vunpack.c.l.b16 %v4724
    %v5011 = vunpack.c.l.b16 %v4725
    %v5012 = vunpack.c.h.b16 %v4725
    %v5013 = vunpack.c.l.b16 %v4726
    %v5014 = vunpack.c.l.b16 %v4727
    %v5015 = vunpack.c.h.b16 %v4727
    %v5016 = vunpack.c.l.b16 %v4728
    %v5017 = vunpack.c.l.b16 %v4729
    %v5018 = vunpack.c.h.b16 %v4729
    %v5019 = vunpack.c.l.b16 %v4730
    %v5020 = vunpack.c.l.b16 %v4731
    %v5021 = vunpack.c.h.b16 %v4731
    %v5022 = vunpack.c.l.b16 %v4732
    %v5023 = vunpack.c.l.b16 %v4733
    %v5024 = vunpack.c.h.b16 %v4733
    %v5025 = vunpack.c.l.b16 %v4734
    %v5026 = vunpack.c.l.b16 %v4735
    %v5027 = vunpack.c.h.b16 %v4735
    %v5028 = vunpack.c.l.b16 %v4736
    %v5029 = vunpack.c.l.b16 %v4737
    %v5030 = vunpack.c.h.b16 %v4737
    %v5031 = vunpack.c.l.b16 %v4738
    %v5032 = vunpack.c.l.b16 %v4739
    %v5033 = vunpack.c.h.b16 %v4739
    %v5034 = vunpack.c.l.b16 %v4740
    %v5035 = vunpack.c.l.b16 %v4741
    %v5036 = vunpack.c.h.b16 %v4741
    %v5037 = vunpack.c.l.b16 %v4742
    %v5038 = vunpack.c.l.b16 %v4743
    %v5039 = vunpack.c.h.b16 %v4743
    %v5040 = vunpack.c.l.b16 %v4744
    %v5041 = vunpack.c.l.b16 %v4745
    %v5042 = vunpack.c.h.b16 %v4745
    %v5043 = vunpack.c.l.b16 %v4746
    %v5044 = vunpack.c.l.b16 %v4747
    %v5045 = vunpack.c.h.b16 %v4747
    %v5046 = vunpack.c.l.b16 %v4748
    %v5047 = vunpack.c.l.b16 %v4749
    %v5048 = vunpack.c.h.b16 %v4749
    %v5049 = vunpack.c.l.b16 %v4750
    %v5050 = vunpack.c.l.b16 %v4751
    %v5051 = vunpack.c.h.b16 %v4751
    %v5052 = vunpack.c.l.b16 %v4752
    %v5053 = vunpack.c.l.b16 %v4753
    %v5054 = vunpack.c.h.b16 %v4753
    %v5055 = vunpack.c.l.b16 %v4754
    %v5056 = vunpack.c.l.b16 %v4755
    %v5057 = vunpack.c.h.b16 %v4755
    %v5058 = vunpack.c.l.b16 %v4756
    %v5059 = vunpack.c.l.b16 %v4757
    %v5060 = vunpack.c.h.b16 %v4757
    %v5061 = vunpack.c.l.b16 %v4758
    %v5062 = vunpack.c.l.b16 %v4759
    %v5063 = vunpack.c.h.b16 %v4759
    %v5064 = vunpack.c.l.b16 %v4760
    %v5065 = vunpack.c.l.b16 %v4761
    %v5066 = vunpack.c.h.b16 %v4761
    %v5067 = vunpack.c.l.b16 %v4762
    %v5068 = vunpack.c.l.b16 %v4763
    %v5069 = vunpack.c.h.b16 %v4763
    %v5070 = vunpack.c.l.b16 %v4764
    %v5071 = vunpack.c.l.b16 %v4765
    %v5072 = vunpack.c.h.b16 %v4765
    %v5073 = vunpack.c.l.b16 %v4766
    %v5074 = vunpack.c.l.b16 %v4767
    %v5075 = vunpack.c.h.b16 %v4767
    %v5076 = vunpack.c.l.b16 %v4768
    %v5077 = vunpack.c.l.b16 %v4769
    %v5078 = vunpack.c.h.b16 %v4769
    %v5079 = vunpack.c.l.b16 %v4770
    %v5080 = vunpack.c.l.b16 %v4771
    %v5081 = vunpack.c.h.b16 %v4771
    %v5082 = vunpack.c.l.b16 %v4772
    %v5083 = vunpack.c.l.b16 %v4773
    %v5084 = vunpack.c.h.b16 %v4773
    %v5085 = vunpack.c.l.b16 %v4774
    %v5086 = vunpack.c.l.b16 %v4775
    %v5087 = vunpack.c.h.b16 %v4775
    %v5088 = vunpack.c.l.b16 %v4776
    %v5089 = vunpack.c.l.b16 %v4777
    %v5090 = vunpack.c.h.b16 %v4777
    %v5091 = vunpack.c.l.b16 %v4778
    %v5092 = vunpack.c.l.b16 %v4779
    %v5093 = vunpack.c.h.b16 %v4779
    %v5094 = vunpack.c.l.b16 %v4780
    %v5095 = vunpack.c.l.b16 %v4781
    %v5096 = vunpack.c.h.b16 %v4781
    %v5097 = vunpack.c.l.b16 %v4782
    %v5098 = vunpack.c.l.b16 %v4783
    %v5099 = vunpack.c.h.b16 %v4783
    %v5100 = vunpack.c.l.b16 %v4784
    %v5101 = vunpack.c.l.b16 %v4785
    %v5102 = vunpack.c.h.b16 %v4785
    %v5103 = vunpack.c.l.b16 %v4786
    %v5104 = vunpack.c.l.b16 %v4787
    %v5105 = vunpack.c.h.b16 %v4787
    %v5106 = vunpack.c.l.b16 %v4788
    %v5107 = vunpack.c.l.b16 %v4789
    %v5108 = vunpack.c.h.b16 %v4789
    %v5109 = vunpack.c.l.b16 %v4790
    %v5110 = vunpack.c.l.b16 %v4791
    %v5111 = vunpack.c.h.b16 %v4791
    %v5112 = vunpack.c.l.b16 %v4792
    %v5113 = vunpack.c.l.b16 %v4793
    %v5114 = vunpack.c.h.b16 %v4793
    %v5115 = vunpack.c.l.b16 %v4794
    %v5116 = vunpack.c.l.b16 %v4795
    %v5117 = vunpack.c.h.b16 %v4795
    %v5118 = vunpack.c.l.b16 %v4796
    %v5119 = vunpack.c.l.b16 %v4797
    %v5120 = vunpack.c.h.b16 %v4797
    %v5121 = vunpack.c.l.b16 %v4798
    %v5122 = vunpack.c.l.b16 %v4799
    %v5123 = vunpack.c.h.b16 %v4799
    %v5124 = vunpack.c.l.b16 %v4800
    %v5125 = vunpack.c.l.b16 %v4801
    %v5126 = vunpack.c.h.b16 %v4801
    %v5127 = vunpack.c.l.b16 %v4802
    %v5128 = vunpack.c.l.b16 %v4803
    %v5129 = vunpack.c.h.b16 %v4803
    %v5130 = vunpack.c.l.b16 %v4804
    %v5131 = vunpack.c.l.b16 %v4805
    %v5132 = vunpack.c.h.b16 %v4805
    %v5133 = vunpack.c.l.b16 %v4806
    %v5134 = vunpack.c.l.b16 %v4807
    %v5135 = vunpack.c.h.b16 %v4807
    %v5136 = vunpack.c.l.b16 %v4808
    %v5137 = vunpack.c.l.b16 %v4809
    %v5138 = vunpack.c.h.b16 %v4809
    %v5139 = vunpack.c.l.b16 %v4810
    %v5140 = vunpack.c.l.b16 %v4811
    %v5141 = vunpack.c.h.b16 %v4811
    %v5142 = vunpack.c.l.b16 %v4812
    %v5143 = vunpack.c.l.b16 %v4813
    %v5144 = vunpack.c.h.b16 %v4813
    %v5145 = vunpack.c.l.b16 %v4814
    %v5146 = vunpack.c.l.b16 %v4815
    %v5147 = vunpack.c.h.b16 %v4815
    %v5148 = vunpack.c.l.b16 %v4816
    %v5149 = vunpack.c.l.b16 %v4817
    %v5150 = vunpack.c.h.b16 %v4817
    %v5151 = vunpack.c.l.b16 %v4818
    %v5152 = vunpack.c.l.b16 %v4819
    %v5153 = vunpack.c.h.b16 %v4819
    %v5154 = vunpack.c.l.b16 %v4820
    %v5155 = vunpack.c.l.b16 %v4821
    %v5156 = vunpack.c.h.b16 %v4821
    %v5157 = vunpack.c.l.b16 %v4822
    %v5158 = vunpack.c.l.b16 %v4823
    %v5159 = vunpack.c.h.b16 %v4823
    %v5160 = vunpack.c.l.b16 %v4824
    %v5161 = vunpack.c.l.b16 %v4825
    %v5162 = vunpack.c.h.b16 %v4825
    %v5163 = vunpack.c.l.b16 %v4826
    %v5164 = vpack.c.b16 %v4975, %v4972
    %v5165 = vpack.c.b16 %v4976, %v4973
    %v5166 = vpack.c.b16 %v4977, %v4974
    %v5167 = vpack.c.b16 %v4981, %v4978
    %v5168 = vpack.c.b16 %v4982, %v4979
    %v5169 = vpack.c.b16 %v4983, %v4980
    %v5170 = vpack.c.b16 %v4987, %v4984
    %v5171 = vpack.c.b16 %v4988, %v4985
    %v5172 = vpack.c.b16 %v4989, %v4986
    %v5173 = vpack.c.b16 %v4993, %v4990
    %v5174 = vpack.c.b16 %v4994, %v4991
    %v5175 = vpack.c.b16 %v4995, %v4992
    %v5176 = vpack.c.b16 %v4999, %v4996
    %v5177 = vpack.c.b16 %v5000, %v4997
    %v5178 = vpack.c.b16 %v5001, %v4998
    %v5179 = vpack.c.b16 %v5005, %v5002
    %v5180 = vpack.c.b16 %v5006, %v5003
    %v5181 = vpack.c.b16 %v5007, %v5004
    %v5182 = vpack.c.b16 %v5011, %v5008
    %v5183 = vpack.c.b16 %v5012, %v5009
    %v5184 = vpack.c.b16 %v5013, %v5010
    %v5185 = vpack.c.b16 %v5017, %v5014
    %v5186 = vpack.c.b16 %v5018, %v5015
    %v5187 = vpack.c.b16 %v5019, %v5016
    %v5188 = vpack.c.b16 %v5023, %v5020
    %v5189 = vpack.c.b16 %v5024, %v5021
    %v5190 = vpack.c.b16 %v5025, %v5022
    %v5191 = vpack.c.b16 %v5029, %v5026
    %v5192 = vpack.c.b16 %v5030, %v5027
    %v5193 = vpack.c.b16 %v5031, %v5028
    %v5194 = vpack.c.b16 %v5035, %v5032
    %v5195 = vpack.c.b16 %v5036, %v5033
    %v5196 = vpack.c.b16 %v5037, %v5034
    %v5197 = vpack.c.b16 %v5041, %v5038
    %v5198 = vpack.c.b16 %v5042, %v5039
    %v5199 = vpack.c.b16 %v5043, %v5040
    %v5200 = vpack.c.b16 %v5047, %v5044
    %v5201 = vpack.c.b16 %v5048, %v5045
    %v5202 = vpack.c.b16 %v5049, %v5046
    %v5203 = vpack.c.b16 %v5053, %v5050
    %v5204 = vpack.c.b16 %v5054, %v5051
    %v5205 = vpack.c.b16 %v5055, %v5052
    %v5206 = vpack.c.b16 %v5059, %v5056
    %v5207 = vpack.c.b16 %v5060, %v5057
    %v5208 = vpack.c.b16 %v5061, %v5058
    %v5209 = vpack.c.b16 %v5065, %v5062
    %v5210 = vpack.c.b16 %v5066, %v5063
    %v5211 = vpack.c.b16 %v5067, %v5064
    %v5212 = vpack.c.b16 %v5071, %v5068
    %v5213 = vpack.c.b16 %v5072, %v5069
    %v5214 = vpack.c.b16 %v5073, %v5070
    %v5215 = vpack.c.b16 %v5077, %v5074
    %v5216 = vpack.c.b16 %v5078, %v5075
    %v5217 = vpack.c.b16 %v5079, %v5076
    %v5218 = vpack.c.b16 %v5083, %v5080
    %v5219 = vpack.c.b16 %v5084, %v5081
    %v5220 = vpack.c.b16 %v5085, %v5082
    %v5221 = vpack.c.b16 %v5089, %v5086
    %v5222 = vpack.c.b16 %v5090, %v5087
    %v5223 = vpack.c.b16 %v5091, %v5088
    %v5224 = vpack.c.b16 %v5095, %v5092
    %v5225 = vpack.c.b16 %v5096, %v5093
    %v5226 = vpack.c.b16 %v5097, %v5094
    %v5227 = vpack.c.b16 %v5101, %v5098
    %v5228 = vpack.c.b16 %v5102, %v5099
    %v5229 = vpack.c.b16 %v5103, %v5100
    %v5230 = vpack.c.b16 %v5107, %v5104
    %v5231 = vpack.c.b16 %v5108, %v5105
    %v5232 = vpack.c.b16 %v5109, %v5106
    %v5233 = vpack.c.b16 %v5113, %v5110
    %v5234 = vpack.c.b16 %v5114, %v5111
    %v5235 = vpack.c.b16 %v5115, %v5112
    %v5236 = vpack.c.b16 %v5119, %v5116
    %v5237 = vpack.c.b16 %v5120, %v5117
    %v5238 = vpack.c.b16 %v5121, %v5118
    %v5239 = vpack.c.b16 %v5125, %v5122
    %v5240 = vpack.c.b16 %v5126, %v5123
    %v5241 = vpack.c.b16 %v5127, %v5124
    %v5242 = vpack.c.b16 %v5131, %v5128
    %v5243 = vpack.c.b16 %v5132, %v5129
    %v5244 = vpack.c.b16 %v5133, %v5130
    %v5245 = vpack.c.b16 %v5137, %v5134
    %v5246 = vpack.c.b16 %v5138, %v5135
    %v5247 = vpack.c.b16 %v5139, %v5136
    %v5248 = vpack.c.b16 %v5143, %v5140
    %v5249 = vpack.c.b16 %v5144, %v5141
    %v5250 = vpack.c.b16 %v5145, %v5142
    %v5251 = vpack.c.b16 %v5149, %v5146
    %v5252 = vpack.c.b16 %v5150, %v5147
    %v5253 = vpack.c.b16 %v5151, %v5148
    %v5254 = vpack.c.b16 %v5155, %v5152
    %v5255 = vpack.c.b16 %v5156, %v5153
    %v5256 = vpack.c.b16 %v5157, %v5154
    %v5257 = vpack.c.b16 %v5161, %v5158
    %v5258 = vpack.c.b16 %v5162, %v5159
    %v5259 = vpack.c.b16 %v5163, %v5160
    %5356 = vmatprep.subr.bf16.mxu0 %v5186
    %5357 = vmatpush1.bf16.msra.mxu0 %v5185
    %5358 = vmatprep.subr.bf16.mxu0 %v5183
    %5359 = vmatpush1.bf16.msra.mxu0 %v5182
    %5360 = vmatprep.subr.bf16.mxu0 %v5180
    %5361 = vmatpush1.bf16.msra.mxu0 %v5179
    %5362 = vmatprep.subr.bf16.mxu0 %v5177
    %5363 = vmatpush1.bf16.msra.mxu0 %v5176
    %5364 = vmatprep.subr.bf16.mxu0 %v5174
    %5365 = vmatpush1.bf16.msra.mxu0 %v5173
    %5366 = vmatprep.subr.bf16.mxu0 %v5171
    %5367 = vmatpush1.bf16.msra.mxu0 %v5170
    %5368 = vmatprep.subr.bf16.mxu0 %v5168
    %5369 = vmatpush1.bf16.msra.mxu0 %v5167
    %5370 = vmatprep.subr.bf16.mxu0 %v5165
    %5371 = vmatpush1.bf16.msra.mxu0 %v5164
    %5372 = vmatprep.subr.bf16.mxu0 %v5210
    %5373 = vmatpush2.bf16.msra.mxu0 %v5209
    %5374 = vmatprep.subr.bf16.mxu0 %v5207
    %5375 = vmatpush2.bf16.msra.mxu0 %v5206
    %5376 = vmatprep.subr.bf16.mxu0 %v5204
    %5377 = vmatpush2.bf16.msra.mxu0 %v5203
    %5378 = vmatprep.subr.bf16.mxu0 %v5201
    %5379 = vmatpush2.bf16.msra.mxu0 %v5200
    %5380 = vmatprep.subr.bf16.mxu0 %v5198
    %5381 = vmatpush2.bf16.msra.mxu0 %v5197
    %5382 = vmatprep.subr.bf16.mxu0 %v5195
    %5383 = vmatpush2.bf16.msra.mxu0 %v5194
    %5384 = vmatprep.subr.bf16.mxu0 %v5192
    %5385 = vmatpush2.bf16.msra.mxu0 %v5191
    %5386 = vmatprep.subr.bf16.mxu0 %v5189
    %5387 = vmatpush2.bf16.msra.mxu0 %v5188
    %5388 = vmatprep.mubr.bf16.mxu0 %v4696
    %5389 = vmatmul.mubr.bf16.gmra.mxu0 %v4695
    %v5390 = vpop.f32.mrf.mxu0
    %v5391 = vadd.f32 %v4832, %v5390
    %v5392 = vpop.f32.mrf.mxu0
    %v5393 = vadd.f32 %v4836, %v5392
    %v5394 = vpop.f32.mrf.mxu0
    %v5395 = vpop.f32.mrf.mxu0
    %5396 = vdwg.mxu0
    %5397 = vmatprep.subr.bf16.mxu0 %v5234
    %5398 = vmatpush1.bf16.msra.mxu0 %v5233
    %5399 = vmatprep.subr.bf16.mxu0 %v5231
    %5400 = vmatpush1.bf16.msra.mxu0 %v5230
    %5401 = vmatprep.subr.bf16.mxu0 %v5228
    %5402 = vmatpush1.bf16.msra.mxu0 %v5227
    %5403 = vmatprep.subr.bf16.mxu0 %v5225
    %5404 = vmatpush1.bf16.msra.mxu0 %v5224
    %5405 = vmatprep.subr.bf16.mxu0 %v5222
    %5406 = vmatpush1.bf16.msra.mxu0 %v5221
    %5407 = vmatprep.subr.bf16.mxu0 %v5219
    %5408 = vmatpush1.bf16.msra.mxu0 %v5218
    %5409 = vmatprep.subr.bf16.mxu0 %v5216
    %5410 = vmatpush1.bf16.msra.mxu0 %v5215
    %5411 = vmatprep.subr.bf16.mxu0 %v5213
    %5412 = vmatpush1.bf16.msra.mxu0 %v5212
    %5413 = vmatprep.subr.bf16.mxu0 %v5258
    %5414 = vmatpush2.bf16.msra.mxu0 %v5257
    %5415 = vmatprep.subr.bf16.mxu0 %v5255
    %5416 = vmatpush2.bf16.msra.mxu0 %v5254
    %5417 = vmatprep.subr.bf16.mxu0 %v5252
    %5418 = vmatpush2.bf16.msra.mxu0 %v5251
    %5419 = vmatprep.subr.bf16.mxu0 %v5249
    %5420 = vmatpush2.bf16.msra.mxu0 %v5248
    %5421 = vmatprep.subr.bf16.mxu0 %v5246
    %5422 = vmatpush2.bf16.msra.mxu0 %v5245
    %5423 = vmatprep.subr.bf16.mxu0 %v5243
    %5424 = vmatpush2.bf16.msra.mxu0 %v5242
    %5425 = vmatprep.subr.bf16.mxu0 %v5240
    %5426 = vmatpush2.bf16.msra.mxu0 %v5239
    %5427 = vmatprep.subr.bf16.mxu0 %v5237
    %5428 = vmatpush2.bf16.msra.mxu0 %v5236
    %5429 = vmatprep.mubr.bf16.mxu0 %v4698
    %5430 = vmatmul.mubr.bf16.gmra.mxu0 %v4697
    %v5431 = vpop.f32.mrf.mxu0
    %v5432 = vadd.f32 %v5391, %v5431
    %v5433 = vpop.f32.mrf.mxu0
    %v5434 = vadd.f32 %v5393, %v5433
    %v5435 = vpop.f32.mrf.mxu0
    %v5436 = vpop.f32.mrf.mxu0
    %5437 = vdwg.mxu0
    %5438 = vmatprep.subr.bf16.mxu0 0
    %5439 = vmatpush1.bf16.msra.mxu0 %v5187
    %5440 = vmatprep.subr.bf16.mxu0 0
    %5441 = vmatpush1.bf16.msra.mxu0 %v5184
    %5442 = vmatprep.subr.bf16.mxu0 0
    %5443 = vmatpush1.bf16.msra.mxu0 %v5181
    %5444 = vmatprep.subr.bf16.mxu0 0
    %5445 = vmatpush1.bf16.msra.mxu0 %v5178
    %5446 = vmatprep.subr.bf16.mxu0 0
    %5447 = vmatpush1.bf16.msra.mxu0 %v5175
    %5448 = vmatprep.subr.bf16.mxu0 0
    %5449 = vmatpush1.bf16.msra.mxu0 %v5172
    %5450 = vmatprep.subr.bf16.mxu0 0
    %5451 = vmatpush1.bf16.msra.mxu0 %v5169
    %5452 = vmatprep.subr.bf16.mxu0 0
    %5453 = vmatpush1.bf16.msra.mxu0 %v5166
    %5454 = vmatprep.subr.bf16.mxu0 0
    %5455 = vmatpush2.bf16.msra.mxu0 %v5211
    %5456 = vmatprep.subr.bf16.mxu0 0
    %5457 = vmatpush2.bf16.msra.mxu0 %v5208
    %5458 = vmatprep.subr.bf16.mxu0 0
    %5459 = vmatpush2.bf16.msra.mxu0 %v5205
    %5460 = vmatprep.subr.bf16.mxu0 0
    %5461 = vmatpush2.bf16.msra.mxu0 %v5202
    %5462 = vmatprep.subr.bf16.mxu0 0
    %5463 = vmatpush2.bf16.msra.mxu0 %v5199
    %5464 = vmatprep.subr.bf16.mxu0 0
    %5465 = vmatpush2.bf16.msra.mxu0 %v5196
    %5466 = vmatprep.subr.bf16.mxu0 0
    %5467 = vmatpush2.bf16.msra.mxu0 %v5193
    %5468 = vmatprep.subr.bf16.mxu0 0
    %5469 = vmatpush2.bf16.msra.mxu0 %v5190
    %5470 = vmatprep.mubr.bf16.mxu0 %v4696
    %5471 = vmatmul.mubr.bf16.gmra.mxu0 %v4695
    %v5472 = vpop.f32.mrf.mxu0
    %v5473 = vadd.f32 %v4840, %v5472
    %v5474 = vpop.f32.mrf.mxu0
    %v5475 = vpop.f32.mrf.mxu0
    %v5476 = vpop.f32.mrf.mxu0
    %5477 = vdwg.mxu0
    %5478 = vmatprep.subr.bf16.mxu0 0
    %5479 = vmatpush1.bf16.msra.mxu0 %v5235
    %5480 = vmatprep.subr.bf16.mxu0 0
    %5481 = vmatpush1.bf16.msra.mxu0 %v5232
    %5482 = vmatprep.subr.bf16.mxu0 0
    %5483 = vmatpush1.bf16.msra.mxu0 %v5229
    %5484 = vmatprep.subr.bf16.mxu0 0
    %5485 = vmatpush1.bf16.msra.mxu0 %v5226
    %5486 = vmatprep.subr.bf16.mxu0 0
    %5487 = vmatpush1.bf16.msra.mxu0 %v5223
    %5488 = vmatprep.subr.bf16.mxu0 0
    %5489 = vmatpush1.bf16.msra.mxu0 %v5220
    %5490 = vmatprep.subr.bf16.mxu0 0
    %5491 = vmatpush1.bf16.msra.mxu0 %v5217
    %5492 = vmatprep.subr.bf16.mxu0 0
    %5493 = vmatpush1.bf16.msra.mxu0 %v5214
    %5494 = vmatprep.subr.bf16.mxu0 0
    %5495 = vmatpush2.bf16.msra.mxu0 %v5259
    %5496 = vmatprep.subr.bf16.mxu0 0
    %5497 = vmatpush2.bf16.msra.mxu0 %v5256
    %5498 = vmatprep.subr.bf16.mxu0 0
    %5499 = vmatpush2.bf16.msra.mxu0 %v5253
    %5500 = vmatprep.subr.bf16.mxu0 0
    %5501 = vmatpush2.bf16.msra.mxu0 %v5250
    %5502 = vmatprep.subr.bf16.mxu0 0
    %5503 = vmatpush2.bf16.msra.mxu0 %v5247
    %5504 = vmatprep.subr.bf16.mxu0 0
    %5505 = vmatpush2.bf16.msra.mxu0 %v5244
    %5506 = vmatprep.subr.bf16.mxu0 0
    %5507 = vmatpush2.bf16.msra.mxu0 %v5241
    %5508 = vmatprep.subr.bf16.mxu0 0
    %5509 = vmatpush2.bf16.msra.mxu0 %v5238
    %5510 = vmatprep.mubr.bf16.mxu0 %v4698
    %5511 = vmatmul.mubr.bf16.gmra.mxu0 %v4697
    %v5512 = vpop.f32.mrf.mxu0
    %v5513 = vadd.f32 %v5473, %v5512
    %v5514 = vpop.f32.mrf.mxu0
    %v5515 = vpop.f32.mrf.mxu0
    %v5516 = vpop.f32.mrf.mxu0
    %5517 = vdwg.mxu0
    %v5518 = vmax.f32 %v5432, 0.0
    %v5519 = vmax.f32 %v5434, 0.0
    %v5520 = vmax.f32 %v5513, 0.0
    %v5521 = vpack.c.bf16 %v5518, %v5518
    %v5522 = vpack.c.bf16 %v5519, %v5519
    %v5523 = vpack.c.bf16 %v5520, %v5520
    %v5524 = vld [vmem:[%s9] sm:$0xf]
    %v5525 = vld [vmem:[%s9 + $0x4] sm:$0xf]
    %v5526 = vld [vmem:[%s9 + $0x8] sm:$0xf]
    %v5527 = vld [vmem:[%s9 + $0xc] sm:$0xf]
    %v5528 = vld [vmem:[%s9 + $0x10] sm:$0xf]
    %v5529 = vld [vmem:[%s9 + $0x14] sm:$0xf]
    %v5530 = vld [vmem:[%s9 + $0x18] sm:$0xf]
    %v5531 = vld [vmem:[%s9 + $0x1c] sm:$0xf]
    %v5532 = vld [vmem:[%s9 + $0x20] sm:$0xf]
    %v5533 = vld [vmem:[%s9 + $0x24] sm:$0xf]
    %v5534 = vld [vmem:[%s9 + $0x28] sm:$0xf]
    %v5535 = vld [vmem:[%s9 + $0x2c] sm:$0xf]
    %v5536 = vld [vmem:[%s9 + $0x30] sm:$0xf]
    %v5537 = vld [vmem:[%s9 + $0x34] sm:$0xf]
    %v5538 = vld [vmem:[%s9 + $0x38] sm:$0xf]
    %v5539 = vld [vmem:[%s9 + $0x3c] sm:$0xf]
    %v5540 = vld [vmem:[%s9 + $0x40] sm:$0xf]
    %v5541 = vld [vmem:[%s9 + $0x44] sm:$0xf]
    %v5542 = vld [vmem:[%s9 + $0x48] sm:$0xf]
    %v5543 = vld [vmem:[%s9 + $0x4c] sm:$0xf]
    %v5544 = vld [vmem:[%s9 + $0x50] sm:$0xf]
    %v5545 = vld [vmem:[%s9 + $0x54] sm:$0xf]
    %v5546 = vld [vmem:[%s9 + $0x58] sm:$0xf]
    %v5547 = vld [vmem:[%s9 + $0x5c] sm:$0xf]
    %v5548 = vld [vmem:[%s9 + $0x60] sm:$0xf]
    %v5549 = vld [vmem:[%s9 + $0x64] sm:$0xf]
    %v5550 = vld [vmem:[%s9 + $0x68] sm:$0xf]
    %v5551 = vld [vmem:[%s9 + $0x6c] sm:$0xf]
    %v5552 = vld [vmem:[%s9 + $0x70] sm:$0xf]
    %v5553 = vld [vmem:[%s9 + $0x74] sm:$0xf]
    %v5554 = vld [vmem:[%s9 + $0x78] sm:$0xf]
    %v5555 = vld [vmem:[%s9 + $0x7c] sm:$0xf]
    %v5556 = vld [vmem:[%s9 + $0x80] sm:$0xf]
    %v5557 = vld [vmem:[%s9 + $0x84] sm:$0xf]
    %v5558 = vld [vmem:[%s9 + $0x88] sm:$0xf]
    %v5559 = vld [vmem:[%s9 + $0x8c] sm:$0xf]
    %v5560 = vld [vmem:[%s9 + $0x90] sm:$0xf]
    %v5561 = vld [vmem:[%s9 + $0x94] sm:$0xf]
    %v5562 = vld [vmem:[%s9 + $0x98] sm:$0xf]
    %v5563 = vld [vmem:[%s9 + $0x9c] sm:$0xf]
    %v5564 = vld [vmem:[%s9 + $0xa0] sm:$0xf]
    %v5565 = vld [vmem:[%s9 + $0xa4] sm:$0xf]
    %v5566 = vld [vmem:[%s9 + $0xa8] sm:$0xf]
    %v5567 = vld [vmem:[%s9 + $0xac] sm:$0xf]
    %v5568 = vld [vmem:[%s9 + $0xb0] sm:$0xf]
    %v5569 = vld [vmem:[%s9 + $0xb4] sm:$0xf]
    %v5570 = vld [vmem:[%s9 + $0xb8] sm:$0xf]
    %v5571 = vld [vmem:[%s9 + $0xbc] sm:$0xf]
    %v5572 = vld [vmem:[#allocation15 + $0x1c] sm:$0x1]
    %v5574 = vlaneseq
    %v5575 = vshrl.u32 %v5574, 7
    %v5576 = vsub.s32 0, %v5575
    %v5577 = vrot.slane %v5572, %v5576
    %v5627 = vunpack.c.l.b16 %v5524
    %v5628 = vunpack.c.l.b16 %v5525
    %v5629 = vunpack.c.l.b16 %v5526
    %v5630 = vunpack.c.l.b16 %v5527
    %v5631 = vunpack.c.l.b16 %v5528
    %v5632 = vunpack.c.l.b16 %v5529
    %v5633 = vunpack.c.l.b16 %v5530
    %v5634 = vunpack.c.l.b16 %v5531
    %v5635 = vunpack.c.l.b16 %v5532
    %v5636 = vunpack.c.l.b16 %v5533
    %v5637 = vunpack.c.l.b16 %v5534
    %v5638 = vunpack.c.l.b16 %v5535
    %v5639 = vunpack.c.l.b16 %v5536
    %v5640 = vunpack.c.l.b16 %v5537
    %v5641 = vunpack.c.l.b16 %v5538
    %v5642 = vunpack.c.l.b16 %v5539
    %v5643 = vunpack.c.l.b16 %v5540
    %v5644 = vunpack.c.l.b16 %v5541
    %v5645 = vunpack.c.l.b16 %v5542
    %v5646 = vunpack.c.l.b16 %v5543
    %v5647 = vunpack.c.l.b16 %v5544
    %v5648 = vunpack.c.l.b16 %v5545
    %v5649 = vunpack.c.l.b16 %v5546
    %v5650 = vunpack.c.l.b16 %v5547
    %v5651 = vunpack.c.l.b16 %v5548
    %v5652 = vunpack.c.l.b16 %v5549
    %v5653 = vunpack.c.l.b16 %v5550
    %v5654 = vunpack.c.l.b16 %v5551
    %v5655 = vunpack.c.l.b16 %v5552
    %v5656 = vunpack.c.l.b16 %v5553
    %v5657 = vunpack.c.l.b16 %v5554
    %v5658 = vunpack.c.l.b16 %v5555
    %v5659 = vunpack.c.l.b16 %v5556
    %v5660 = vunpack.c.l.b16 %v5557
    %v5661 = vunpack.c.l.b16 %v5558
    %v5662 = vunpack.c.l.b16 %v5559
    %v5663 = vunpack.c.l.b16 %v5560
    %v5664 = vunpack.c.l.b16 %v5561
    %v5665 = vunpack.c.l.b16 %v5562
    %v5666 = vunpack.c.l.b16 %v5563
    %v5667 = vunpack.c.l.b16 %v5564
    %v5668 = vunpack.c.l.b16 %v5565
    %v5669 = vunpack.c.l.b16 %v5566
    %v5670 = vunpack.c.l.b16 %v5567
    %v5671 = vunpack.c.l.b16 %v5568
    %v5672 = vunpack.c.l.b16 %v5569
    %v5673 = vunpack.c.l.b16 %v5570
    %v5674 = vunpack.c.l.b16 %v5571
    %v5675 = vpack.c.b16 %v5628, %v5627
    %v5676 = vpack.c.b16 %v5630, %v5629
    %v5677 = vpack.c.b16 %v5632, %v5631
    %v5678 = vpack.c.b16 %v5634, %v5633
    %v5679 = vpack.c.b16 %v5636, %v5635
    %v5680 = vpack.c.b16 %v5638, %v5637
    %v5681 = vpack.c.b16 %v5640, %v5639
    %v5682 = vpack.c.b16 %v5642, %v5641
    %v5683 = vpack.c.b16 %v5644, %v5643
    %v5684 = vpack.c.b16 %v5646, %v5645
    %v5685 = vpack.c.b16 %v5648, %v5647
    %v5686 = vpack.c.b16 %v5650, %v5649
    %v5687 = vpack.c.b16 %v5652, %v5651
    %v5688 = vpack.c.b16 %v5654, %v5653
    %v5689 = vpack.c.b16 %v5656, %v5655
    %v5690 = vpack.c.b16 %v5658, %v5657
    %v5691 = vpack.c.b16 %v5660, %v5659
    %v5692 = vpack.c.b16 %v5662, %v5661
    %v5693 = vpack.c.b16 %v5664, %v5663
    %v5694 = vpack.c.b16 %v5666, %v5665
    %v5695 = vpack.c.b16 %v5668, %v5667
    %v5696 = vpack.c.b16 %v5670, %v5669
    %v5697 = vpack.c.b16 %v5672, %v5671
    %v5698 = vpack.c.b16 %v5674, %v5673
    %5723 = vmatprep.subr.bf16.mxu0 0
    %5724 = vmatpush1.bf16.msra.mxu0 %v5682
    %5725 = vmatprep.subr.bf16.mxu0 0
    %5726 = vmatpush1.bf16.msra.mxu0 %v5681
    %5727 = vmatprep.subr.bf16.mxu0 0
    %5728 = vmatpush1.bf16.msra.mxu0 %v5680
    %5729 = vmatprep.subr.bf16.mxu0 0
    %5730 = vmatpush1.bf16.msra.mxu0 %v5679
    %5731 = vmatprep.subr.bf16.mxu0 0
    %5732 = vmatpush1.bf16.msra.mxu0 %v5678
    %5733 = vmatprep.subr.bf16.mxu0 0
    %5734 = vmatpush1.bf16.msra.mxu0 %v5677
    %5735 = vmatprep.subr.bf16.mxu0 0
    %5736 = vmatpush1.bf16.msra.mxu0 %v5676
    %5737 = vmatprep.subr.bf16.mxu0 0
    %5738 = vmatpush1.bf16.msra.mxu0 %v5675
    %5739 = vmatprep.subr.bf16.mxu0 0
    %5740 = vmatpush2.bf16.msra.mxu0 %v5690
    %5741 = vmatprep.subr.bf16.mxu0 0
    %5742 = vmatpush2.bf16.msra.mxu0 %v5689
    %5743 = vmatprep.subr.bf16.mxu0 0
    %5744 = vmatpush2.bf16.msra.mxu0 %v5688
    %5745 = vmatprep.subr.bf16.mxu0 0
    %5746 = vmatpush2.bf16.msra.mxu0 %v5687
    %5747 = vmatprep.subr.bf16.mxu0 0
    %5748 = vmatpush2.bf16.msra.mxu0 %v5686
    %5749 = vmatprep.subr.bf16.mxu0 0
    %5750 = vmatpush2.bf16.msra.mxu0 %v5685
    %5751 = vmatprep.subr.bf16.mxu0 0
    %5752 = vmatpush2.bf16.msra.mxu0 %v5684
    %5753 = vmatprep.subr.bf16.mxu0 0
    %5754 = vmatpush2.bf16.msra.mxu0 %v5683
    %5755 = vmatprep.mubr.bf16.mxu0 %v5522
    %5756 = vmatmul.mubr.bf16.gmra.mxu0 %v5521
    %v5757 = vpop.f32.mrf.mxu0
    %v5758 = vadd.f32 %v5577, %v5757
    %v5759 = vpop.f32.mrf.mxu0
    %v5760 = vpop.f32.mrf.mxu0
    %v5761 = vpop.f32.mrf.mxu0
    %5762 = vdwg.mxu0
    %5763 = vmatprep.subr.bf16.mxu0 0
    %5764 = vmatpush1.bf16.msra.mxu0 %v5698
    %5765 = vmatprep.subr.bf16.mxu0 0
    %5766 = vmatpush1.bf16.msra.mxu0 %v5697
    %5767 = vmatprep.subr.bf16.mxu0 0
    %5768 = vmatpush1.bf16.msra.mxu0 %v5696
    %5769 = vmatprep.subr.bf16.mxu0 0
    %5770 = vmatpush1.bf16.msra.mxu0 %v5695
    %5771 = vmatprep.subr.bf16.mxu0 0
    %5772 = vmatpush1.bf16.msra.mxu0 %v5694
    %5773 = vmatprep.subr.bf16.mxu0 0
    %5774 = vmatpush1.bf16.msra.mxu0 %v5693
    %5775 = vmatprep.subr.bf16.mxu0 0
    %5776 = vmatpush1.bf16.msra.mxu0 %v5692
    %5777 = vmatprep.subr.bf16.mxu0 0
    %5778 = vmatpush1.bf16.msra.mxu0 %v5691
    %5779 = vmatprep.subr.bf16.mxu0 0
    %5780 = vmatpush2.bf16.msra.mxu0 0
    %5781 = vmatprep.subr.bf16.mxu0 0
    %5782 = vmatpush2.bf16.msra.mxu0 0
    %5783 = vmatprep.subr.bf16.mxu0 0
    %5784 = vmatpush2.bf16.msra.mxu0 0
    %5785 = vmatprep.subr.bf16.mxu0 0
    %5786 = vmatpush2.bf16.msra.mxu0 0
    %5787 = vmatprep.subr.bf16.mxu0 0
    %5788 = vmatpush2.bf16.msra.mxu0 0
    %5789 = vmatprep.subr.bf16.mxu0 0
    %5790 = vmatpush2.bf16.msra.mxu0 0
    %5791 = vmatprep.subr.bf16.mxu0 0
    %5792 = vmatpush2.bf16.msra.mxu0 0
    %5793 = vmatprep.subr.bf16.mxu0 0
    %5794 = vmatpush2.bf16.msra.mxu0 0
    %5795 = vmatprep.mubr.bf16.mxu0 0
    %5796 = vmatmul.mubr.bf16.gmra.mxu0 %v5523
    %v5797 = vpop.f32.mrf.mxu0
    %v5798 = vadd.f32 %v5758, %v5797
    %v5799 = vpop.f32.mrf.mxu0
    %v5800 = vpop.f32.mrf.mxu0
    %v5801 = vpop.f32.mrf.mxu0
    %5802 = vdwg.mxu0
    %v5803 = vtanh.pop %v5798
    %v5804 = vmul.f32 %v5803, 0.05
    %v5805 = vadd.f32 %v5804, %v4440
    %v5806 = vmax.f32 %v5805, -1.0
    %v5807 = vmin.f32 %v5806, 1.0
    %5808 = vst.msk [vmem:[%s13] sm:$0xff] %vm209, %v1408
    %5810 = vrot.lane.b32.xlu0 %v4440, 16
    %v5811 = vpop.permute.xlu0 %5810
    %vm5813 = vcmask 261248
    %5814 = vst.msk [vmem:[%s13] sm:$0xff] %vm5813, %v5811
    %5816 = vrot.lane.b32.xlu0 %v5807, 32
    %v5817 = vpop.permute.xlu0 %5816
    %vm5819 = vcmask 392448
    %5820 = vst.msk [vmem:[%s13] sm:$0xff] %vm5819, %v5817
    // Predicated region
    $region94: #{_lambda_.1} parent=1 // pred_check
      _
    $region95: #{_lambda_.1} parent=1 // pred_check_branch
      %5822 = sbr.rel (0) target = $region97
    $region96: #{_lambda_.1} parent=1 // pred_region
      _
    $region97: #{_lambda_.1} parent=1 // pred_fallthru
      _
    // Predicated region
    $region98: #{_lambda_.1} parent=1 // pred_check
      _
    $region99: #{_lambda_.1} parent=1 // pred_check_branch
      %5824 = sbr.rel (0) target = $region101
    $region100: #{_lambda_.1} parent=1 // pred_region
      _
    $region101: #{_lambda_.1} parent=1 // pred_fallthru
      _
    %5825 = vsyncpa [#allocation6], 1
    %5826 = vsyncpa [#allocation8], 1
    %5827 = vsyncpa [#allocation11], 1
    %5828 = vsyncpa [#allocation14], 1
  %5829 = vsyncmov [#allocation4]
  %s5830 = vpop.sfrf %5829
  %p5831 = scmp.eq.s32.totalorder %s5830, 0
  %p5832 = pneg %p5831
  %5834 = shalt.err (%p5832)
  %s5835 = scalar_lea.sflag [#allocation4], 1
  %5836 = vsyncmov %s5835
  %s5837 = vpop.sfrf %5836
  %p5838 = scmp.eq.s32.totalorder %s5837, 0
  %p5839 = pneg %p5838
  %5841 = shalt.err (%p5839)

</llo_original>
